<compile_context>
chip_gen: v7x
topology: tpu7x:2x2x1
jax: 0.10.0
libtpu: 0.0.40
codegen_flags: <defaults>
</compile_context>

<pallas_src>
import functools

import jax
import jax.numpy as jnp
from jax import lax
from jax.experimental import pallas as pl
from jax.experimental.pallas import tpu as pltpu


# ----------------------------------------------------------------------------
# Pallas kernel (batch-major blocks: (Bb, S, ...); time unrolled inside)
# ----------------------------------------------------------------------------
def _df_backbone_kernel(
    # data
    p_ref,     # (Bb, S, H)  hoisted layer-0 input projection (z/x/kn + both biases)
    xs_ref,    # (Bb, S, H)  xt_noisy * rsqrt(clamp(alpha_bar[k], 1e-8))
    c_ref,     # (Bb, S, 1)  sqrt(clamp(1-alpha_bar,1e-8)) * rsqrt(clamp(alpha_bar,1e-8))
    # recurrent weights (already cast to the MXU dtype where applicable)
    wh0_ref,   # (H, H)    RNN layer-0 hidden->hidden
    wl1_ref,   # (2H, H)   RNN layer-1 fused [wi1; wh1]
    b1_ref,    # (1, H)    layer-1 bias (b_ih + b_hh), f32
    wg_ref,    # (2H, 4H)  GRU fused [[Wir Wiz Win 0], [Whr Whz 0 Whn]]
    bg_ref,    # (1, 4H)   GRU fused bias [b_ir+b_hr | b_iz+b_hz | b_in | b_hn], f32
    # outputs
    xt_ref,    # (Bb, S, H)
    eps_ref,   # (Bb, S, H)
    zt_ref,    # (Bb, S, H)
    # scratch
    cat_ref,   # (Bb, 2H) f32 — concatenated LHS staging buffer (avoids lane concat)
):
    Bb, S, H = p_ref.shape
    f32 = jnp.float32
    dt = wh0_ref.dtype            # MXU operand dtype (bf16 fast path, or f32)

    # Hoist weight loads and bias broadcasts out of the unrolled loop
    # (JAX does not CSE broadcast_in_dim across iterations).
    wh0 = wh0_ref[...]
    wl1 = wl1_ref[...]
    wg = wg_ref[...]
    b1 = jnp.broadcast_to(b1_ref[...], (Bb, H))
    bg = jnp.broadcast_to(bg_ref[...], (Bb, 4 * H))

    h1 = jnp.zeros((Bb, H), f32)
    h2 = jnp.zeros((Bb, H), f32)
    hg = jnp.zeros((Bb, H), f32)

    # S is small & static -> plain Python unroll keeps every slice index static
    # and lets per-step stores overlap the next step's MXU pushes.
    # TODO(synk): for large S move time onto an "arbitrary" grid axis with the
    #             hidden state carried in VMEM scratch instead of full unroll.
    for t in range(S):
        # ---- RNN layer 0: only the recurrent matmul sits on the serial path ----
        h1 = jnp.tanh(p_ref[:, t, :]
                      + jnp.dot(h1.astype(dt), wh0, preferred_element_type=f32))

        # ---- RNN layer 1: one fused matmul on [h1_new | h2_prev] ----
        cat_ref[:, :H] = h1
        cat_ref[:, H:] = h2
        h2 = jnp.tanh(jnp.dot(cat_ref[...].astype(dt), wl1,
                              preferred_element_type=f32) + b1)
        eps_ref[:, t, :] = h2                      # epsilon_pred at step t

        # ---- GRU: one fused matmul on [h2_new | hg_prev], 4H = 128 lanes ----
        cat_ref[:, :H] = h2
        cat_ref[:, H:] = hg
        g = jnp.dot(cat_ref[...].astype(dt), wg,
                    preferred_element_type=f32) + bg          # (Bb, 4H)
        r = jax.nn.sigmoid(g[:, :H])
        zg = jax.nn.sigmoid(g[:, H:2 * H])
        n = jnp.tanh(g[:, 2 * H:3 * H] + r * g[:, 3 * H:])
        hg = (1.0 - zg) * n + zg * hg
        zt_ref[:, t, :] = hg

        # ---- fused predict_start_from_noise + clamp epilogue ----
        xt_ref[:, t, :] = jnp.clip(xs_ref[:, t, :] - c_ref[:, t, :] * h2, 0.0, 1.0)


# ----------------------------------------------------------------------------
# Wrapper (glue: weight fusion, hoisted projection, alpha_bar gather, blocking)
# ----------------------------------------------------------------------------
def df_backbone_forward(params, z_t_prev, xt_noisy, k, alpha_bar, *,
                        batch_block=128, mxu_dtype=jnp.bfloat16):
    B, S, H = xt_noisy.shape
    f32 = jnp.float32
    p = params

    # ---- one-time parameter fusion (tiny, outside the recurrence) ----
    # kn feature is a per-(t,b) scalar broadcast over H input columns:
    #   kn_vec @ W_k == kn_scalar * colsum(W_k)  -> folded as one extra input row.
    wzxk = jnp.concatenate(
        [p["wz0"], p["wx0"], jnp.sum(p["wk0"], axis=0, keepdims=True)], axis=0)   # (2H+1, H)
    b0 = p["b_ih0"] + p["b_hh0"]                                                  # (1, H)
    # RNN layer 1: single matmul on cat([h1_new, h2_prev]).
    wl1 = jnp.concatenate([p["wi1"], p["wh1"]], axis=0)                           # (2H, H)
    b1 = p["b_ih1"] + p["b_hh1"]                                                  # (1, H)
    # GRU: single matmul on cat([h2_new, hg_prev]) -> [r | z | n_in | n_hid].
    zhh = jnp.zeros((H, H), f32)
    wg = jnp.concatenate([
        jnp.concatenate([p["wir"], p["wiz"], p["win"], zhh], axis=1),
        jnp.concatenate([p["whr"], p["whz"], zhh, p["whn"]], axis=1),
    ], axis=0)                                                                     # (2H, 4H)
    bg = jnp.concatenate(
        [p["b_ir"] + p["b_hr"], p["b_iz"] + p["b_hz"], p["b_in"], p["b_hn"]],
        axis=1)                                                                    # (1, 4H)

    # ---- hoisted, non-recurrent layer-0 input projection: one matmul, M=B*S ----
    kt = k.astype(f32)[..., None] / 1000.0                                         # (B, S, 1)
    zxk = jnp.concatenate([z_t_prev.astype(f32), xt_noisy.astype(f32), kt], -1)    # (B, S, 2H+1)
    p_in = jnp.einsum("bsc,ch->bsh", zxk, wzxk) + b0                               # (B, S, H)

    # ---- predict_start_from_noise scalars, pre-combined for the in-step epilogue ----
    a = alpha_bar[k].astype(f32)[..., None]                                        # (B, S, 1)
    isa = lax.rsqrt(jnp.maximum(a, 1e-8))
    c = jnp.sqrt(jnp.maximum(1.0 - a, 1e-8)) * isa                                 # (B, S, 1)
    x_scaled = xt_noisy.astype(f32) * isa                                          # (B, S, H)

    # ---- batch blocking (batch-major blocks: no wrapper transposes) ----
    # Per-block VMEM: double-buffered (Bb,S,H) f32 streams (p_in, x_scaled, 3 outs)
    # + (Bb,S,1) + weights.  Cap Bb so a block fits v7x's 64 MiB VMEM with headroom.
    # NOTE: batch_block also controls grid length; on v7x choose it so the grid
    # has >= 2 iterations (megacore), on v5e/v6e maximize it instead.
    bytes_per_row = (5 * H + 1) * S * 4 * 2          # x2 for double buffering
    vmem_budget = 48 << 20
    max_bb = max(8, vmem_budget // bytes_per_row)
    Bb = int(min(batch_block, B, max_bb))
    if Bb < B:
        Bb = max(8, (Bb // 8) * 8)                   # full sublanes when blocking
    grid = (pl.cdiv(B, Bb),)

    data = [p_in, x_scaled, c]
    weights = [p["wh0"].astype(mxu_dtype), wl1.astype(mxu_dtype), b1,
               wg.astype(mxu_dtype), bg]

    blk = lambda d: pl.BlockSpec((Bb, S, d), lambda b: (b, 0, 0))
    in_specs = [blk(H), blk(H), blk(1)] + [
        pl.BlockSpec(w.shape, lambda b: (0, 0)) for w in weights]
    out_specs = [blk(H), blk(H), blk(H)]
    out_shape = [jax.ShapeDtypeStruct((B, S, H), f32)] * 3

    weight_bytes = sum(int(w.size) * w.dtype.itemsize for w in weights)
    vmem_needed = bytes_per_row * Bb + weight_bytes + (2 << 20)
    vmem_limit = int(min(64 << 20, max(32 << 20, vmem_needed)))   # <= v7x physical

    xt_pred, eps_pred, zt_updated = pl.pallas_call(
        _df_backbone_kernel,
        grid=grid,
        in_specs=in_specs,
        out_specs=out_specs,
        out_shape=out_shape,
        scratch_shapes=[pltpu.VMEM((Bb, 2 * H), f32)],
        compiler_params=pltpu.CompilerParams(
            dimension_semantics=("parallel",),       # batch blocks are independent
            vmem_limit_bytes=vmem_limit),
    )(*data, *weights)
    return xt_pred, eps_pred, zt_updated


# ----------------------------------------------------------------------------
# Deterministic parameter init (PyTorch-style U(-1/sqrt(H), 1/sqrt(H));
# full nn.RNN / nn.GRU parameterization incl. bias_ih and bias_hh per gate)
# ----------------------------------------------------------------------------
def init_params(key, hidden_dim):
    H = hidden_dim
    std = 1.0 / jnp.sqrt(jnp.float32(H))
    names_shapes = [
        # RNN layer 0 (input = [z | x | k_feat] -> 3H wide)
        ("wz0", (H, H)), ("wx0", (H, H)), ("wk0", (H, H)), ("wh0", (H, H)),
        ("b_ih0", (1, H)), ("b_hh0", (1, H)),
        # RNN layer 1
        ("wi1", (H, H)), ("wh1", (H, H)), ("b_ih1", (1, H)), ("b_hh1", (1, H)),
        # GRU (r, z, n)
        ("wir", (H, H)), ("wiz", (H, H)), ("win", (H, H)),
        ("whr", (H, H)), ("whz", (H, H)), ("whn", (H, H)),
        ("b_ir", (1, H)), ("b_iz", (1, H)), ("b_in", (1, H)),
        ("b_hr", (1, H)), ("b_hz", (1, H)), ("b_hn", (1, H)),
    ]
    keys = jax.random.split(key, len(names_shapes))
    return {
        name: jax.random.uniform(kk, shape, jnp.float32, -std, std)
        for (name, shape), kk in zip(names_shapes, keys)
    }


# ----------------------------------------------------------------------------
# Pure-JAX reference (original per-gate formulation, lax.scan) for correctness
# ----------------------------------------------------------------------------
def reference_forward(params, z_t_prev, xt_noisy, k, alpha_bar):
    B, S, H = xt_noisy.shape
    p = params
    z_tm = jnp.transpose(z_t_prev, (1, 0, 2))
    x_tm = jnp.transpose(xt_noisy, (1, 0, 2))
    kn_tm = (k.astype(jnp.float32) / 1000.0).T[..., None]

    def step(carry, ins):
        h1, h2, hg = carry
        z_t, x_t, kn_t = ins
        kn_b = jnp.broadcast_to(kn_t, (B, H))
        h1n = jnp.tanh(z_t @ p["wz0"] + x_t @ p["wx0"] + kn_b @ p["wk0"]
                       + h1 @ p["wh0"] + p["b_ih0"] + p["b_hh0"])
        h2n = jnp.tanh(h1n @ p["wi1"] + h2 @ p["wh1"] + p["b_ih1"] + p["b_hh1"])
        r = jax.nn.sigmoid(h2n @ p["wir"] + p["b_ir"] + hg @ p["whr"] + p["b_hr"])
        zg = jax.nn.sigmoid(h2n @ p["wiz"] + p["b_iz"] + hg @ p["whz"] + p["b_hz"])
        n = jnp.tanh(h2n @ p["win"] + p["b_in"] + r * (hg @ p["whn"] + p["b_hn"]))
        hgn = (1.0 - zg) * n + zg * hg
        return (h1n, h2n, hgn), (h2n, hgn)

    zeros = jnp.zeros((B, H), jnp.float32)
    _, (eps_tm, zt_tm) = lax.scan(step, (zeros, zeros, zeros), (z_tm, x_tm, kn_tm))
    eps = jnp.transpose(eps_tm, (1, 0, 2))
    zt = jnp.transpose(zt_tm, (1, 0, 2))

    a = alpha_bar[k][..., None]                        # (B, S, 1)
    sa = jnp.sqrt(jnp.maximum(a, 1e-8))
    s1a = jnp.sqrt(jnp.maximum(1.0 - a, 1e-8))
    x0 = (xt_noisy - s1a * eps) / sa
    return jnp.clip(x0, 0.0, 1.0), eps, zt


# ----------------------------------------------------------------------------
if __name__ == "__main__":
    B, S, H, T = 2, 8, 32, 100   # batch, seq, hidden_dim (= feature dim of xt/z), diffusion steps

    key = jax.random.PRNGKey(0)
    kp, kz, kx, kk = jax.random.split(key, 4)

    params = init_params(kp, H)
    z_t_prev = jax.random.normal(kz, (B, S, H), jnp.float32)
    xt_noisy = jax.random.uniform(kx, (B, S, H), jnp.float32)
    k = jax.random.randint(kk, (B, S), 0, T)
    betas = jnp.linspace(1e-4, 0.02, T, dtype=jnp.float32)
    alpha_bar = jnp.cumprod(1.0 - betas)

    xt_ref, eps_ref, zt_ref = reference_forward(params, z_t_prev, xt_noisy, k, alpha_bar)

    # f32 MXU path: tight tolerance.  bf16 MXU path (perf default, single-pass
    # MXU): looser tolerance — bf16 operand rounding through the 8-step
    # recurrence is ~1e-2 scale on outputs in [-1, 1] / [0, 1].
    for dt, tol in ((jnp.float32, 2e-4), (jnp.bfloat16, 1e-1)):
        fwd = jax.jit(functools.partial(df_backbone_forward, params, mxu_dtype=dt))
        outs = fwd(z_t_prev, xt_noisy, k, alpha_bar)
        jax.block_until_ready(outs)
        for got, ref in zip(outs, (xt_ref, eps_ref, zt_ref)):
            err = float(jnp.max(jnp.abs(got - ref)))
            assert err < tol, f"{dt.__name__}: max abs err {err} >= {tol}"

    print("KERNEL_OK")
</pallas_src>

<mosaic_0001>
module attributes {stable_mosaic.version = 11 : i64} {
  func.func @_df_backbone_kernel(%arg0: i32, %arg1: memref<2x8x32xf32, #tpu.memory_space<vmem>>, %arg2: memref<2x8x32xf32, #tpu.memory_space<vmem>>, %arg3: memref<2x8x1xf32, #tpu.memory_space<vmem>>, %arg4: memref<32x32xf32, #tpu.memory_space<vmem>>, %arg5: memref<64x32xf32, #tpu.memory_space<vmem>>, %arg6: memref<1x32xf32, #tpu.memory_space<vmem>>, %arg7: memref<64x128xf32, #tpu.memory_space<vmem>>, %arg8: memref<1x128xf32, #tpu.memory_space<vmem>>, %arg9: memref<2x8x32xf32, #tpu.memory_space<vmem>>, %arg10: memref<2x8x32xf32, #tpu.memory_space<vmem>>, %arg11: memref<2x8x32xf32, #tpu.memory_space<vmem>>, %arg12: memref<2x64xf32, #tpu.memory_space<vmem>>) attributes {dimension_semantics = [#tpu.dimension_semantics<parallel>], iteration_bounds = array<i64: 1>, scalar_prefetch = 0 : i64, scratch_operands = 1 : i64, tpu.core_type = #tpu.core_type<tc>, window_params = [{transform_indices = @transform_0, window_bounds = array<i64: 2, 8, 32>}, {transform_indices = @transform_1, window_bounds = array<i64: 2, 8, 32>}, {transform_indices = @transform_2, window_bounds = array<i64: 2, 8, 1>}, {pipeline_mode = #tpu.pipeline_mode<synchronous>, transform_indices = @transform_3, window_bounds = array<i64: 32, 32>}, {pipeline_mode = #tpu.pipeline_mode<synchronous>, transform_indices = @transform_4, window_bounds = array<i64: 64, 32>}, {pipeline_mode = #tpu.pipeline_mode<synchronous>, transform_indices = @transform_5, window_bounds = array<i64: 1, 32>}, {pipeline_mode = #tpu.pipeline_mode<synchronous>, transform_indices = @transform_6, window_bounds = array<i64: 64, 128>}, {pipeline_mode = #tpu.pipeline_mode<synchronous>, transform_indices = @transform_7, window_bounds = array<i64: 1, 128>}, {transform_indices = @transform_8, window_bounds = array<i64: 2, 8, 32>}, {transform_indices = @transform_9, window_bounds = array<i64: 2, 8, 32>}, {transform_indices = @transform_10, window_bounds = array<i64: 2, 8, 32>}]} {
    %c0 = arith.constant 0 : index
    %c0_0 = arith.constant 0 : index
    %0 = vector.load %arg4[%c0, %c0_0] : memref<32x32xf32, #tpu.memory_space<vmem>>, vector<32x32xf32>
    %c0_1 = arith.constant 0 : index
    %c0_2 = arith.constant 0 : index
    %1 = vector.load %arg5[%c0_1, %c0_2] : memref<64x32xf32, #tpu.memory_space<vmem>>, vector<64x32xf32>
    %c0_3 = arith.constant 0 : index
    %c0_4 = arith.constant 0 : index
    %2 = vector.load %arg7[%c0_3, %c0_4] : memref<64x128xf32, #tpu.memory_space<vmem>>, vector<64x128xf32>
    %c0_5 = arith.constant 0 : index
    %c0_6 = arith.constant 0 : index
    %3 = vector.load %arg6[%c0_5, %c0_6] : memref<1x32xf32, #tpu.memory_space<vmem>>, vector<1x32xf32>
    %4 = vector.shape_cast %3 : vector<1x32xf32> to vector<1x32xf32>
    %5 = vector.broadcast %4 : vector<1x32xf32> to vector<2x32xf32>
    %c0_7 = arith.constant 0 : index
    %c0_8 = arith.constant 0 : index
    %6 = vector.load %arg8[%c0_7, %c0_8] : memref<1x128xf32, #tpu.memory_space<vmem>>, vector<1x128xf32>
    %7 = vector.shape_cast %6 : vector<1x128xf32> to vector<1x128xf32>
    %8 = vector.broadcast %7 : vector<1x128xf32> to vector<2x128xf32>
    %cst = arith.constant 0.000000e+00 : f32
    %9 = vector.broadcast %cst : f32 to vector<2x32xf32>
    %cst_9 = arith.constant 0.000000e+00 : f32
    %10 = vector.broadcast %cst_9 : f32 to vector<2x32xf32>
    %cst_10 = arith.constant 0.000000e+00 : f32
    %11 = vector.broadcast %cst_10 : f32 to vector<2x32xf32>
    %c0_11 = arith.constant 0 : index
    %c0_12 = arith.constant 0 : index
    %c0_13 = arith.constant 0 : index
    %12 = vector.load %arg1[%c0_11, %c0_12, %c0_13] : memref<2x8x32xf32, #tpu.memory_space<vmem>>, vector<2x1x32xf32>
    %13 = vector.shape_cast %12 : vector<2x1x32xf32> to vector<2x32xf32>
    %cst_14 = arith.constant dense<0.000000e+00> : vector<2x32xf32>
    %14 = tpu.matmul %9, %0, %cst_14 {dimension_numbers = #tpu.dot_dimension_numbers<[1], [0], [0], [1], [0, 0, 1, 1], [], []>} : vector<2x32xf32>, vector<32x32xf32>, vector<2x32xf32> -> vector<2x32xf32>
    %15 = arith.addf %13, %14 : vector<2x32xf32>
    %16 = math.tanh %15 : vector<2x32xf32>
    %c0_15 = arith.constant 0 : index
    %c0_16 = arith.constant 0 : index
    %17 = vector.load %arg12[%c0_15, %c0_16] : memref<2x64xf32, #tpu.memory_space<vmem>>, vector<2x32xf32>
    tpu.vector_store %arg12[%c0_15, %c0_16], %16 {strides = array<i32>} : memref<2x64xf32, #tpu.memory_space<vmem>>, vector<2x32xf32>,
    %c0_17 = arith.constant 0 : index
    %c32 = arith.constant 32 : index
    %18 = vector.load %arg12[%c0_17, %c32] : memref<2x64xf32, #tpu.memory_space<vmem>>, vector<2x32xf32>
    tpu.vector_store %arg12[%c0_17, %c32], %10 {strides = array<i32>} : memref<2x64xf32, #tpu.memory_space<vmem>>, vector<2x32xf32>,
    %c0_18 = arith.constant 0 : index
    %c0_19 = arith.constant 0 : index
    %19 = vector.load %arg12[%c0_18, %c0_19] : memref<2x64xf32, #tpu.memory_space<vmem>>, vector<2x64xf32>
    %cst_20 = arith.constant dense<0.000000e+00> : vector<2x32xf32>
    %20 = tpu.matmul %19, %1, %cst_20 {dimension_numbers = #tpu.dot_dimension_numbers<[1], [0], [0], [1], [0, 0, 1, 1], [], []>} : vector<2x64xf32>, vector<64x32xf32>, vector<2x32xf32> -> vector<2x32xf32>
    %21 = arith.addf %20, %5 : vector<2x32xf32>
    %22 = math.tanh %21 : vector<2x32xf32>
    %c0_21 = arith.constant 0 : index
    %c0_22 = arith.constant 0 : index
    %c0_23 = arith.constant 0 : index
    %23 = vector.load %arg10[%c0_21, %c0_22, %c0_23] : memref<2x8x32xf32, #tpu.memory_space<vmem>>, vector<2x1x32xf32>
    %24 = vector.shape_cast %23 : vector<2x1x32xf32> to vector<2x32xf32>
    %25 = vector.shape_cast %22 : vector<2x32xf32> to vector<2x1x32xf32>
    tpu.vector_store %arg10[%c0_21, %c0_22, %c0_23], %25 {strides = array<i32>} : memref<2x8x32xf32, #tpu.memory_space<vmem>>, vector<2x1x32xf32>,
    %c0_24 = arith.constant 0 : index
    %c0_25 = arith.constant 0 : index
    %26 = vector.load %arg12[%c0_24, %c0_25] : memref<2x64xf32, #tpu.memory_space<vmem>>, vector<2x32xf32>
    tpu.vector_store %arg12[%c0_24, %c0_25], %22 {strides = array<i32>} : memref<2x64xf32, #tpu.memory_space<vmem>>, vector<2x32xf32>,
    %c0_26 = arith.constant 0 : index
    %c32_27 = arith.constant 32 : index
    %27 = vector.load %arg12[%c0_26, %c32_27] : memref<2x64xf32, #tpu.memory_space<vmem>>, vector<2x32xf32>
    tpu.vector_store %arg12[%c0_26, %c32_27], %11 {strides = array<i32>} : memref<2x64xf32, #tpu.memory_space<vmem>>, vector<2x32xf32>,
    %c0_28 = arith.constant 0 : index
    %c0_29 = arith.constant 0 : index
    %28 = vector.load %arg12[%c0_28, %c0_29] : memref<2x64xf32, #tpu.memory_space<vmem>>, vector<2x64xf32>
    %cst_30 = arith.constant dense<0.000000e+00> : vector<2x128xf32>
    %29 = tpu.matmul %28, %2, %cst_30 {dimension_numbers = #tpu.dot_dimension_numbers<[1], [0], [0], [1], [0, 0, 1, 1], [], []>} : vector<2x64xf32>, vector<64x128xf32>, vector<2x128xf32> -> vector<2x128xf32>
    %30 = arith.addf %29, %8 : vector<2x128xf32>
    %31 = vector.extract_strided_slice %30 {offsets = [0, 0], sizes = [2, 32], strides = [1, 1]} : vector<2x128xf32> to vector<2x32xf32>
    %32 = arith.negf %31 : vector<2x32xf32>
    %33 = math.exp %32 : vector<2x32xf32>
    %cst_31 = arith.constant 1.000000e+00 : f32
    %34 = vector.broadcast %cst_31 : f32 to vector<2x32xf32>
    %35 = arith.addf %34, %33 : vector<2x32xf32>
    %36 = arith.divf %34, %35 : vector<2x32xf32>
    %37 = vector.extract_strided_slice %30 {offsets = [0, 32], sizes = [2, 32], strides = [1, 1]} : vector<2x128xf32> to vector<2x32xf32>
    %38 = arith.negf %37 : vector<2x32xf32>
    %39 = math.exp %38 : vector<2x32xf32>
    %cst_32 = arith.constant 1.000000e+00 : f32
    %40 = vector.broadcast %cst_32 : f32 to vector<2x32xf32>
    %41 = arith.addf %40, %39 : vector<2x32xf32>
    %42 = arith.divf %40, %41 : vector<2x32xf32>
    %43 = vector.extract_strided_slice %30 {offsets = [0, 64], sizes = [2, 32], strides = [1, 1]} : vector<2x128xf32> to vector<2x32xf32>
    %44 = vector.extract_strided_slice %30 {offsets = [0, 96], sizes = [2, 32], strides = [1, 1]} : vector<2x128xf32> to vector<2x32xf32>
    %45 = arith.mulf %36, %44 : vector<2x32xf32>
    %46 = arith.addf %43, %45 : vector<2x32xf32>
    %47 = math.tanh %46 : vector<2x32xf32>
    %cst_33 = arith.constant 1.000000e+00 : f32
    %48 = vector.broadcast %cst_33 : f32 to vector<2x32xf32>
    %49 = arith.subf %48, %42 : vector<2x32xf32>
    %50 = arith.mulf %49, %47 : vector<2x32xf32>
    %51 = arith.mulf %42, %11 : vector<2x32xf32>
    %52 = arith.addf %50, %51 : vector<2x32xf32>
    %c0_34 = arith.constant 0 : index
    %c0_35 = arith.constant 0 : index
    %c0_36 = arith.constant 0 : index
    %53 = vector.load %arg11[%c0_34, %c0_35, %c0_36] : memref<2x8x32xf32, #tpu.memory_space<vmem>>, vector<2x1x32xf32>
    %54 = vector.shape_cast %53 : vector<2x1x32xf32> to vector<2x32xf32>
    %55 = vector.shape_cast %52 : vector<2x32xf32> to vector<2x1x32xf32>
    tpu.vector_store %arg11[%c0_34, %c0_35, %c0_36], %55 {strides = array<i32>} : memref<2x8x32xf32, #tpu.memory_space<vmem>>, vector<2x1x32xf32>,
    %c0_37 = arith.constant 0 : index
    %c0_38 = arith.constant 0 : index
    %c0_39 = arith.constant 0 : index
    %56 = vector.load %arg2[%c0_37, %c0_38, %c0_39] : memref<2x8x32xf32, #tpu.memory_space<vmem>>, vector<2x1x32xf32>
    %57 = vector.shape_cast %56 : vector<2x1x32xf32> to vector<2x32xf32>
    %c0_40 = arith.constant 0 : index
    %c0_41 = arith.constant 0 : index
    %c0_42 = arith.constant 0 : index
    %58 = vector.load %arg3[%c0_40, %c0_41, %c0_42] : memref<2x8x1xf32, #tpu.memory_space<vmem>>, vector<2x1x1xf32>
    %59 = vector.shape_cast %58 : vector<2x1x1xf32> to vector<2x1xf32>
    %60 = vector.broadcast %59 : vector<2x1xf32> to vector<2x32xf32>
    %61 = arith.mulf %60, %22 : vector<2x32xf32>
    %62 = arith.subf %57, %61 : vector<2x32xf32>
    %cst_43 = arith.constant 0.000000e+00 : f32
    %cst_44 = arith.constant 1.000000e+00 : f32
    %63 = vector.broadcast %cst_43 : f32 to vector<2x32xf32>
    %64 = arith.maximumf %63, %62 : vector<2x32xf32>
    %65 = vector.broadcast %cst_44 : f32 to vector<2x32xf32>
    %66 = arith.minimumf %65, %64 : vector<2x32xf32>
    %c0_45 = arith.constant 0 : index
    %c0_46 = arith.constant 0 : index
    %c0_47 = arith.constant 0 : index
    %67 = vector.load %arg9[%c0_45, %c0_46, %c0_47] : memref<2x8x32xf32, #tpu.memory_space<vmem>>, vector<2x1x32xf32>
    %68 = vector.shape_cast %67 : vector<2x1x32xf32> to vector<2x32xf32>
    %69 = vector.shape_cast %66 : vector<2x32xf32> to vector<2x1x32xf32>
    tpu.vector_store %arg9[%c0_45, %c0_46, %c0_47], %69 {strides = array<i32>} : memref<2x8x32xf32, #tpu.memory_space<vmem>>, vector<2x1x32xf32>,
    %c0_48 = arith.constant 0 : index
    %c1 = arith.constant 1 : index
    %c0_49 = arith.constant 0 : index
    %70 = vector.load %arg1[%c0_48, %c1, %c0_49] : memref<2x8x32xf32, #tpu.memory_space<vmem>>, vector<2x1x32xf32>
    %71 = vector.shape_cast %70 : vector<2x1x32xf32> to vector<2x32xf32>
    %cst_50 = arith.constant dense<0.000000e+00> : vector<2x32xf32>
    %72 = tpu.matmul %16, %0, %cst_50 {dimension_numbers = #tpu.dot_dimension_numbers<[1], [0], [0], [1], [0, 0, 1, 1], [], []>} : vector<2x32xf32>, vector<32x32xf32>, vector<2x32xf32> -> vector<2x32xf32>
    %73 = arith.addf %71, %72 : vector<2x32xf32>
    %74 = math.tanh %73 : vector<2x32xf32>
    %c0_51 = arith.constant 0 : index
    %c0_52 = arith.constant 0 : index
    %75 = vector.load %arg12[%c0_51, %c0_52] : memref<2x64xf32, #tpu.memory_space<vmem>>, vector<2x32xf32>
    tpu.vector_store %arg12[%c0_51, %c0_52], %74 {strides = array<i32>} : memref<2x64xf32, #tpu.memory_space<vmem>>, vector<2x32xf32>,
    %c0_53 = arith.constant 0 : index
    %c32_54 = arith.constant 32 : index
    %76 = vector.load %arg12[%c0_53, %c32_54] : memref<2x64xf32, #tpu.memory_space<vmem>>, vector<2x32xf32>
    tpu.vector_store %arg12[%c0_53, %c32_54], %22 {strides = array<i32>} : memref<2x64xf32, #tpu.memory_space<vmem>>, vector<2x32xf32>,
    %c0_55 = arith.constant 0 : index
    %c0_56 = arith.constant 0 : index
    %77 = vector.load %arg12[%c0_55, %c0_56] : memref<2x64xf32, #tpu.memory_space<vmem>>, vector<2x64xf32>
    %cst_57 = arith.constant dense<0.000000e+00> : vector<2x32xf32>
    %78 = tpu.matmul %77, %1, %cst_57 {dimension_numbers = #tpu.dot_dimension_numbers<[1], [0], [0], [1], [0, 0, 1, 1], [], []>} : vector<2x64xf32>, vector<64x32xf32>, vector<2x32xf32> -> vector<2x32xf32>
    %79 = arith.addf %78, %5 : vector<2x32xf32>
    %80 = math.tanh %79 : vector<2x32xf32>
    %c0_58 = arith.constant 0 : index
    %c1_59 = arith.constant 1 : index
    %c0_60 = arith.constant 0 : index
    %81 = vector.load %arg10[%c0_58, %c1_59, %c0_60] : memref<2x8x32xf32, #tpu.memory_space<vmem>>, vector<2x1x32xf32>
    %82 = vector.shape_cast %81 : vector<2x1x32xf32> to vector<2x32xf32>
    %83 = vector.shape_cast %80 : vector<2x32xf32> to vector<2x1x32xf32>
    tpu.vector_store %arg10[%c0_58, %c1_59, %c0_60], %83 {strides = array<i32>} : memref<2x8x32xf32, #tpu.memory_space<vmem>>, vector<2x1x32xf32>,
    %c0_61 = arith.constant 0 : index
    %c0_62 = arith.constant 0 : index
    %84 = vector.load %arg12[%c0_61, %c0_62] : memref<2x64xf32, #tpu.memory_space<vmem>>, vector<2x32xf32>
    tpu.vector_store %arg12[%c0_61, %c0_62], %80 {strides = array<i32>} : memref<2x64xf32, #tpu.memory_space<vmem>>, vector<2x32xf32>,
    %c0_63 = arith.constant 0 : index
    %c32_64 = arith.constant 32 : index
    %85 = vector.load %arg12[%c0_63, %c32_64] : memref<2x64xf32, #tpu.memory_space<vmem>>, vector<2x32xf32>
    tpu.vector_store %arg12[%c0_63, %c32_64], %52 {strides = array<i32>} : memref<2x64xf32, #tpu.memory_space<vmem>>, vector<2x32xf32>,
    %c0_65 = arith.constant 0 : index
    %c0_66 = arith.constant 0 : index
    %86 = vector.load %arg12[%c0_65, %c0_66] : memref<2x64xf32, #tpu.memory_space<vmem>>, vector<2x64xf32>
    %cst_67 = arith.constant dense<0.000000e+00> : vector<2x128xf32>
    %87 = tpu.matmul %86, %2, %cst_67 {dimension_numbers = #tpu.dot_dimension_numbers<[1], [0], [0], [1], [0, 0, 1, 1], [], []>} : vector<2x64xf32>, vector<64x128xf32>, vector<2x128xf32> -> vector<2x128xf32>
    %88 = arith.addf %87, %8 : vector<2x128xf32>
    %89 = vector.extract_strided_slice %88 {offsets = [0, 0], sizes = [2, 32], strides = [1, 1]} : vector<2x128xf32> to vector<2x32xf32>
    %90 = arith.negf %89 : vector<2x32xf32>
    %91 = math.exp %90 : vector<2x32xf32>
    %cst_68 = arith.constant 1.000000e+00 : f32
    %92 = vector.broadcast %cst_68 : f32 to vector<2x32xf32>
    %93 = arith.addf %92, %91 : vector<2x32xf32>
    %94 = arith.divf %92, %93 : vector<2x32xf32>
    %95 = vector.extract_strided_slice %88 {offsets = [0, 32], sizes = [2, 32], strides = [1, 1]} : vector<2x128xf32> to vector<2x32xf32>
    %96 = arith.negf %95 : vector<2x32xf32>
    %97 = math.exp %96 : vector<2x32xf32>
    %cst_69 = arith.constant 1.000000e+00 : f32
    %98 = vector.broadcast %cst_69 : f32 to vector<2x32xf32>
    %99 = arith.addf %98, %97 : vector<2x32xf32>
    %100 = arith.divf %98, %99 : vector<2x32xf32>
    %101 = vector.extract_strided_slice %88 {offsets = [0, 64], sizes = [2, 32], strides = [1, 1]} : vector<2x128xf32> to vector<2x32xf32>
    %102 = vector.extract_strided_slice %88 {offsets = [0, 96], sizes = [2, 32], strides = [1, 1]} : vector<2x128xf32> to vector<2x32xf32>
    %103 = arith.mulf %94, %102 : vector<2x32xf32>
    %104 = arith.addf %101, %103 : vector<2x32xf32>
    %105 = math.tanh %104 : vector<2x32xf32>
    %cst_70 = arith.constant 1.000000e+00 : f32
    %106 = vector.broadcast %cst_70 : f32 to vector<2x32xf32>
    %107 = arith.subf %106, %100 : vector<2x32xf32>
    %108 = arith.mulf %107, %105 : vector<2x32xf32>
    %109 = arith.mulf %100, %52 : vector<2x32xf32>
    %110 = arith.addf %108, %109 : vector<2x32xf32>
    %c0_71 = arith.constant 0 : index
    %c1_72 = arith.constant 1 : index
    %c0_73 = arith.constant 0 : index
    %111 = vector.load %arg11[%c0_71, %c1_72, %c0_73] : memref<2x8x32xf32, #tpu.memory_space<vmem>>, vector<2x1x32xf32>
    %112 = vector.shape_cast %111 : vector<2x1x32xf32> to vector<2x32xf32>
    %113 = vector.shape_cast %110 : vector<2x32xf32> to vector<2x1x32xf32>
    tpu.vector_store %arg11[%c0_71, %c1_72, %c0_73], %113 {strides = array<i32>} : memref<2x8x32xf32, #tpu.memory_space<vmem>>, vector<2x1x32xf32>,
    %c0_74 = arith.constant 0 : index
    %c1_75 = arith.constant 1 : index
    %c0_76 = arith.constant 0 : index
    %114 = vector.load %arg2[%c0_74, %c1_75, %c0_76] : memref<2x8x32xf32, #tpu.memory_space<vmem>>, vector<2x1x32xf32>
    %115 = vector.shape_cast %114 : vector<2x1x32xf32> to vector<2x32xf32>
    %c0_77 = arith.constant 0 : index
    %c1_78 = arith.constant 1 : index
    %c0_79 = arith.constant 0 : index
    %116 = vector.load %arg3[%c0_77, %c1_78, %c0_79] : memref<2x8x1xf32, #tpu.memory_space<vmem>>, vector<2x1x1xf32>
    %117 = vector.shape_cast %116 : vector<2x1x1xf32> to vector<2x1xf32>
    %118 = vector.broadcast %117 : vector<2x1xf32> to vector<2x32xf32>
    %119 = arith.mulf %118, %80 : vector<2x32xf32>
    %120 = arith.subf %115, %119 : vector<2x32xf32>
    %cst_80 = arith.constant 0.000000e+00 : f32
    %cst_81 = arith.constant 1.000000e+00 : f32
    %121 = vector.broadcast %cst_80 : f32 to vector<2x32xf32>
    %122 = arith.maximumf %121, %120 : vector<2x32xf32>
    %123 = vector.broadcast %cst_81 : f32 to vector<2x32xf32>
    %124 = arith.minimumf %123, %122 : vector<2x32xf32>
    %c0_82 = arith.constant 0 : index
    %c1_83 = arith.constant 1 : index
    %c0_84 = arith.constant 0 : index
    %125 = vector.load %arg9[%c0_82, %c1_83, %c0_84] : memref<2x8x32xf32, #tpu.memory_space<vmem>>, vector<2x1x32xf32>
    %126 = vector.shape_cast %125 : vector<2x1x32xf32> to vector<2x32xf32>
    %127 = vector.shape_cast %124 : vector<2x32xf32> to vector<2x1x32xf32>
    tpu.vector_store %arg9[%c0_82, %c1_83, %c0_84], %127 {strides = array<i32>} : memref<2x8x32xf32, #tpu.memory_space<vmem>>, vector<2x1x32xf32>,
    %c0_85 = arith.constant 0 : index
    %c2 = arith.constant 2 : index
    %c0_86 = arith.constant 0 : index
    %128 = vector.load %arg1[%c0_85, %c2, %c0_86] : memref<2x8x32xf32, #tpu.memory_space<vmem>>, vector<2x1x32xf32>
    %129 = vector.shape_cast %128 : vector<2x1x32xf32> to vector<2x32xf32>
    %cst_87 = arith.constant dense<0.000000e+00> : vector<2x32xf32>
    %130 = tpu.matmul %74, %0, %cst_87 {dimension_numbers = #tpu.dot_dimension_numbers<[1], [0], [0], [1], [0, 0, 1, 1], [], []>} : vector<2x32xf32>, vector<32x32xf32>, vector<2x32xf32> -> vector<2x32xf32>
    %131 = arith.addf %129, %130 : vector<2x32xf32>
    %132 = math.tanh %131 : vector<2x32xf32>
    %c0_88 = arith.constant 0 : index
    %c0_89 = arith.constant 0 : index
    %133 = vector.load %arg12[%c0_88, %c0_89] : memref<2x64xf32, #tpu.memory_space<vmem>>, vector<2x32xf32>
    tpu.vector_store %arg12[%c0_88, %c0_89], %132 {strides = array<i32>} : memref<2x64xf32, #tpu.memory_space<vmem>>, vector<2x32xf32>,
    %c0_90 = arith.constant 0 : index
    %c32_91 = arith.constant 32 : index
    %134 = vector.load %arg12[%c0_90, %c32_91] : memref<2x64xf32, #tpu.memory_space<vmem>>, vector<2x32xf32>
    tpu.vector_store %arg12[%c0_90, %c32_91], %80 {strides = array<i32>} : memref<2x64xf32, #tpu.memory_space<vmem>>, vector<2x32xf32>,
    %c0_92 = arith.constant 0 : index
    %c0_93 = arith.constant 0 : index
    %135 = vector.load %arg12[%c0_92, %c0_93] : memref<2x64xf32, #tpu.memory_space<vmem>>, vector<2x64xf32>
    %cst_94 = arith.constant dense<0.000000e+00> : vector<2x32xf32>
    %136 = tpu.matmul %135, %1, %cst_94 {dimension_numbers = #tpu.dot_dimension_numbers<[1], [0], [0], [1], [0, 0, 1, 1], [], []>} : vector<2x64xf32>, vector<64x32xf32>, vector<2x32xf32> -> vector<2x32xf32>
    %137 = arith.addf %136, %5 : vector<2x32xf32>
    %138 = math.tanh %137 : vector<2x32xf32>
    %c0_95 = arith.constant 0 : index
    %c2_96 = arith.constant 2 : index
    %c0_97 = arith.constant 0 : index
    %139 = vector.load %arg10[%c0_95, %c2_96, %c0_97] : memref<2x8x32xf32, #tpu.memory_space<vmem>>, vector<2x1x32xf32>
    %140 = vector.shape_cast %139 : vector<2x1x32xf32> to vector<2x32xf32>
    %141 = vector.shape_cast %138 : vector<2x32xf32> to vector<2x1x32xf32>
    tpu.vector_store %arg10[%c0_95, %c2_96, %c0_97], %141 {strides = array<i32>} : memref<2x8x32xf32, #tpu.memory_space<vmem>>, vector<2x1x32xf32>,
    %c0_98 = arith.constant 0 : index
    %c0_99 = arith.constant 0 : index
    %142 = vector.load %arg12[%c0_98, %c0_99] : memref<2x64xf32, #tpu.memory_space<vmem>>, vector<2x32xf32>
    tpu.vector_store %arg12[%c0_98, %c0_99], %138 {strides = array<i32>} : memref<2x64xf32, #tpu.memory_space<vmem>>, vector<2x32xf32>,
    %c0_100 = arith.constant 0 : index
    %c32_101 = arith.constant 32 : index
    %143 = vector.load %arg12[%c0_100, %c32_101] : memref<2x64xf32, #tpu.memory_space<vmem>>, vector<2x32xf32>
    tpu.vector_store %arg12[%c0_100, %c32_101], %110 {strides = array<i32>} : memref<2x64xf32, #tpu.memory_space<vmem>>, vector<2x32xf32>,
    %c0_102 = arith.constant 0 : index
    %c0_103 = arith.constant 0 : index
    %144 = vector.load %arg12[%c0_102, %c0_103] : memref<2x64xf32, #tpu.memory_space<vmem>>, vector<2x64xf32>
    %cst_104 = arith.constant dense<0.000000e+00> : vector<2x128xf32>
    %145 = tpu.matmul %144, %2, %cst_104 {dimension_numbers = #tpu.dot_dimension_numbers<[1], [0], [0], [1], [0, 0, 1, 1], [], []>} : vector<2x64xf32>, vector<64x128xf32>, vector<2x128xf32> -> vector<2x128xf32>
    %146 = arith.addf %145, %8 : vector<2x128xf32>
    %147 = vector.extract_strided_slice %146 {offsets = [0, 0], sizes = [2, 32], strides = [1, 1]} : vector<2x128xf32> to vector<2x32xf32>
    %148 = arith.negf %147 : vector<2x32xf32>
    %149 = math.exp %148 : vector<2x32xf32>
    %cst_105 = arith.constant 1.000000e+00 : f32
    %150 = vector.broadcast %cst_105 : f32 to vector<2x32xf32>
    %151 = arith.addf %150, %149 : vector<2x32xf32>
    %152 = arith.divf %150, %151 : vector<2x32xf32>
    %153 = vector.extract_strided_slice %146 {offsets = [0, 32], sizes = [2, 32], strides = [1, 1]} : vector<2x128xf32> to vector<2x32xf32>
    %154 = arith.negf %153 : vector<2x32xf32>
    %155 = math.exp %154 : vector<2x32xf32>
    %cst_106 = arith.constant 1.000000e+00 : f32
    %156 = vector.broadcast %cst_106 : f32 to vector<2x32xf32>
    %157 = arith.addf %156, %155 : vector<2x32xf32>
    %158 = arith.divf %156, %157 : vector<2x32xf32>
    %159 = vector.extract_strided_slice %146 {offsets = [0, 64], sizes = [2, 32], strides = [1, 1]} : vector<2x128xf32> to vector<2x32xf32>
    %160 = vector.extract_strided_slice %146 {offsets = [0, 96], sizes = [2, 32], strides = [1, 1]} : vector<2x128xf32> to vector<2x32xf32>
    %161 = arith.mulf %152, %160 : vector<2x32xf32>
    %162 = arith.addf %159, %161 : vector<2x32xf32>
    %163 = math.tanh %162 : vector<2x32xf32>
    %cst_107 = arith.constant 1.000000e+00 : f32
    %164 = vector.broadcast %cst_107 : f32 to vector<2x32xf32>
    %165 = arith.subf %164, %158 : vector<2x32xf32>
    %166 = arith.mulf %165, %163 : vector<2x32xf32>
    %167 = arith.mulf %158, %110 : vector<2x32xf32>
    %168 = arith.addf %166, %167 : vector<2x32xf32>
    %c0_108 = arith.constant 0 : index
    %c2_109 = arith.constant 2 : index
    %c0_110 = arith.constant 0 : index
    %169 = vector.load %arg11[%c0_108, %c2_109, %c0_110] : memref<2x8x32xf32, #tpu.memory_space<vmem>>, vector<2x1x32xf32>
    %170 = vector.shape_cast %169 : vector<2x1x32xf32> to vector<2x32xf32>
    %171 = vector.shape_cast %168 : vector<2x32xf32> to vector<2x1x32xf32>
    tpu.vector_store %arg11[%c0_108, %c2_109, %c0_110], %171 {strides = array<i32>} : memref<2x8x32xf32, #tpu.memory_space<vmem>>, vector<2x1x32xf32>,
    %c0_111 = arith.constant 0 : index
    %c2_112 = arith.constant 2 : index
    %c0_113 = arith.constant 0 : index
    %172 = vector.load %arg2[%c0_111, %c2_112, %c0_113] : memref<2x8x32xf32, #tpu.memory_space<vmem>>, vector<2x1x32xf32>
    %173 = vector.shape_cast %172 : vector<2x1x32xf32> to vector<2x32xf32>
    %c0_114 = arith.constant 0 : index
    %c2_115 = arith.constant 2 : index
    %c0_116 = arith.constant 0 : index
    %174 = vector.load %arg3[%c0_114, %c2_115, %c0_116] : memref<2x8x1xf32, #tpu.memory_space<vmem>>, vector<2x1x1xf32>
    %175 = vector.shape_cast %174 : vector<2x1x1xf32> to vector<2x1xf32>
    %176 = vector.broadcast %175 : vector<2x1xf32> to vector<2x32xf32>
    %177 = arith.mulf %176, %138 : vector<2x32xf32>
    %178 = arith.subf %173, %177 : vector<2x32xf32>
    %cst_117 = arith.constant 0.000000e+00 : f32
    %cst_118 = arith.constant 1.000000e+00 : f32
    %179 = vector.broadcast %cst_117 : f32 to vector<2x32xf32>
    %180 = arith.maximumf %179, %178 : vector<2x32xf32>
    %181 = vector.broadcast %cst_118 : f32 to vector<2x32xf32>
    %182 = arith.minimumf %181, %180 : vector<2x32xf32>
    %c0_119 = arith.constant 0 : index
    %c2_120 = arith.constant 2 : index
    %c0_121 = arith.constant 0 : index
    %183 = vector.load %arg9[%c0_119, %c2_120, %c0_121] : memref<2x8x32xf32, #tpu.memory_space<vmem>>, vector<2x1x32xf32>
    %184 = vector.shape_cast %183 : vector<2x1x32xf32> to vector<2x32xf32>
    %185 = vector.shape_cast %182 : vector<2x32xf32> to vector<2x1x32xf32>
    tpu.vector_store %arg9[%c0_119, %c2_120, %c0_121], %185 {strides = array<i32>} : memref<2x8x32xf32, #tpu.memory_space<vmem>>, vector<2x1x32xf32>,
    %c0_122 = arith.constant 0 : index
    %c3 = arith.constant 3 : index
    %c0_123 = arith.constant 0 : index
    %186 = vector.load %arg1[%c0_122, %c3, %c0_123] : memref<2x8x32xf32, #tpu.memory_space<vmem>>, vector<2x1x32xf32>
    %187 = vector.shape_cast %186 : vector<2x1x32xf32> to vector<2x32xf32>
    %cst_124 = arith.constant dense<0.000000e+00> : vector<2x32xf32>
    %188 = tpu.matmul %132, %0, %cst_124 {dimension_numbers = #tpu.dot_dimension_numbers<[1], [0], [0], [1], [0, 0, 1, 1], [], []>} : vector<2x32xf32>, vector<32x32xf32>, vector<2x32xf32> -> vector<2x32xf32>
    %189 = arith.addf %187, %188 : vector<2x32xf32>
    %190 = math.tanh %189 : vector<2x32xf32>
    %c0_125 = arith.constant 0 : index
    %c0_126 = arith.constant 0 : index
    %191 = vector.load %arg12[%c0_125, %c0_126] : memref<2x64xf32, #tpu.memory_space<vmem>>, vector<2x32xf32>
    tpu.vector_store %arg12[%c0_125, %c0_126], %190 {strides = array<i32>} : memref<2x64xf32, #tpu.memory_space<vmem>>, vector<2x32xf32>,
    %c0_127 = arith.constant 0 : index
    %c32_128 = arith.constant 32 : index
    %192 = vector.load %arg12[%c0_127, %c32_128] : memref<2x64xf32, #tpu.memory_space<vmem>>, vector<2x32xf32>
    tpu.vector_store %arg12[%c0_127, %c32_128], %138 {strides = array<i32>} : memref<2x64xf32, #tpu.memory_space<vmem>>, vector<2x32xf32>,
    %c0_129 = arith.constant 0 : index
    %c0_130 = arith.constant 0 : index
    %193 = vector.load %arg12[%c0_129, %c0_130] : memref<2x64xf32, #tpu.memory_space<vmem>>, vector<2x64xf32>
    %cst_131 = arith.constant dense<0.000000e+00> : vector<2x32xf32>
    %194 = tpu.matmul %193, %1, %cst_131 {dimension_numbers = #tpu.dot_dimension_numbers<[1], [0], [0], [1], [0, 0, 1, 1], [], []>} : vector<2x64xf32>, vector<64x32xf32>, vector<2x32xf32> -> vector<2x32xf32>
    %195 = arith.addf %194, %5 : vector<2x32xf32>
    %196 = math.tanh %195 : vector<2x32xf32>
    %c0_132 = arith.constant 0 : index
    %c3_133 = arith.constant 3 : index
    %c0_134 = arith.constant 0 : index
    %197 = vector.load %arg10[%c0_132, %c3_133, %c0_134] : memref<2x8x32xf32, #tpu.memory_space<vmem>>, vector<2x1x32xf32>
    %198 = vector.shape_cast %197 : vector<2x1x32xf32> to vector<2x32xf32>
    %199 = vector.shape_cast %196 : vector<2x32xf32> to vector<2x1x32xf32>
    tpu.vector_store %arg10[%c0_132, %c3_133, %c0_134], %199 {strides = array<i32>} : memref<2x8x32xf32, #tpu.memory_space<vmem>>, vector<2x1x32xf32>,
    %c0_135 = arith.constant 0 : index
    %c0_136 = arith.constant 0 : index
    %200 = vector.load %arg12[%c0_135, %c0_136] : memref<2x64xf32, #tpu.memory_space<vmem>>, vector<2x32xf32>
    tpu.vector_store %arg12[%c0_135, %c0_136], %196 {strides = array<i32>} : memref<2x64xf32, #tpu.memory_space<vmem>>, vector<2x32xf32>,
    %c0_137 = arith.constant 0 : index
    %c32_138 = arith.constant 32 : index
    %201 = vector.load %arg12[%c0_137, %c32_138] : memref<2x64xf32, #tpu.memory_space<vmem>>, vector<2x32xf32>
    tpu.vector_store %arg12[%c0_137, %c32_138], %168 {strides = array<i32>} : memref<2x64xf32, #tpu.memory_space<vmem>>, vector<2x32xf32>,
    %c0_139 = arith.constant 0 : index
    %c0_140 = arith.constant 0 : index
    %202 = vector.load %arg12[%c0_139, %c0_140] : memref<2x64xf32, #tpu.memory_space<vmem>>, vector<2x64xf32>
    %cst_141 = arith.constant dense<0.000000e+00> : vector<2x128xf32>
    %203 = tpu.matmul %202, %2, %cst_141 {dimension_numbers = #tpu.dot_dimension_numbers<[1], [0], [0], [1], [0, 0, 1, 1], [], []>} : vector<2x64xf32>, vector<64x128xf32>, vector<2x128xf32> -> vector<2x128xf32>
    %204 = arith.addf %203, %8 : vector<2x128xf32>
    %205 = vector.extract_strided_slice %204 {offsets = [0, 0], sizes = [2, 32], strides = [1, 1]} : vector<2x128xf32> to vector<2x32xf32>
    %206 = arith.negf %205 : vector<2x32xf32>
    %207 = math.exp %206 : vector<2x32xf32>
    %cst_142 = arith.constant 1.000000e+00 : f32
    %208 = vector.broadcast %cst_142 : f32 to vector<2x32xf32>
    %209 = arith.addf %208, %207 : vector<2x32xf32>
    %210 = arith.divf %208, %209 : vector<2x32xf32>
    %211 = vector.extract_strided_slice %204 {offsets = [0, 32], sizes = [2, 32], strides = [1, 1]} : vector<2x128xf32> to vector<2x32xf32>
    %212 = arith.negf %211 : vector<2x32xf32>
    %213 = math.exp %212 : vector<2x32xf32>
    %cst_143 = arith.constant 1.000000e+00 : f32
    %214 = vector.broadcast %cst_143 : f32 to vector<2x32xf32>
    %215 = arith.addf %214, %213 : vector<2x32xf32>
    %216 = arith.divf %214, %215 : vector<2x32xf32>
    %217 = vector.extract_strided_slice %204 {offsets = [0, 64], sizes = [2, 32], strides = [1, 1]} : vector<2x128xf32> to vector<2x32xf32>
    %218 = vector.extract_strided_slice %204 {offsets = [0, 96], sizes = [2, 32], strides = [1, 1]} : vector<2x128xf32> to vector<2x32xf32>
    %219 = arith.mulf %210, %218 : vector<2x32xf32>
    %220 = arith.addf %217, %219 : vector<2x32xf32>
    %221 = math.tanh %220 : vector<2x32xf32>
    %cst_144 = arith.constant 1.000000e+00 : f32
    %222 = vector.broadcast %cst_144 : f32 to vector<2x32xf32>
    %223 = arith.subf %222, %216 : vector<2x32xf32>
    %224 = arith.mulf %223, %221 : vector<2x32xf32>
    %225 = arith.mulf %216, %168 : vector<2x32xf32>
    %226 = arith.addf %224, %225 : vector<2x32xf32>
    %c0_145 = arith.constant 0 : index
    %c3_146 = arith.constant 3 : index
    %c0_147 = arith.constant 0 : index
    %227 = vector.load %arg11[%c0_145, %c3_146, %c0_147] : memref<2x8x32xf32, #tpu.memory_space<vmem>>, vector<2x1x32xf32>
    %228 = vector.shape_cast %227 : vector<2x1x32xf32> to vector<2x32xf32>
    %229 = vector.shape_cast %226 : vector<2x32xf32> to vector<2x1x32xf32>
    tpu.vector_store %arg11[%c0_145, %c3_146, %c0_147], %229 {strides = array<i32>} : memref<2x8x32xf32, #tpu.memory_space<vmem>>, vector<2x1x32xf32>,
    %c0_148 = arith.constant 0 : index
    %c3_149 = arith.constant 3 : index
    %c0_150 = arith.constant 0 : index
    %230 = vector.load %arg2[%c0_148, %c3_149, %c0_150] : memref<2x8x32xf32, #tpu.memory_space<vmem>>, vector<2x1x32xf32>
    %231 = vector.shape_cast %230 : vector<2x1x32xf32> to vector<2x32xf32>
    %c0_151 = arith.constant 0 : index
    %c3_152 = arith.constant 3 : index
    %c0_153 = arith.constant 0 : index
    %232 = vector.load %arg3[%c0_151, %c3_152, %c0_153] : memref<2x8x1xf32, #tpu.memory_space<vmem>>, vector<2x1x1xf32>
    %233 = vector.shape_cast %232 : vector<2x1x1xf32> to vector<2x1xf32>
    %234 = vector.broadcast %233 : vector<2x1xf32> to vector<2x32xf32>
    %235 = arith.mulf %234, %196 : vector<2x32xf32>
    %236 = arith.subf %231, %235 : vector<2x32xf32>
    %cst_154 = arith.constant 0.000000e+00 : f32
    %cst_155 = arith.constant 1.000000e+00 : f32
    %237 = vector.broadcast %cst_154 : f32 to vector<2x32xf32>
    %238 = arith.maximumf %237, %236 : vector<2x32xf32>
    %239 = vector.broadcast %cst_155 : f32 to vector<2x32xf32>
    %240 = arith.minimumf %239, %238 : vector<2x32xf32>
    %c0_156 = arith.constant 0 : index
    %c3_157 = arith.constant 3 : index
    %c0_158 = arith.constant 0 : index
    %241 = vector.load %arg9[%c0_156, %c3_157, %c0_158] : memref<2x8x32xf32, #tpu.memory_space<vmem>>, vector<2x1x32xf32>
    %242 = vector.shape_cast %241 : vector<2x1x32xf32> to vector<2x32xf32>
    %243 = vector.shape_cast %240 : vector<2x32xf32> to vector<2x1x32xf32>
    tpu.vector_store %arg9[%c0_156, %c3_157, %c0_158], %243 {strides = array<i32>} : memref<2x8x32xf32, #tpu.memory_space<vmem>>, vector<2x1x32xf32>,
    %c0_159 = arith.constant 0 : index
    %c4 = arith.constant 4 : index
    %c0_160 = arith.constant 0 : index
    %244 = vector.load %arg1[%c0_159, %c4, %c0_160] : memref<2x8x32xf32, #tpu.memory_space<vmem>>, vector<2x1x32xf32>
    %245 = vector.shape_cast %244 : vector<2x1x32xf32> to vector<2x32xf32>
    %cst_161 = arith.constant dense<0.000000e+00> : vector<2x32xf32>
    %246 = tpu.matmul %190, %0, %cst_161 {dimension_numbers = #tpu.dot_dimension_numbers<[1], [0], [0], [1], [0, 0, 1, 1], [], []>} : vector<2x32xf32>, vector<32x32xf32>, vector<2x32xf32> -> vector<2x32xf32>
    %247 = arith.addf %245, %246 : vector<2x32xf32>
    %248 = math.tanh %247 : vector<2x32xf32>
    %c0_162 = arith.constant 0 : index
    %c0_163 = arith.constant 0 : index
    %249 = vector.load %arg12[%c0_162, %c0_163] : memref<2x64xf32, #tpu.memory_space<vmem>>, vector<2x32xf32>
    tpu.vector_store %arg12[%c0_162, %c0_163], %248 {strides = array<i32>} : memref<2x64xf32, #tpu.memory_space<vmem>>, vector<2x32xf32>,
    %c0_164 = arith.constant 0 : index
    %c32_165 = arith.constant 32 : index
    %250 = vector.load %arg12[%c0_164, %c32_165] : memref<2x64xf32, #tpu.memory_space<vmem>>, vector<2x32xf32>
    tpu.vector_store %arg12[%c0_164, %c32_165], %196 {strides = array<i32>} : memref<2x64xf32, #tpu.memory_space<vmem>>, vector<2x32xf32>,
    %c0_166 = arith.constant 0 : index
    %c0_167 = arith.constant 0 : index
    %251 = vector.load %arg12[%c0_166, %c0_167] : memref<2x64xf32, #tpu.memory_space<vmem>>, vector<2x64xf32>
    %cst_168 = arith.constant dense<0.000000e+00> : vector<2x32xf32>
    %252 = tpu.matmul %251, %1, %cst_168 {dimension_numbers = #tpu.dot_dimension_numbers<[1], [0], [0], [1], [0, 0, 1, 1], [], []>} : vector<2x64xf32>, vector<64x32xf32>, vector<2x32xf32> -> vector<2x32xf32>
    %253 = arith.addf %252, %5 : vector<2x32xf32>
    %254 = math.tanh %253 : vector<2x32xf32>
    %c0_169 = arith.constant 0 : index
    %c4_170 = arith.constant 4 : index
    %c0_171 = arith.constant 0 : index
    %255 = vector.load %arg10[%c0_169, %c4_170, %c0_171] : memref<2x8x32xf32, #tpu.memory_space<vmem>>, vector<2x1x32xf32>
    %256 = vector.shape_cast %255 : vector<2x1x32xf32> to vector<2x32xf32>
    %257 = vector.shape_cast %254 : vector<2x32xf32> to vector<2x1x32xf32>
    tpu.vector_store %arg10[%c0_169, %c4_170, %c0_171], %257 {strides = array<i32>} : memref<2x8x32xf32, #tpu.memory_space<vmem>>, vector<2x1x32xf32>,
    %c0_172 = arith.constant 0 : index
    %c0_173 = arith.constant 0 : index
    %258 = vector.load %arg12[%c0_172, %c0_173] : memref<2x64xf32, #tpu.memory_space<vmem>>, vector<2x32xf32>
    tpu.vector_store %arg12[%c0_172, %c0_173], %254 {strides = array<i32>} : memref<2x64xf32, #tpu.memory_space<vmem>>, vector<2x32xf32>,
    %c0_174 = arith.constant 0 : index
    %c32_175 = arith.constant 32 : index
    %259 = vector.load %arg12[%c0_174, %c32_175] : memref<2x64xf32, #tpu.memory_space<vmem>>, vector<2x32xf32>
    tpu.vector_store %arg12[%c0_174, %c32_175], %226 {strides = array<i32>} : memref<2x64xf32, #tpu.memory_space<vmem>>, vector<2x32xf32>,
    %c0_176 = arith.constant 0 : index
    %c0_177 = arith.constant 0 : index
    %260 = vector.load %arg12[%c0_176, %c0_177] : memref<2x64xf32, #tpu.memory_space<vmem>>, vector<2x64xf32>
    %cst_178 = arith.constant dense<0.000000e+00> : vector<2x128xf32>
    %261 = tpu.matmul %260, %2, %cst_178 {dimension_numbers = #tpu.dot_dimension_numbers<[1], [0], [0], [1], [0, 0, 1, 1], [], []>} : vector<2x64xf32>, vector<64x128xf32>, vector<2x128xf32> -> vector<2x128xf32>
    %262 = arith.addf %261, %8 : vector<2x128xf32>
    %263 = vector.extract_strided_slice %262 {offsets = [0, 0], sizes = [2, 32], strides = [1, 1]} : vector<2x128xf32> to vector<2x32xf32>
    %264 = arith.negf %263 : vector<2x32xf32>
    %265 = math.exp %264 : vector<2x32xf32>
    %cst_179 = arith.constant 1.000000e+00 : f32
    %266 = vector.broadcast %cst_179 : f32 to vector<2x32xf32>
    %267 = arith.addf %266, %265 : vector<2x32xf32>
    %268 = arith.divf %266, %267 : vector<2x32xf32>
    %269 = vector.extract_strided_slice %262 {offsets = [0, 32], sizes = [2, 32], strides = [1, 1]} : vector<2x128xf32> to vector<2x32xf32>
    %270 = arith.negf %269 : vector<2x32xf32>
    %271 = math.exp %270 : vector<2x32xf32>
    %cst_180 = arith.constant 1.000000e+00 : f32
    %272 = vector.broadcast %cst_180 : f32 to vector<2x32xf32>
    %273 = arith.addf %272, %271 : vector<2x32xf32>
    %274 = arith.divf %272, %273 : vector<2x32xf32>
    %275 = vector.extract_strided_slice %262 {offsets = [0, 64], sizes = [2, 32], strides = [1, 1]} : vector<2x128xf32> to vector<2x32xf32>
    %276 = vector.extract_strided_slice %262 {offsets = [0, 96], sizes = [2, 32], strides = [1, 1]} : vector<2x128xf32> to vector<2x32xf32>
    %277 = arith.mulf %268, %276 : vector<2x32xf32>
    %278 = arith.addf %275, %277 : vector<2x32xf32>
    %279 = math.tanh %278 : vector<2x32xf32>
    %cst_181 = arith.constant 1.000000e+00 : f32
    %280 = vector.broadcast %cst_181 : f32 to vector<2x32xf32>
    %281 = arith.subf %280, %274 : vector<2x32xf32>
    %282 = arith.mulf %281, %279 : vector<2x32xf32>
    %283 = arith.mulf %274, %226 : vector<2x32xf32>
    %284 = arith.addf %282, %283 : vector<2x32xf32>
    %c0_182 = arith.constant 0 : index
    %c4_183 = arith.constant 4 : index
    %c0_184 = arith.constant 0 : index
    %285 = vector.load %arg11[%c0_182, %c4_183, %c0_184] : memref<2x8x32xf32, #tpu.memory_space<vmem>>, vector<2x1x32xf32>
    %286 = vector.shape_cast %285 : vector<2x1x32xf32> to vector<2x32xf32>
    %287 = vector.shape_cast %284 : vector<2x32xf32> to vector<2x1x32xf32>
    tpu.vector_store %arg11[%c0_182, %c4_183, %c0_184], %287 {strides = array<i32>} : memref<2x8x32xf32, #tpu.memory_space<vmem>>, vector<2x1x32xf32>,
    %c0_185 = arith.constant 0 : index
    %c4_186 = arith.constant 4 : index
    %c0_187 = arith.constant 0 : index
    %288 = vector.load %arg2[%c0_185, %c4_186, %c0_187] : memref<2x8x32xf32, #tpu.memory_space<vmem>>, vector<2x1x32xf32>
    %289 = vector.shape_cast %288 : vector<2x1x32xf32> to vector<2x32xf32>
    %c0_188 = arith.constant 0 : index
    %c4_189 = arith.constant 4 : index
    %c0_190 = arith.constant 0 : index
    %290 = vector.load %arg3[%c0_188, %c4_189, %c0_190] : memref<2x8x1xf32, #tpu.memory_space<vmem>>, vector<2x1x1xf32>
    %291 = vector.shape_cast %290 : vector<2x1x1xf32> to vector<2x1xf32>
    %292 = vector.broadcast %291 : vector<2x1xf32> to vector<2x32xf32>
    %293 = arith.mulf %292, %254 : vector<2x32xf32>
    %294 = arith.subf %289, %293 : vector<2x32xf32>
    %cst_191 = arith.constant 0.000000e+00 : f32
    %cst_192 = arith.constant 1.000000e+00 : f32
    %295 = vector.broadcast %cst_191 : f32 to vector<2x32xf32>
    %296 = arith.maximumf %295, %294 : vector<2x32xf32>
    %297 = vector.broadcast %cst_192 : f32 to vector<2x32xf32>
    %298 = arith.minimumf %297, %296 : vector<2x32xf32>
    %c0_193 = arith.constant 0 : index
    %c4_194 = arith.constant 4 : index
    %c0_195 = arith.constant 0 : index
    %299 = vector.load %arg9[%c0_193, %c4_194, %c0_195] : memref<2x8x32xf32, #tpu.memory_space<vmem>>, vector<2x1x32xf32>
    %300 = vector.shape_cast %299 : vector<2x1x32xf32> to vector<2x32xf32>
    %301 = vector.shape_cast %298 : vector<2x32xf32> to vector<2x1x32xf32>
    tpu.vector_store %arg9[%c0_193, %c4_194, %c0_195], %301 {strides = array<i32>} : memref<2x8x32xf32, #tpu.memory_space<vmem>>, vector<2x1x32xf32>,
    %c0_196 = arith.constant 0 : index
    %c5 = arith.constant 5 : index
    %c0_197 = arith.constant 0 : index
    %302 = vector.load %arg1[%c0_196, %c5, %c0_197] : memref<2x8x32xf32, #tpu.memory_space<vmem>>, vector<2x1x32xf32>
    %303 = vector.shape_cast %302 : vector<2x1x32xf32> to vector<2x32xf32>
    %cst_198 = arith.constant dense<0.000000e+00> : vector<2x32xf32>
    %304 = tpu.matmul %248, %0, %cst_198 {dimension_numbers = #tpu.dot_dimension_numbers<[1], [0], [0], [1], [0, 0, 1, 1], [], []>} : vector<2x32xf32>, vector<32x32xf32>, vector<2x32xf32> -> vector<2x32xf32>
    %305 = arith.addf %303, %304 : vector<2x32xf32>
    %306 = math.tanh %305 : vector<2x32xf32>
    %c0_199 = arith.constant 0 : index
    %c0_200 = arith.constant 0 : index
    %307 = vector.load %arg12[%c0_199, %c0_200] : memref<2x64xf32, #tpu.memory_space<vmem>>, vector<2x32xf32>
    tpu.vector_store %arg12[%c0_199, %c0_200], %306 {strides = array<i32>} : memref<2x64xf32, #tpu.memory_space<vmem>>, vector<2x32xf32>,
    %c0_201 = arith.constant 0 : index
    %c32_202 = arith.constant 32 : index
    %308 = vector.load %arg12[%c0_201, %c32_202] : memref<2x64xf32, #tpu.memory_space<vmem>>, vector<2x32xf32>
    tpu.vector_store %arg12[%c0_201, %c32_202], %254 {strides = array<i32>} : memref<2x64xf32, #tpu.memory_space<vmem>>, vector<2x32xf32>,
    %c0_203 = arith.constant 0 : index
    %c0_204 = arith.constant 0 : index
    %309 = vector.load %arg12[%c0_203, %c0_204] : memref<2x64xf32, #tpu.memory_space<vmem>>, vector<2x64xf32>
    %cst_205 = arith.constant dense<0.000000e+00> : vector<2x32xf32>
    %310 = tpu.matmul %309, %1, %cst_205 {dimension_numbers = #tpu.dot_dimension_numbers<[1], [0], [0], [1], [0, 0, 1, 1], [], []>} : vector<2x64xf32>, vector<64x32xf32>, vector<2x32xf32> -> vector<2x32xf32>
    %311 = arith.addf %310, %5 : vector<2x32xf32>
    %312 = math.tanh %311 : vector<2x32xf32>
    %c0_206 = arith.constant 0 : index
    %c5_207 = arith.constant 5 : index
    %c0_208 = arith.constant 0 : index
    %313 = vector.load %arg10[%c0_206, %c5_207, %c0_208] : memref<2x8x32xf32, #tpu.memory_space<vmem>>, vector<2x1x32xf32>
    %314 = vector.shape_cast %313 : vector<2x1x32xf32> to vector<2x32xf32>
    %315 = vector.shape_cast %312 : vector<2x32xf32> to vector<2x1x32xf32>
    tpu.vector_store %arg10[%c0_206, %c5_207, %c0_208], %315 {strides = array<i32>} : memref<2x8x32xf32, #tpu.memory_space<vmem>>, vector<2x1x32xf32>,
    %c0_209 = arith.constant 0 : index
    %c0_210 = arith.constant 0 : index
    %316 = vector.load %arg12[%c0_209, %c0_210] : memref<2x64xf32, #tpu.memory_space<vmem>>, vector<2x32xf32>
    tpu.vector_store %arg12[%c0_209, %c0_210], %312 {strides = array<i32>} : memref<2x64xf32, #tpu.memory_space<vmem>>, vector<2x32xf32>,
    %c0_211 = arith.constant 0 : index
    %c32_212 = arith.constant 32 : index
    %317 = vector.load %arg12[%c0_211, %c32_212] : memref<2x64xf32, #tpu.memory_space<vmem>>, vector<2x32xf32>
    tpu.vector_store %arg12[%c0_211, %c32_212], %284 {strides = array<i32>} : memref<2x64xf32, #tpu.memory_space<vmem>>, vector<2x32xf32>,
    %c0_213 = arith.constant 0 : index
    %c0_214 = arith.constant 0 : index
    %318 = vector.load %arg12[%c0_213, %c0_214] : memref<2x64xf32, #tpu.memory_space<vmem>>, vector<2x64xf32>
    %cst_215 = arith.constant dense<0.000000e+00> : vector<2x128xf32>
    %319 = tpu.matmul %318, %2, %cst_215 {dimension_numbers = #tpu.dot_dimension_numbers<[1], [0], [0], [1], [0, 0, 1, 1], [], []>} : vector<2x64xf32>, vector<64x128xf32>, vector<2x128xf32> -> vector<2x128xf32>
    %320 = arith.addf %319, %8 : vector<2x128xf32>
    %321 = vector.extract_strided_slice %320 {offsets = [0, 0], sizes = [2, 32], strides = [1, 1]} : vector<2x128xf32> to vector<2x32xf32>
    %322 = arith.negf %321 : vector<2x32xf32>
    %323 = math.exp %322 : vector<2x32xf32>
    %cst_216 = arith.constant 1.000000e+00 : f32
    %324 = vector.broadcast %cst_216 : f32 to vector<2x32xf32>
    %325 = arith.addf %324, %323 : vector<2x32xf32>
    %326 = arith.divf %324, %325 : vector<2x32xf32>
    %327 = vector.extract_strided_slice %320 {offsets = [0, 32], sizes = [2, 32], strides = [1, 1]} : vector<2x128xf32> to vector<2x32xf32>
    %328 = arith.negf %327 : vector<2x32xf32>
    %329 = math.exp %328 : vector<2x32xf32>
    %cst_217 = arith.constant 1.000000e+00 : f32
    %330 = vector.broadcast %cst_217 : f32 to vector<2x32xf32>
    %331 = arith.addf %330, %329 : vector<2x32xf32>
    %332 = arith.divf %330, %331 : vector<2x32xf32>
    %333 = vector.extract_strided_slice %320 {offsets = [0, 64], sizes = [2, 32], strides = [1, 1]} : vector<2x128xf32> to vector<2x32xf32>
    %334 = vector.extract_strided_slice %320 {offsets = [0, 96], sizes = [2, 32], strides = [1, 1]} : vector<2x128xf32> to vector<2x32xf32>
    %335 = arith.mulf %326, %334 : vector<2x32xf32>
    %336 = arith.addf %333, %335 : vector<2x32xf32>
    %337 = math.tanh %336 : vector<2x32xf32>
    %cst_218 = arith.constant 1.000000e+00 : f32
    %338 = vector.broadcast %cst_218 : f32 to vector<2x32xf32>
    %339 = arith.subf %338, %332 : vector<2x32xf32>
    %340 = arith.mulf %339, %337 : vector<2x32xf32>
    %341 = arith.mulf %332, %284 : vector<2x32xf32>
    %342 = arith.addf %340, %341 : vector<2x32xf32>
    %c0_219 = arith.constant 0 : index
    %c5_220 = arith.constant 5 : index
    %c0_221 = arith.constant 0 : index
    %343 = vector.load %arg11[%c0_219, %c5_220, %c0_221] : memref<2x8x32xf32, #tpu.memory_space<vmem>>, vector<2x1x32xf32>
    %344 = vector.shape_cast %343 : vector<2x1x32xf32> to vector<2x32xf32>
    %345 = vector.shape_cast %342 : vector<2x32xf32> to vector<2x1x32xf32>
    tpu.vector_store %arg11[%c0_219, %c5_220, %c0_221], %345 {strides = array<i32>} : memref<2x8x32xf32, #tpu.memory_space<vmem>>, vector<2x1x32xf32>,
    %c0_222 = arith.constant 0 : index
    %c5_223 = arith.constant 5 : index
    %c0_224 = arith.constant 0 : index
    %346 = vector.load %arg2[%c0_222, %c5_223, %c0_224] : memref<2x8x32xf32, #tpu.memory_space<vmem>>, vector<2x1x32xf32>
    %347 = vector.shape_cast %346 : vector<2x1x32xf32> to vector<2x32xf32>
    %c0_225 = arith.constant 0 : index
    %c5_226 = arith.constant 5 : index
    %c0_227 = arith.constant 0 : index
    %348 = vector.load %arg3[%c0_225, %c5_226, %c0_227] : memref<2x8x1xf32, #tpu.memory_space<vmem>>, vector<2x1x1xf32>
    %349 = vector.shape_cast %348 : vector<2x1x1xf32> to vector<2x1xf32>
    %350 = vector.broadcast %349 : vector<2x1xf32> to vector<2x32xf32>
    %351 = arith.mulf %350, %312 : vector<2x32xf32>
    %352 = arith.subf %347, %351 : vector<2x32xf32>
    %cst_228 = arith.constant 0.000000e+00 : f32
    %cst_229 = arith.constant 1.000000e+00 : f32
    %353 = vector.broadcast %cst_228 : f32 to vector<2x32xf32>
    %354 = arith.maximumf %353, %352 : vector<2x32xf32>
    %355 = vector.broadcast %cst_229 : f32 to vector<2x32xf32>
    %356 = arith.minimumf %355, %354 : vector<2x32xf32>
    %c0_230 = arith.constant 0 : index
    %c5_231 = arith.constant 5 : index
    %c0_232 = arith.constant 0 : index
    %357 = vector.load %arg9[%c0_230, %c5_231, %c0_232] : memref<2x8x32xf32, #tpu.memory_space<vmem>>, vector<2x1x32xf32>
    %358 = vector.shape_cast %357 : vector<2x1x32xf32> to vector<2x32xf32>
    %359 = vector.shape_cast %356 : vector<2x32xf32> to vector<2x1x32xf32>
    tpu.vector_store %arg9[%c0_230, %c5_231, %c0_232], %359 {strides = array<i32>} : memref<2x8x32xf32, #tpu.memory_space<vmem>>, vector<2x1x32xf32>,
    %c0_233 = arith.constant 0 : index
    %c6 = arith.constant 6 : index
    %c0_234 = arith.constant 0 : index
    %360 = vector.load %arg1[%c0_233, %c6, %c0_234] : memref<2x8x32xf32, #tpu.memory_space<vmem>>, vector<2x1x32xf32>
    %361 = vector.shape_cast %360 : vector<2x1x32xf32> to vector<2x32xf32>
    %cst_235 = arith.constant dense<0.000000e+00> : vector<2x32xf32>
    %362 = tpu.matmul %306, %0, %cst_235 {dimension_numbers = #tpu.dot_dimension_numbers<[1], [0], [0], [1], [0, 0, 1, 1], [], []>} : vector<2x32xf32>, vector<32x32xf32>, vector<2x32xf32> -> vector<2x32xf32>
    %363 = arith.addf %361, %362 : vector<2x32xf32>
    %364 = math.tanh %363 : vector<2x32xf32>
    %c0_236 = arith.constant 0 : index
    %c0_237 = arith.constant 0 : index
    %365 = vector.load %arg12[%c0_236, %c0_237] : memref<2x64xf32, #tpu.memory_space<vmem>>, vector<2x32xf32>
    tpu.vector_store %arg12[%c0_236, %c0_237], %364 {strides = array<i32>} : memref<2x64xf32, #tpu.memory_space<vmem>>, vector<2x32xf32>,
    %c0_238 = arith.constant 0 : index
    %c32_239 = arith.constant 32 : index
    %366 = vector.load %arg12[%c0_238, %c32_239] : memref<2x64xf32, #tpu.memory_space<vmem>>, vector<2x32xf32>
    tpu.vector_store %arg12[%c0_238, %c32_239], %312 {strides = array<i32>} : memref<2x64xf32, #tpu.memory_space<vmem>>, vector<2x32xf32>,
    %c0_240 = arith.constant 0 : index
    %c0_241 = arith.constant 0 : index
    %367 = vector.load %arg12[%c0_240, %c0_241] : memref<2x64xf32, #tpu.memory_space<vmem>>, vector<2x64xf32>
    %cst_242 = arith.constant dense<0.000000e+00> : vector<2x32xf32>
    %368 = tpu.matmul %367, %1, %cst_242 {dimension_numbers = #tpu.dot_dimension_numbers<[1], [0], [0], [1], [0, 0, 1, 1], [], []>} : vector<2x64xf32>, vector<64x32xf32>, vector<2x32xf32> -> vector<2x32xf32>
    %369 = arith.addf %368, %5 : vector<2x32xf32>
    %370 = math.tanh %369 : vector<2x32xf32>
    %c0_243 = arith.constant 0 : index
    %c6_244 = arith.constant 6 : index
    %c0_245 = arith.constant 0 : index
    %371 = vector.load %arg10[%c0_243, %c6_244, %c0_245] : memref<2x8x32xf32, #tpu.memory_space<vmem>>, vector<2x1x32xf32>
    %372 = vector.shape_cast %371 : vector<2x1x32xf32> to vector<2x32xf32>
    %373 = vector.shape_cast %370 : vector<2x32xf32> to vector<2x1x32xf32>
    tpu.vector_store %arg10[%c0_243, %c6_244, %c0_245], %373 {strides = array<i32>} : memref<2x8x32xf32, #tpu.memory_space<vmem>>, vector<2x1x32xf32>,
    %c0_246 = arith.constant 0 : index
    %c0_247 = arith.constant 0 : index
    %374 = vector.load %arg12[%c0_246, %c0_247] : memref<2x64xf32, #tpu.memory_space<vmem>>, vector<2x32xf32>
    tpu.vector_store %arg12[%c0_246, %c0_247], %370 {strides = array<i32>} : memref<2x64xf32, #tpu.memory_space<vmem>>, vector<2x32xf32>,
    %c0_248 = arith.constant 0 : index
    %c32_249 = arith.constant 32 : index
    %375 = vector.load %arg12[%c0_248, %c32_249] : memref<2x64xf32, #tpu.memory_space<vmem>>, vector<2x32xf32>
    tpu.vector_store %arg12[%c0_248, %c32_249], %342 {strides = array<i32>} : memref<2x64xf32, #tpu.memory_space<vmem>>, vector<2x32xf32>,
    %c0_250 = arith.constant 0 : index
    %c0_251 = arith.constant 0 : index
    %376 = vector.load %arg12[%c0_250, %c0_251] : memref<2x64xf32, #tpu.memory_space<vmem>>, vector<2x64xf32>
    %cst_252 = arith.constant dense<0.000000e+00> : vector<2x128xf32>
    %377 = tpu.matmul %376, %2, %cst_252 {dimension_numbers = #tpu.dot_dimension_numbers<[1], [0], [0], [1], [0, 0, 1, 1], [], []>} : vector<2x64xf32>, vector<64x128xf32>, vector<2x128xf32> -> vector<2x128xf32>
    %378 = arith.addf %377, %8 : vector<2x128xf32>
    %379 = vector.extract_strided_slice %378 {offsets = [0, 0], sizes = [2, 32], strides = [1, 1]} : vector<2x128xf32> to vector<2x32xf32>
    %380 = arith.negf %379 : vector<2x32xf32>
    %381 = math.exp %380 : vector<2x32xf32>
    %cst_253 = arith.constant 1.000000e+00 : f32
    %382 = vector.broadcast %cst_253 : f32 to vector<2x32xf32>
    %383 = arith.addf %382, %381 : vector<2x32xf32>
    %384 = arith.divf %382, %383 : vector<2x32xf32>
    %385 = vector.extract_strided_slice %378 {offsets = [0, 32], sizes = [2, 32], strides = [1, 1]} : vector<2x128xf32> to vector<2x32xf32>
    %386 = arith.negf %385 : vector<2x32xf32>
    %387 = math.exp %386 : vector<2x32xf32>
    %cst_254 = arith.constant 1.000000e+00 : f32
    %388 = vector.broadcast %cst_254 : f32 to vector<2x32xf32>
    %389 = arith.addf %388, %387 : vector<2x32xf32>
    %390 = arith.divf %388, %389 : vector<2x32xf32>
    %391 = vector.extract_strided_slice %378 {offsets = [0, 64], sizes = [2, 32], strides = [1, 1]} : vector<2x128xf32> to vector<2x32xf32>
    %392 = vector.extract_strided_slice %378 {offsets = [0, 96], sizes = [2, 32], strides = [1, 1]} : vector<2x128xf32> to vector<2x32xf32>
    %393 = arith.mulf %384, %392 : vector<2x32xf32>
    %394 = arith.addf %391, %393 : vector<2x32xf32>
    %395 = math.tanh %394 : vector<2x32xf32>
    %cst_255 = arith.constant 1.000000e+00 : f32
    %396 = vector.broadcast %cst_255 : f32 to vector<2x32xf32>
    %397 = arith.subf %396, %390 : vector<2x32xf32>
    %398 = arith.mulf %397, %395 : vector<2x32xf32>
    %399 = arith.mulf %390, %342 : vector<2x32xf32>
    %400 = arith.addf %398, %399 : vector<2x32xf32>
    %c0_256 = arith.constant 0 : index
    %c6_257 = arith.constant 6 : index
    %c0_258 = arith.constant 0 : index
    %401 = vector.load %arg11[%c0_256, %c6_257, %c0_258] : memref<2x8x32xf32, #tpu.memory_space<vmem>>, vector<2x1x32xf32>
    %402 = vector.shape_cast %401 : vector<2x1x32xf32> to vector<2x32xf32>
    %403 = vector.shape_cast %400 : vector<2x32xf32> to vector<2x1x32xf32>
    tpu.vector_store %arg11[%c0_256, %c6_257, %c0_258], %403 {strides = array<i32>} : memref<2x8x32xf32, #tpu.memory_space<vmem>>, vector<2x1x32xf32>,
    %c0_259 = arith.constant 0 : index
    %c6_260 = arith.constant 6 : index
    %c0_261 = arith.constant 0 : index
    %404 = vector.load %arg2[%c0_259, %c6_260, %c0_261] : memref<2x8x32xf32, #tpu.memory_space<vmem>>, vector<2x1x32xf32>
    %405 = vector.shape_cast %404 : vector<2x1x32xf32> to vector<2x32xf32>
    %c0_262 = arith.constant 0 : index
    %c6_263 = arith.constant 6 : index
    %c0_264 = arith.constant 0 : index
    %406 = vector.load %arg3[%c0_262, %c6_263, %c0_264] : memref<2x8x1xf32, #tpu.memory_space<vmem>>, vector<2x1x1xf32>
    %407 = vector.shape_cast %406 : vector<2x1x1xf32> to vector<2x1xf32>
    %408 = vector.broadcast %407 : vector<2x1xf32> to vector<2x32xf32>
    %409 = arith.mulf %408, %370 : vector<2x32xf32>
    %410 = arith.subf %405, %409 : vector<2x32xf32>
    %cst_265 = arith.constant 0.000000e+00 : f32
    %cst_266 = arith.constant 1.000000e+00 : f32
    %411 = vector.broadcast %cst_265 : f32 to vector<2x32xf32>
    %412 = arith.maximumf %411, %410 : vector<2x32xf32>
    %413 = vector.broadcast %cst_266 : f32 to vector<2x32xf32>
    %414 = arith.minimumf %413, %412 : vector<2x32xf32>
    %c0_267 = arith.constant 0 : index
    %c6_268 = arith.constant 6 : index
    %c0_269 = arith.constant 0 : index
    %415 = vector.load %arg9[%c0_267, %c6_268, %c0_269] : memref<2x8x32xf32, #tpu.memory_space<vmem>>, vector<2x1x32xf32>
    %416 = vector.shape_cast %415 : vector<2x1x32xf32> to vector<2x32xf32>
    %417 = vector.shape_cast %414 : vector<2x32xf32> to vector<2x1x32xf32>
    tpu.vector_store %arg9[%c0_267, %c6_268, %c0_269], %417 {strides = array<i32>} : memref<2x8x32xf32, #tpu.memory_space<vmem>>, vector<2x1x32xf32>,
    %c0_270 = arith.constant 0 : index
    %c7 = arith.constant 7 : index
    %c0_271 = arith.constant 0 : index
    %418 = vector.load %arg1[%c0_270, %c7, %c0_271] : memref<2x8x32xf32, #tpu.memory_space<vmem>>, vector<2x1x32xf32>
    %419 = vector.shape_cast %418 : vector<2x1x32xf32> to vector<2x32xf32>
    %cst_272 = arith.constant dense<0.000000e+00> : vector<2x32xf32>
    %420 = tpu.matmul %364, %0, %cst_272 {dimension_numbers = #tpu.dot_dimension_numbers<[1], [0], [0], [1], [0, 0, 1, 1], [], []>} : vector<2x32xf32>, vector<32x32xf32>, vector<2x32xf32> -> vector<2x32xf32>
    %421 = arith.addf %419, %420 : vector<2x32xf32>
    %422 = math.tanh %421 : vector<2x32xf32>
    %c0_273 = arith.constant 0 : index
    %c0_274 = arith.constant 0 : index
    %423 = vector.load %arg12[%c0_273, %c0_274] : memref<2x64xf32, #tpu.memory_space<vmem>>, vector<2x32xf32>
    tpu.vector_store %arg12[%c0_273, %c0_274], %422 {strides = array<i32>} : memref<2x64xf32, #tpu.memory_space<vmem>>, vector<2x32xf32>,
    %c0_275 = arith.constant 0 : index
    %c32_276 = arith.constant 32 : index
    %424 = vector.load %arg12[%c0_275, %c32_276] : memref<2x64xf32, #tpu.memory_space<vmem>>, vector<2x32xf32>
    tpu.vector_store %arg12[%c0_275, %c32_276], %370 {strides = array<i32>} : memref<2x64xf32, #tpu.memory_space<vmem>>, vector<2x32xf32>,
    %c0_277 = arith.constant 0 : index
    %c0_278 = arith.constant 0 : index
    %425 = vector.load %arg12[%c0_277, %c0_278] : memref<2x64xf32, #tpu.memory_space<vmem>>, vector<2x64xf32>
    %cst_279 = arith.constant dense<0.000000e+00> : vector<2x32xf32>
    %426 = tpu.matmul %425, %1, %cst_279 {dimension_numbers = #tpu.dot_dimension_numbers<[1], [0], [0], [1], [0, 0, 1, 1], [], []>} : vector<2x64xf32>, vector<64x32xf32>, vector<2x32xf32> -> vector<2x32xf32>
    %427 = arith.addf %426, %5 : vector<2x32xf32>
    %428 = math.tanh %427 : vector<2x32xf32>
    %c0_280 = arith.constant 0 : index
    %c7_281 = arith.constant 7 : index
    %c0_282 = arith.constant 0 : index
    %429 = vector.load %arg10[%c0_280, %c7_281, %c0_282] : memref<2x8x32xf32, #tpu.memory_space<vmem>>, vector<2x1x32xf32>
    %430 = vector.shape_cast %429 : vector<2x1x32xf32> to vector<2x32xf32>
    %431 = vector.shape_cast %428 : vector<2x32xf32> to vector<2x1x32xf32>
    tpu.vector_store %arg10[%c0_280, %c7_281, %c0_282], %431 {strides = array<i32>} : memref<2x8x32xf32, #tpu.memory_space<vmem>>, vector<2x1x32xf32>,
    %c0_283 = arith.constant 0 : index
    %c0_284 = arith.constant 0 : index
    %432 = vector.load %arg12[%c0_283, %c0_284] : memref<2x64xf32, #tpu.memory_space<vmem>>, vector<2x32xf32>
    tpu.vector_store %arg12[%c0_283, %c0_284], %428 {strides = array<i32>} : memref<2x64xf32, #tpu.memory_space<vmem>>, vector<2x32xf32>,
    %c0_285 = arith.constant 0 : index
    %c32_286 = arith.constant 32 : index
    %433 = vector.load %arg12[%c0_285, %c32_286] : memref<2x64xf32, #tpu.memory_space<vmem>>, vector<2x32xf32>
    tpu.vector_store %arg12[%c0_285, %c32_286], %400 {strides = array<i32>} : memref<2x64xf32, #tpu.memory_space<vmem>>, vector<2x32xf32>,
    %c0_287 = arith.constant 0 : index
    %c0_288 = arith.constant 0 : index
    %434 = vector.load %arg12[%c0_287, %c0_288] : memref<2x64xf32, #tpu.memory_space<vmem>>, vector<2x64xf32>
    %cst_289 = arith.constant dense<0.000000e+00> : vector<2x128xf32>
    %435 = tpu.matmul %434, %2, %cst_289 {dimension_numbers = #tpu.dot_dimension_numbers<[1], [0], [0], [1], [0, 0, 1, 1], [], []>} : vector<2x64xf32>, vector<64x128xf32>, vector<2x128xf32> -> vector<2x128xf32>
    %436 = arith.addf %435, %8 : vector<2x128xf32>
    %437 = vector.extract_strided_slice %436 {offsets = [0, 0], sizes = [2, 32], strides = [1, 1]} : vector<2x128xf32> to vector<2x32xf32>
    %438 = arith.negf %437 : vector<2x32xf32>
    %439 = math.exp %438 : vector<2x32xf32>
    %cst_290 = arith.constant 1.000000e+00 : f32
    %440 = vector.broadcast %cst_290 : f32 to vector<2x32xf32>
    %441 = arith.addf %440, %439 : vector<2x32xf32>
    %442 = arith.divf %440, %441 : vector<2x32xf32>
    %443 = vector.extract_strided_slice %436 {offsets = [0, 32], sizes = [2, 32], strides = [1, 1]} : vector<2x128xf32> to vector<2x32xf32>
    %444 = arith.negf %443 : vector<2x32xf32>
    %445 = math.exp %444 : vector<2x32xf32>
    %cst_291 = arith.constant 1.000000e+00 : f32
    %446 = vector.broadcast %cst_291 : f32 to vector<2x32xf32>
    %447 = arith.addf %446, %445 : vector<2x32xf32>
    %448 = arith.divf %446, %447 : vector<2x32xf32>
    %449 = vector.extract_strided_slice %436 {offsets = [0, 64], sizes = [2, 32], strides = [1, 1]} : vector<2x128xf32> to vector<2x32xf32>
    %450 = vector.extract_strided_slice %436 {offsets = [0, 96], sizes = [2, 32], strides = [1, 1]} : vector<2x128xf32> to vector<2x32xf32>
    %451 = arith.mulf %442, %450 : vector<2x32xf32>
    %452 = arith.addf %449, %451 : vector<2x32xf32>
    %453 = math.tanh %452 : vector<2x32xf32>
    %cst_292 = arith.constant 1.000000e+00 : f32
    %454 = vector.broadcast %cst_292 : f32 to vector<2x32xf32>
    %455 = arith.subf %454, %448 : vector<2x32xf32>
    %456 = arith.mulf %455, %453 : vector<2x32xf32>
    %457 = arith.mulf %448, %400 : vector<2x32xf32>
    %458 = arith.addf %456, %457 : vector<2x32xf32>
    %c0_293 = arith.constant 0 : index
    %c7_294 = arith.constant 7 : index
    %c0_295 = arith.constant 0 : index
    %459 = vector.load %arg11[%c0_293, %c7_294, %c0_295] : memref<2x8x32xf32, #tpu.memory_space<vmem>>, vector<2x1x32xf32>
    %460 = vector.shape_cast %459 : vector<2x1x32xf32> to vector<2x32xf32>
    %461 = vector.shape_cast %458 : vector<2x32xf32> to vector<2x1x32xf32>
    tpu.vector_store %arg11[%c0_293, %c7_294, %c0_295], %461 {strides = array<i32>} : memref<2x8x32xf32, #tpu.memory_space<vmem>>, vector<2x1x32xf32>,
    %c0_296 = arith.constant 0 : index
    %c7_297 = arith.constant 7 : index
    %c0_298 = arith.constant 0 : index
    %462 = vector.load %arg2[%c0_296, %c7_297, %c0_298] : memref<2x8x32xf32, #tpu.memory_space<vmem>>, vector<2x1x32xf32>
    %463 = vector.shape_cast %462 : vector<2x1x32xf32> to vector<2x32xf32>
    %c0_299 = arith.constant 0 : index
    %c7_300 = arith.constant 7 : index
    %c0_301 = arith.constant 0 : index
    %464 = vector.load %arg3[%c0_299, %c7_300, %c0_301] : memref<2x8x1xf32, #tpu.memory_space<vmem>>, vector<2x1x1xf32>
    %465 = vector.shape_cast %464 : vector<2x1x1xf32> to vector<2x1xf32>
    %466 = vector.broadcast %465 : vector<2x1xf32> to vector<2x32xf32>
    %467 = arith.mulf %466, %428 : vector<2x32xf32>
    %468 = arith.subf %463, %467 : vector<2x32xf32>
    %cst_302 = arith.constant 0.000000e+00 : f32
    %cst_303 = arith.constant 1.000000e+00 : f32
    %469 = vector.broadcast %cst_302 : f32 to vector<2x32xf32>
    %470 = arith.maximumf %469, %468 : vector<2x32xf32>
    %471 = vector.broadcast %cst_303 : f32 to vector<2x32xf32>
    %472 = arith.minimumf %471, %470 : vector<2x32xf32>
    %c0_304 = arith.constant 0 : index
    %c7_305 = arith.constant 7 : index
    %c0_306 = arith.constant 0 : index
    %473 = vector.load %arg9[%c0_304, %c7_305, %c0_306] : memref<2x8x32xf32, #tpu.memory_space<vmem>>, vector<2x1x32xf32>
    %474 = vector.shape_cast %473 : vector<2x1x32xf32> to vector<2x32xf32>
    %475 = vector.shape_cast %472 : vector<2x32xf32> to vector<2x1x32xf32>
    tpu.vector_store %arg9[%c0_304, %c7_305, %c0_306], %475 {strides = array<i32>} : memref<2x8x32xf32, #tpu.memory_space<vmem>>, vector<2x1x32xf32>,
    return
  }
  func.func @transform_0(%arg0: i32) -> (i32, i32, i32) {
    %c0_i32 = arith.constant 0 : i32
    %c0_i32_0 = arith.constant 0 : i32
    %c0_i32_1 = arith.constant 0 : i32
    return %arg0, %c0_i32, %c0_i32_0 : i32, i32, i32
  }
  func.func @transform_1(%arg0: i32) -> (i32, i32, i32) {
    %c0_i32 = arith.constant 0 : i32
    %c0_i32_0 = arith.constant 0 : i32
    %c0_i32_1 = arith.constant 0 : i32
    return %arg0, %c0_i32, %c0_i32_0 : i32, i32, i32
  }
  func.func @transform_2(%arg0: i32) -> (i32, i32, i32) {
    %c0_i32 = arith.constant 0 : i32
    %c0_i32_0 = arith.constant 0 : i32
    %c0_i32_1 = arith.constant 0 : i32
    return %arg0, %c0_i32, %c0_i32_0 : i32, i32, i32
  }
  func.func @transform_3(%arg0: i32) -> (i32, i32) {
    %c0_i32 = arith.constant 0 : i32
    %c0_i32_0 = arith.constant 0 : i32
    %c0_i32_1 = arith.constant 0 : i32
    return %c0_i32, %c0_i32_0 : i32, i32
  }
  func.func @transform_4(%arg0: i32) -> (i32, i32) {
    %c0_i32 = arith.constant 0 : i32
    %c0_i32_0 = arith.constant 0 : i32
    %c0_i32_1 = arith.constant 0 : i32
    return %c0_i32, %c0_i32_0 : i32, i32
  }
  func.func @transform_5(%arg0: i32) -> (i32, i32) {
    %c0_i32 = arith.constant 0 : i32
    %c0_i32_0 = arith.constant 0 : i32
    %c0_i32_1 = arith.constant 0 : i32
    return %c0_i32, %c0_i32_0 : i32, i32
  }
  func.func @transform_6(%arg0: i32) -> (i32, i32) {
    %c0_i32 = arith.constant 0 : i32
    %c0_i32_0 = arith.constant 0 : i32
    %c0_i32_1 = arith.constant 0 : i32
    return %c0_i32, %c0_i32_0 : i32, i32
  }
  func.func @transform_7(%arg0: i32) -> (i32, i32) {
    %c0_i32 = arith.constant 0 : i32
    %c0_i32_0 = arith.constant 0 : i32
    %c0_i32_1 = arith.constant 0 : i32
    return %c0_i32, %c0_i32_0 : i32, i32
  }
  func.func @transform_8(%arg0: i32) -> (i32, i32, i32) {
    %c0_i32 = arith.constant 0 : i32
    %c0_i32_0 = arith.constant 0 : i32
    %c0_i32_1 = arith.constant 0 : i32
    return %arg0, %c0_i32, %c0_i32_0 : i32, i32, i32
  }
  func.func @transform_9(%arg0: i32) -> (i32, i32, i32) {
    %c0_i32 = arith.constant 0 : i32
    %c0_i32_0 = arith.constant 0 : i32
    %c0_i32_1 = arith.constant 0 : i32
    return %arg0, %c0_i32, %c0_i32_0 : i32, i32, i32
  }
  func.func @transform_10(%arg0: i32) -> (i32, i32, i32) {
    %c0_i32 = arith.constant 0 : i32
    %c0_i32_0 = arith.constant 0 : i32
    %c0_i32_1 = arith.constant 0 : i32
    return %arg0, %c0_i32, %c0_i32_0 : i32, i32, i32
  }
}

</mosaic_0001>

<llo_original>
// kernel: df_backbone_forward.1
$region0: #{df_backbone_forward.1}
  #allocation0 [shape = 'u32[]', space=smem, size = 0x4, offset = 0x4, fixed_abs, tag = 'smem constant byte address 0x4 - core index']
  #allocation1 [shape = 'u32[144,128]{1,0:T(1,128)}', space=vmem, size = 0x12000, scoped, tag = 'internal scratch']
  #allocation2 [shape = 'f32[2,64]{1,0:T(2,128)}', space=vmem, size = 0x400, scoped, tag = 'scratch operand']
  %s0 = inlined_call_operand.vmem [shape: f32[2,8,32], index: 0, kind: input, shape index: {}]
  %s1 = inlined_call_operand.vmem [shape: f32[2,8,32], index: 1, kind: input, shape index: {}]
  %s2 = inlined_call_operand.vmem [shape: f32[2,8,1], index: 2, kind: input, shape index: {}]
  %s3 = inlined_call_operand.vmem [shape: f32[32,32], index: 3, kind: input, shape index: {}]
  %s4 = inlined_call_operand.vmem [shape: f32[64,32], index: 4, kind: input, shape index: {}]
  %s5 = inlined_call_operand.vmem [shape: f32[1,32], index: 5, kind: input, shape index: {}]
  %s6 = inlined_call_operand.vmem [shape: f32[64,128], index: 6, kind: input, shape index: {}]
  %s7 = inlined_call_operand.vmem [shape: f32[1,128], index: 7, kind: input, shape index: {}]
  %s8 = inlined_call_operand.hbm [shape: f32[2,8,32], index: 8, kind: output, shape index: {0}]
  %s9 = inlined_call_operand.hbm [shape: f32[2,8,32], index: 9, kind: output, shape index: {1}]
  %s10 = inlined_call_operand.hbm [shape: f32[2,8,32], index: 10, kind: output, shape index: {2}]
  %11 = xla_tuple %s8, %s9, %s10
  %s12 = sld [smem:[#allocation0]]
  $region58: #{df_backbone_forward.1} parent=0
    _
  %s14 = ssub.s32 1, %s12
  %s15 = scalar_select 0, %s14, %s12
  $region1: #{df_backbone_forward.1} parent=0
    #allocation3 [shape = 'u8[8192]{0}', space=vmem, size = 0x2000, scoped, tag = 'output window, operand 0, single buffered']
    #allocation4 [shape = 's32[1]{0}', space=sflag, size = 0x4, scoped, tag = 'scoped memory for df_backbone_forward.1']
    #allocation5 [shape = 'u8[8192]{0}', space=vmem, size = 0x2000, scoped, tag = 'output window, operand 1, single buffered']
    #allocation6 [shape = 's32[1]{0}', space=sflag, size = 0x4, scoped, tag = 'scoped memory for df_backbone_forward.1']
    #allocation7 [shape = 'u8[8192]{0}', space=vmem, size = 0x2000, scoped, tag = 'output window, operand 2, single buffered']
    %16 = vsyncpa [#allocation4], 0
    %17 = vsyncpa [#allocation6], 0
    // Predicated region
    $region2: #{df_backbone_forward.1} parent=1 // pred_check
      _
    $region3: #{df_backbone_forward.1} parent=1 // pred_check_branch
      %19 = sbr.rel (0) target = $region5
    $region4: #{df_backbone_forward.1} parent=1 // pred_region
      _
    $region5: #{df_backbone_forward.1} parent=1 // pred_fallthru
      _
    // Predicated region
    $region6: #{df_backbone_forward.1} parent=1 // pred_check
      _
    $region7: #{df_backbone_forward.1} parent=1 // pred_check_branch
      %21 = sbr.rel (0) target = $region9
    $region8: #{df_backbone_forward.1} parent=1 // pred_region
      _
    $region9: #{df_backbone_forward.1} parent=1 // pred_fallthru
      _
    // Predicated region
    $region10: #{df_backbone_forward.1} parent=1 // pred_check
      _
    $region11: #{df_backbone_forward.1} parent=1 // pred_check_branch
      %23 = sbr.rel (0) target = $region13
    $region12: #{df_backbone_forward.1} parent=1 // pred_region
      _
    $region13: #{df_backbone_forward.1} parent=1 // pred_fallthru
      _
    // Predicated region
    $region14: #{df_backbone_forward.1} parent=1 // pred_check
      _
    $region15: #{df_backbone_forward.1} parent=1 // pred_check_branch
      %25 = sbr.rel (0) target = $region17
    $region16: #{df_backbone_forward.1} parent=1 // pred_region
      _
    $region17: #{df_backbone_forward.1} parent=1 // pred_fallthru
      _
    // Predicated region
    $region18: #{df_backbone_forward.1} parent=1 // pred_check
      _
    $region19: #{df_backbone_forward.1} parent=1 // pred_check_branch
      %27 = sbr.rel (0) target = $region21
    $region20: #{df_backbone_forward.1} parent=1 // pred_region
      _
    $region21: #{df_backbone_forward.1} parent=1 // pred_fallthru
      _
    // Predicated region
    $region22: #{df_backbone_forward.1} parent=1 // pred_check
      _
    $region23: #{df_backbone_forward.1} parent=1 // pred_check_branch
      %29 = sbr.rel (0) target = $region25
    $region24: #{df_backbone_forward.1} parent=1 // pred_region
      _
    $region25: #{df_backbone_forward.1} parent=1 // pred_fallthru
      _
    // Predicated region
    $region26: #{df_backbone_forward.1} parent=1 // pred_check
      _
    $region27: #{df_backbone_forward.1} parent=1 // pred_check_branch
      %31 = sbr.rel (0) target = $region29
    $region28: #{df_backbone_forward.1} parent=1 // pred_region
      _
    $region29: #{df_backbone_forward.1} parent=1 // pred_fallthru
      _
    // Predicated region
    $region30: #{df_backbone_forward.1} parent=1 // pred_check
      _
    $region31: #{df_backbone_forward.1} parent=1 // pred_check_branch
      %33 = sbr.rel (0) target = $region33
    $region32: #{df_backbone_forward.1} parent=1 // pred_region
      _
    $region33: #{df_backbone_forward.1} parent=1 // pred_fallthru
      _
    %v34 = vld [vmem:[%s3] sm:$0xff]
    %v35 = vld [vmem:[%s3 + $0x8] sm:$0xff]
    %v36 = vld [vmem:[%s3 + $0x10] sm:$0xff]
    %v37 = vld [vmem:[%s3 + $0x18] sm:$0xff]
    %v38 = vld [vmem:[%s4] sm:$0xff]
    %v39 = vld [vmem:[%s4 + $0x8] sm:$0xff]
    %v40 = vld [vmem:[%s4 + $0x10] sm:$0xff]
    %v41 = vld [vmem:[%s4 + $0x18] sm:$0xff]
    %v42 = vld [vmem:[%s4 + $0x20] sm:$0xff]
    %v43 = vld [vmem:[%s4 + $0x28] sm:$0xff]
    %v44 = vld [vmem:[%s4 + $0x30] sm:$0xff]
    %v45 = vld [vmem:[%s4 + $0x38] sm:$0xff]
    %v46 = vld [vmem:[%s6] sm:$0xff]
    %v47 = vld [vmem:[%s6 + $0x8] sm:$0xff]
    %v48 = vld [vmem:[%s6 + $0x10] sm:$0xff]
    %v49 = vld [vmem:[%s6 + $0x18] sm:$0xff]
    %v50 = vld [vmem:[%s6 + $0x20] sm:$0xff]
    %v51 = vld [vmem:[%s6 + $0x28] sm:$0xff]
    %v52 = vld [vmem:[%s6 + $0x30] sm:$0xff]
    %v53 = vld [vmem:[%s6 + $0x38] sm:$0xff]
    %v54 = vld [vmem:[%s5] sm:$0x1]
    %v56 = vlaneseq
    %v57 = vshrl.u32 %v56, 7
    %v58 = vsub.s32 0, %v57
    %v59 = vrot.slane %v54, %v58
    %v61 = vld [vmem:[%s7] sm:$0x1]
    %v63 = vlaneseq
    %v64 = vshrl.u32 %v63, 7
    %v65 = vsub.s32 0, %v64
    %v66 = vrot.slane %v61, %v65
    %v68 = vld [vmem:[%s0] sm:$0x1]
    %v69 = vld [vmem:[%s0 + $0x8] sm:$0x1]
    %vm70 = vcmask 261120
    %v72 = vsel %vm70, 0.0, 0
    %74 = vmatprep.subr.mxu0 0.0
    %75 = vmatpush1.msra.mxu0 %v34
    %76 = vmatprep.subr.mxu0 0.0
    %77 = vmatpush1.msra.mxu0 %v35
    %78 = vmatprep.subr.mxu0 0.0
    %79 = vmatpush1.msra.mxu0 %v36
    %80 = vmatprep.subr.mxu0 0.0
    %81 = vmatpush1.msra.mxu0 %v37
    %82 = vmatprep.subr.mxu0 0.0
    %83 = vmatpush1.msra.mxu0 0.0
    %84 = vmatprep.subr.mxu0 0.0
    %85 = vmatpush1.msra.mxu0 0.0
    %86 = vmatprep.subr.mxu0 0.0
    %87 = vmatpush1.msra.mxu0 0.0
    %88 = vmatprep.subr.mxu0 0.0
    %89 = vmatpush1.msra.mxu0 0.0
    %90 = vmatprep.subr.mxu0 0.0
    %91 = vmatpush1.msra.mxu0 0.0
    %92 = vmatprep.subr.mxu0 0.0
    %93 = vmatpush1.msra.mxu0 0.0
    %94 = vmatprep.subr.mxu0 0.0
    %95 = vmatpush1.msra.mxu0 0.0
    %96 = vmatprep.subr.mxu0 0.0
    %97 = vmatpush1.msra.mxu0 0.0
    %98 = vmatprep.subr.mxu0 0.0
    %99 = vmatpush1.msra.mxu0 0.0
    %100 = vmatprep.subr.mxu0 0.0
    %101 = vmatpush1.msra.mxu0 0.0
    %102 = vmatprep.subr.mxu0 0.0
    %103 = vmatpush1.msra.mxu0 0.0
    %104 = vmatprep.subr.mxu0 0.0
    %105 = vmatpush1.msra.mxu0 0.0
    %106 = vmatprep.subr.mxu0 0.0
    %107 = vmatpush1.msra.mxu0 0.0
    %108 = vmatprep.subr.mxu0 0.0
    %109 = vmatpush1.msra.mxu0 0.0
    %110 = vmatprep.subr.mxu0 0.0
    %111 = vmatpush1.msra.mxu0 0.0
    %112 = vmatprep.subr.mxu0 0.0
    %113 = vmatpush1.msra.mxu0 0.0
    %114 = vmatprep.subr.mxu0 0.0
    %115 = vmatpush1.msra.mxu0 0.0
    %116 = vmatprep.subr.mxu0 0.0
    %117 = vmatpush1.msra.mxu0 0.0
    %118 = vmatprep.subr.mxu0 0.0
    %119 = vmatpush1.msra.mxu0 0.0
    %120 = vmatprep.subr.mxu0 0.0
    %121 = vmatpush1.msra.mxu0 0.0
    %122 = vmatprep.subr.mxu0 0.0
    %123 = vmatpush1.msra.mxu0 0.0
    %124 = vmatprep.subr.mxu0 0.0
    %125 = vmatpush1.msra.mxu0 0.0
    %126 = vmatprep.subr.mxu0 0.0
    %127 = vmatpush1.msra.mxu0 0.0
    %128 = vmatprep.subr.mxu0 0.0
    %129 = vmatpush1.msra.mxu0 0.0
    %130 = vmatprep.subr.mxu0 0.0
    %131 = vmatpush1.msra.mxu0 0.0
    %132 = vmatprep.subr.mxu0 0.0
    %133 = vmatpush1.msra.mxu0 0.0
    %134 = vmatprep.subr.mxu0 0.0
    %135 = vmatpush1.msra.mxu0 0.0
    %136 = vmatprep.subr.mxu0 0.0
    %137 = vmatpush1.msra.mxu0 0.0
    %138 = vmatprep.mubr.f32.mxu0 0.0
    %139 = vmatmul.mubr.f32.gmra.mrb[0].mxu0 %v72
    %v140 = vpop.f32.mrb[0].mxu0
    %v141 = vadd.f32 0.0, %v140
    %v142 = vpop.f32.mrb[0].mxu0
    %143 = vdwg.mxu0
    %v145 = vrot.slane %v141, 1
    %v148 = vadd.f32 %v68, %v141
    %v149 = vadd.f32 %v69, %v145
    %v150 = vtanh.pop %v148
    %v151 = vtanh.pop %v149
    %v154 = vrot.slane %v151, 7
    %vm155 = vcmask 1041409
    %v156 = vsel %vm155, %v154, %v150
    %vm158 = vcmask 254976
    %159 = vst.msk [vmem:[#allocation2] sm:$0x3] %vm158, %v156
    %vm160 = vcmask 517376
    %161 = vst.msk [vmem:[#allocation2] sm:$0x3] %vm160, 0.0
    %v162 = vld [vmem:[#allocation2] sm:$0x3]
    %vm163 = vcmask 523264
    %v165 = vsel %vm163, %v162, 0
    %167 = vmatprep.subr.mxu0 0.0
    %168 = vmatpush1.msra.mxu0 %v38
    %169 = vmatprep.subr.mxu0 0.0
    %170 = vmatpush1.msra.mxu0 %v39
    %171 = vmatprep.subr.mxu0 0.0
    %172 = vmatpush1.msra.mxu0 %v40
    %173 = vmatprep.subr.mxu0 0.0
    %174 = vmatpush1.msra.mxu0 %v41
    %175 = vmatprep.subr.mxu0 0.0
    %176 = vmatpush1.msra.mxu0 %v42
    %177 = vmatprep.subr.mxu0 0.0
    %178 = vmatpush1.msra.mxu0 %v43
    %179 = vmatprep.subr.mxu0 0.0
    %180 = vmatpush1.msra.mxu0 %v44
    %181 = vmatprep.subr.mxu0 0.0
    %182 = vmatpush1.msra.mxu0 %v45
    %183 = vmatprep.subr.mxu0 0.0
    %184 = vmatpush1.msra.mxu0 0.0
    %185 = vmatprep.subr.mxu0 0.0
    %186 = vmatpush1.msra.mxu0 0.0
    %187 = vmatprep.subr.mxu0 0.0
    %188 = vmatpush1.msra.mxu0 0.0
    %189 = vmatprep.subr.mxu0 0.0
    %190 = vmatpush1.msra.mxu0 0.0
    %191 = vmatprep.subr.mxu0 0.0
    %192 = vmatpush1.msra.mxu0 0.0
    %193 = vmatprep.subr.mxu0 0.0
    %194 = vmatpush1.msra.mxu0 0.0
    %195 = vmatprep.subr.mxu0 0.0
    %196 = vmatpush1.msra.mxu0 0.0
    %197 = vmatprep.subr.mxu0 0.0
    %198 = vmatpush1.msra.mxu0 0.0
    %199 = vmatprep.subr.mxu0 0.0
    %200 = vmatpush1.msra.mxu0 0.0
    %201 = vmatprep.subr.mxu0 0.0
    %202 = vmatpush1.msra.mxu0 0.0
    %203 = vmatprep.subr.mxu0 0.0
    %204 = vmatpush1.msra.mxu0 0.0
    %205 = vmatprep.subr.mxu0 0.0
    %206 = vmatpush1.msra.mxu0 0.0
    %207 = vmatprep.subr.mxu0 0.0
    %208 = vmatpush1.msra.mxu0 0.0
    %209 = vmatprep.subr.mxu0 0.0
    %210 = vmatpush1.msra.mxu0 0.0
    %211 = vmatprep.subr.mxu0 0.0
    %212 = vmatpush1.msra.mxu0 0.0
    %213 = vmatprep.subr.mxu0 0.0
    %214 = vmatpush1.msra.mxu0 0.0
    %215 = vmatprep.subr.mxu0 0.0
    %216 = vmatpush1.msra.mxu0 0.0
    %217 = vmatprep.subr.mxu0 0.0
    %218 = vmatpush1.msra.mxu0 0.0
    %219 = vmatprep.subr.mxu0 0.0
    %220 = vmatpush1.msra.mxu0 0.0
    %221 = vmatprep.subr.mxu0 0.0
    %222 = vmatpush1.msra.mxu0 0.0
    %223 = vmatprep.subr.mxu0 0.0
    %224 = vmatpush1.msra.mxu0 0.0
    %225 = vmatprep.subr.mxu0 0.0
    %226 = vmatpush1.msra.mxu0 0.0
    %227 = vmatprep.subr.mxu0 0.0
    %228 = vmatpush1.msra.mxu0 0.0
    %229 = vmatprep.subr.mxu0 0.0
    %230 = vmatpush1.msra.mxu0 0.0
    %231 = vmatprep.mubr.f32.mxu0 0.0
    %232 = vmatmul.mubr.f32.gmra.mrb[0].mxu0 %v165
    %v233 = vpop.f32.mrb[0].mxu0
    %v234 = vadd.f32 %v59, %v233
    %v235 = vpop.f32.mrb[0].mxu0
    %236 = vdwg.mxu0
    %v237 = vtanh.pop %v234
    %v240 = vunpack.c.l.s4 1966171168
    %v241 = vunpack.c.0.s8 %v240
    %v242 = vlaneseq
    %v243 = vshrl.u32 %v242, 7
    %v244 = vsub.s32 %v241, %v243
    %v245 = vrot.slane %v237, %v244
    %v246 = vcombine.high %v245, %v245
    %v248 = vunpack.c.l.s4 1966171168
    %v249 = vunpack.c.0.s8 %v248
    %v250 = vlaneseq
    %v251 = vshrl.u32 %v250, 7
    %v252 = vsub.s32 %v249, %v251
    %v253 = vrot.slane %v245, %v252
    %v255 = vunpack.c.l.s4 1966171168
    %v256 = vunpack.c.0.s8 %v255
    %v257 = vlaneseq
    %v258 = vshrl.u32 %v257, 7
    %v259 = vsub.s32 %v256, %v258
    %v260 = vrot.slane %v246, %v259
    %vm263 = vcmask 253952
    %264 = vst.msk [vmem:[#allocation5] sm:$0x1] %vm263, %v253
    %265 = vst.msk [vmem:[#allocation5 + $0x8] sm:$0x1] %vm263, %v260
    %266 = vst.msk [vmem:[#allocation2] sm:$0x3] %vm158, %v237
    %267 = vst.msk [vmem:[#allocation2] sm:$0x3] %vm160, 0.0
    %v268 = vld [vmem:[#allocation2] sm:$0x3]
    %v270 = vsel %vm163, %v268, 0
    %272 = vmatprep.subr.mxu0 0.0
    %273 = vmatpush1.msra.mxu0 %v46
    %274 = vmatprep.subr.mxu0 0.0
    %275 = vmatpush1.msra.mxu0 %v47
    %276 = vmatprep.subr.mxu0 0.0
    %277 = vmatpush1.msra.mxu0 %v48
    %278 = vmatprep.subr.mxu0 0.0
    %279 = vmatpush1.msra.mxu0 %v49
    %280 = vmatprep.subr.mxu0 0.0
    %281 = vmatpush1.msra.mxu0 %v50
    %282 = vmatprep.subr.mxu0 0.0
    %283 = vmatpush1.msra.mxu0 %v51
    %284 = vmatprep.subr.mxu0 0.0
    %285 = vmatpush1.msra.mxu0 %v52
    %286 = vmatprep.subr.mxu0 0.0
    %287 = vmatpush1.msra.mxu0 %v53
    %288 = vmatprep.subr.mxu0 0.0
    %289 = vmatpush1.msra.mxu0 0.0
    %290 = vmatprep.subr.mxu0 0.0
    %291 = vmatpush1.msra.mxu0 0.0
    %292 = vmatprep.subr.mxu0 0.0
    %293 = vmatpush1.msra.mxu0 0.0
    %294 = vmatprep.subr.mxu0 0.0
    %295 = vmatpush1.msra.mxu0 0.0
    %296 = vmatprep.subr.mxu0 0.0
    %297 = vmatpush1.msra.mxu0 0.0
    %298 = vmatprep.subr.mxu0 0.0
    %299 = vmatpush1.msra.mxu0 0.0
    %300 = vmatprep.subr.mxu0 0.0
    %301 = vmatpush1.msra.mxu0 0.0
    %302 = vmatprep.subr.mxu0 0.0
    %303 = vmatpush1.msra.mxu0 0.0
    %304 = vmatprep.subr.mxu0 0.0
    %305 = vmatpush1.msra.mxu0 0.0
    %306 = vmatprep.subr.mxu0 0.0
    %307 = vmatpush1.msra.mxu0 0.0
    %308 = vmatprep.subr.mxu0 0.0
    %309 = vmatpush1.msra.mxu0 0.0
    %310 = vmatprep.subr.mxu0 0.0
    %311 = vmatpush1.msra.mxu0 0.0
    %312 = vmatprep.subr.mxu0 0.0
    %313 = vmatpush1.msra.mxu0 0.0
    %314 = vmatprep.subr.mxu0 0.0
    %315 = vmatpush1.msra.mxu0 0.0
    %316 = vmatprep.subr.mxu0 0.0
    %317 = vmatpush1.msra.mxu0 0.0
    %318 = vmatprep.subr.mxu0 0.0
    %319 = vmatpush1.msra.mxu0 0.0
    %320 = vmatprep.subr.mxu0 0.0
    %321 = vmatpush1.msra.mxu0 0.0
    %322 = vmatprep.subr.mxu0 0.0
    %323 = vmatpush1.msra.mxu0 0.0
    %324 = vmatprep.subr.mxu0 0.0
    %325 = vmatpush1.msra.mxu0 0.0
    %326 = vmatprep.subr.mxu0 0.0
    %327 = vmatpush1.msra.mxu0 0.0
    %328 = vmatprep.subr.mxu0 0.0
    %329 = vmatpush1.msra.mxu0 0.0
    %330 = vmatprep.subr.mxu0 0.0
    %331 = vmatpush1.msra.mxu0 0.0
    %332 = vmatprep.subr.mxu0 0.0
    %333 = vmatpush1.msra.mxu0 0.0
    %334 = vmatprep.subr.mxu0 0.0
    %335 = vmatpush1.msra.mxu0 0.0
    %336 = vmatprep.mubr.f32.mxu0 0.0
    %337 = vmatmul.mubr.f32.gmra.mrb[0].mxu0 %v270
    %v338 = vpop.f32.mrb[0].mxu0
    %v339 = vadd.f32 %v66, %v338
    %v340 = vpop.f32.mrb[0].mxu0
    %341 = vdwg.mxu0
    %v342 = vxor.u32 %v339, 2147483648
    %v343 = vmul.f32 %v342, 1.442695
    %v344 = vpow.pop %v343
    %v345 = vadd.f32 %v344, 1.0
    %v346 = vrcp.pop %v345
    %v347 = vmul.f32 1.0, %v346
    %349 = vrot.lane.b32.xlu0 %v339, 32
    %v350 = vpop.permute.xlu0 %349
    %v352 = vmul.f32 %v347, %v350
    %354 = vrot.lane.b32.xlu0 %v352, 64
    %v355 = vpop.permute.xlu0 %354
    %v357 = vadd.f32 %v339, %v355
    %v358 = vtanh.pop %v357
    %v359 = vsub.f32 1.0, %v347
    %361 = vrot.lane.b32.xlu0 %v358, 96
    %v362 = vpop.permute.xlu0 %361
    %v364 = vmul.f32 %v359, %v362
    %v365 = vmul.f32 %v347, 0.0
    %v366 = vadd.f32 %v364, %v365
    %v369 = vunpack.c.l.s4 1966171168
    %v370 = vunpack.c.0.s8 %v369
    %v371 = vlaneseq
    %v372 = vshrl.u32 %v371, 7
    %v373 = vsub.s32 %v370, %v372
    %v374 = vrot.slane %v366, %v373
    %v375 = vcombine.high %v374, %v374
    %v377 = vunpack.c.l.s4 1966171168
    %v378 = vunpack.c.0.s8 %v377
    %v379 = vlaneseq
    %v380 = vshrl.u32 %v379, 7
    %v381 = vsub.s32 %v378, %v380
    %v382 = vrot.slane %v374, %v381
    %v384 = vunpack.c.l.s4 1966171168
    %v385 = vunpack.c.0.s8 %v384
    %v386 = vlaneseq
    %v387 = vshrl.u32 %v386, 7
    %v388 = vsub.s32 %v385, %v387
    %v389 = vrot.slane %v375, %v388
    %v390 = vlaneseq
    %v391 = vshrl.u32 %v390, 7
    %v392 = vsub.s32 0, %v391
    %v393 = vrot.slane %v382, %v392
    %v394 = vlaneseq
    %v395 = vshrl.u32 %v394, 7
    %v396 = vsub.s32 0, %v395
    %v397 = vrot.slane %v389, %v396
    %398 = vrot.lane.b32.xlu0 %v393, 96
    %v399 = vpop.permute.xlu0 %398
    %400 = vrot.lane.b32.xlu0 %v397, 96
    %v401 = vpop.permute.xlu0 %400
    %404 = vst.msk [vmem:[#allocation7] sm:$0x1] %vm263, %v399
    %405 = vst.msk [vmem:[#allocation7 + $0x8] sm:$0x1] %vm263, %v401
    %v406 = vld [vmem:[%s1] sm:$0x1]
    %v407 = vld [vmem:[%s1 + $0x8] sm:$0x1]
    %v408 = vld [vmem:[%s2] sm:$0x1]
    %v409 = vld [vmem:[%s2 + $0x8] sm:$0x1]
    %411 = vset.pattern.permute.xlu0 0
    %412 = vperm.xlu0 %411, %v408
    %v413 = vpop.permute.xlu0 %412
    %416 = vset.pattern.permute.xlu0 0
    %417 = vperm.xlu0 %416, %v409
    %v418 = vpop.permute.xlu0 %417
    %v420 = vrot.slane %v237, 1
    %v423 = vmul.f32 %v413, %v237
    %v424 = vmul.f32 %v418, %v420
    %v425 = vsub.f32 %v406, %v423
    %v426 = vsub.f32 %v407, %v424
    %v427 = vmax.f32 %v425, 0.0
    %v428 = vmax.f32 %v426, 0.0
    %v429 = vmin.f32 %v427, 1.0
    %v430 = vmin.f32 %v428, 1.0
    %431 = vst.msk [vmem:[#allocation3] sm:$0x1] %vm263, %v429
    %432 = vst.msk [vmem:[#allocation3 + $0x8] sm:$0x1] %vm263, %v430
    %v433 = vld [vmem:[%s0 + $0x1] sm:$0x1]
    %v434 = vld [vmem:[%s0 + $0x9] sm:$0x1]
    %v435 = vsel %vm70, %v156, 0
    %437 = vmatprep.subr.mxu0 0.0
    %438 = vmatpush1.msra.mxu0 %v34
    %439 = vmatprep.subr.mxu0 0.0
    %440 = vmatpush1.msra.mxu0 %v35
    %441 = vmatprep.subr.mxu0 0.0
    %442 = vmatpush1.msra.mxu0 %v36
    %443 = vmatprep.subr.mxu0 0.0
    %444 = vmatpush1.msra.mxu0 %v37
    %445 = vmatprep.subr.mxu0 0.0
    %446 = vmatpush1.msra.mxu0 0.0
    %447 = vmatprep.subr.mxu0 0.0
    %448 = vmatpush1.msra.mxu0 0.0
    %449 = vmatprep.subr.mxu0 0.0
    %450 = vmatpush1.msra.mxu0 0.0
    %451 = vmatprep.subr.mxu0 0.0
    %452 = vmatpush1.msra.mxu0 0.0
    %453 = vmatprep.subr.mxu0 0.0
    %454 = vmatpush1.msra.mxu0 0.0
    %455 = vmatprep.subr.mxu0 0.0
    %456 = vmatpush1.msra.mxu0 0.0
    %457 = vmatprep.subr.mxu0 0.0
    %458 = vmatpush1.msra.mxu0 0.0
    %459 = vmatprep.subr.mxu0 0.0
    %460 = vmatpush1.msra.mxu0 0.0
    %461 = vmatprep.subr.mxu0 0.0
    %462 = vmatpush1.msra.mxu0 0.0
    %463 = vmatprep.subr.mxu0 0.0
    %464 = vmatpush1.msra.mxu0 0.0
    %465 = vmatprep.subr.mxu0 0.0
    %466 = vmatpush1.msra.mxu0 0.0
    %467 = vmatprep.subr.mxu0 0.0
    %468 = vmatpush1.msra.mxu0 0.0
    %469 = vmatprep.subr.mxu0 0.0
    %470 = vmatpush1.msra.mxu0 0.0
    %471 = vmatprep.subr.mxu0 0.0
    %472 = vmatpush1.msra.mxu0 0.0
    %473 = vmatprep.subr.mxu0 0.0
    %474 = vmatpush1.msra.mxu0 0.0
    %475 = vmatprep.subr.mxu0 0.0
    %476 = vmatpush1.msra.mxu0 0.0
    %477 = vmatprep.subr.mxu0 0.0
    %478 = vmatpush1.msra.mxu0 0.0
    %479 = vmatprep.subr.mxu0 0.0
    %480 = vmatpush1.msra.mxu0 0.0
    %481 = vmatprep.subr.mxu0 0.0
    %482 = vmatpush1.msra.mxu0 0.0
    %483 = vmatprep.subr.mxu0 0.0
    %484 = vmatpush1.msra.mxu0 0.0
    %485 = vmatprep.subr.mxu0 0.0
    %486 = vmatpush1.msra.mxu0 0.0
    %487 = vmatprep.subr.mxu0 0.0
    %488 = vmatpush1.msra.mxu0 0.0
    %489 = vmatprep.subr.mxu0 0.0
    %490 = vmatpush1.msra.mxu0 0.0
    %491 = vmatprep.subr.mxu0 0.0
    %492 = vmatpush1.msra.mxu0 0.0
    %493 = vmatprep.subr.mxu0 0.0
    %494 = vmatpush1.msra.mxu0 0.0
    %495 = vmatprep.subr.mxu0 0.0
    %496 = vmatpush1.msra.mxu0 0.0
    %497 = vmatprep.subr.mxu0 0.0
    %498 = vmatpush1.msra.mxu0 0.0
    %499 = vmatprep.subr.mxu0 0.0
    %500 = vmatpush1.msra.mxu0 0.0
    %501 = vmatprep.mubr.f32.mxu0 0.0
    %502 = vmatmul.mubr.f32.gmra.mrb[0].mxu0 %v435
    %v503 = vpop.f32.mrb[0].mxu0
    %v504 = vadd.f32 0.0, %v503
    %v505 = vpop.f32.mrb[0].mxu0
    %506 = vdwg.mxu0
    %v508 = vrot.slane %v504, 1
    %v511 = vadd.f32 %v433, %v504
    %v512 = vadd.f32 %v434, %v508
    %v513 = vtanh.pop %v511
    %v514 = vtanh.pop %v512
    %v517 = vrot.slane %v514, 7
    %v518 = vsel %vm155, %v517, %v513
    %520 = vst.msk [vmem:[#allocation2] sm:$0x3] %vm158, %v518
    %521 = vrot.lane.b32.xlu0 %v237, 32
    %v522 = vpop.permute.xlu0 %521
    %524 = vst.msk [vmem:[#allocation2] sm:$0x3] %vm160, %v522
    %v525 = vld [vmem:[#allocation2] sm:$0x3]
    %v527 = vsel %vm163, %v525, 0
    %529 = vmatprep.subr.mxu0 0.0
    %530 = vmatpush1.msra.mxu0 %v38
    %531 = vmatprep.subr.mxu0 0.0
    %532 = vmatpush1.msra.mxu0 %v39
    %533 = vmatprep.subr.mxu0 0.0
    %534 = vmatpush1.msra.mxu0 %v40
    %535 = vmatprep.subr.mxu0 0.0
    %536 = vmatpush1.msra.mxu0 %v41
    %537 = vmatprep.subr.mxu0 0.0
    %538 = vmatpush1.msra.mxu0 %v42
    %539 = vmatprep.subr.mxu0 0.0
    %540 = vmatpush1.msra.mxu0 %v43
    %541 = vmatprep.subr.mxu0 0.0
    %542 = vmatpush1.msra.mxu0 %v44
    %543 = vmatprep.subr.mxu0 0.0
    %544 = vmatpush1.msra.mxu0 %v45
    %545 = vmatprep.subr.mxu0 0.0
    %546 = vmatpush1.msra.mxu0 0.0
    %547 = vmatprep.subr.mxu0 0.0
    %548 = vmatpush1.msra.mxu0 0.0
    %549 = vmatprep.subr.mxu0 0.0
    %550 = vmatpush1.msra.mxu0 0.0
    %551 = vmatprep.subr.mxu0 0.0
    %552 = vmatpush1.msra.mxu0 0.0
    %553 = vmatprep.subr.mxu0 0.0
    %554 = vmatpush1.msra.mxu0 0.0
    %555 = vmatprep.subr.mxu0 0.0
    %556 = vmatpush1.msra.mxu0 0.0
    %557 = vmatprep.subr.mxu0 0.0
    %558 = vmatpush1.msra.mxu0 0.0
    %559 = vmatprep.subr.mxu0 0.0
    %560 = vmatpush1.msra.mxu0 0.0
    %561 = vmatprep.subr.mxu0 0.0
    %562 = vmatpush1.msra.mxu0 0.0
    %563 = vmatprep.subr.mxu0 0.0
    %564 = vmatpush1.msra.mxu0 0.0
    %565 = vmatprep.subr.mxu0 0.0
    %566 = vmatpush1.msra.mxu0 0.0
    %567 = vmatprep.subr.mxu0 0.0
    %568 = vmatpush1.msra.mxu0 0.0
    %569 = vmatprep.subr.mxu0 0.0
    %570 = vmatpush1.msra.mxu0 0.0
    %571 = vmatprep.subr.mxu0 0.0
    %572 = vmatpush1.msra.mxu0 0.0
    %573 = vmatprep.subr.mxu0 0.0
    %574 = vmatpush1.msra.mxu0 0.0
    %575 = vmatprep.subr.mxu0 0.0
    %576 = vmatpush1.msra.mxu0 0.0
    %577 = vmatprep.subr.mxu0 0.0
    %578 = vmatpush1.msra.mxu0 0.0
    %579 = vmatprep.subr.mxu0 0.0
    %580 = vmatpush1.msra.mxu0 0.0
    %581 = vmatprep.subr.mxu0 0.0
    %582 = vmatpush1.msra.mxu0 0.0
    %583 = vmatprep.subr.mxu0 0.0
    %584 = vmatpush1.msra.mxu0 0.0
    %585 = vmatprep.subr.mxu0 0.0
    %586 = vmatpush1.msra.mxu0 0.0
    %587 = vmatprep.subr.mxu0 0.0
    %588 = vmatpush1.msra.mxu0 0.0
    %589 = vmatprep.subr.mxu0 0.0
    %590 = vmatpush1.msra.mxu0 0.0
    %591 = vmatprep.subr.mxu0 0.0
    %592 = vmatpush1.msra.mxu0 0.0
    %593 = vmatprep.mubr.f32.mxu0 0.0
    %594 = vmatmul.mubr.f32.gmra.mrb[0].mxu0 %v527
    %v595 = vpop.f32.mrb[0].mxu0
    %v596 = vadd.f32 %v59, %v595
    %v597 = vpop.f32.mrb[0].mxu0
    %598 = vdwg.mxu0
    %v599 = vtanh.pop %v596
    %v602 = vunpack.c.l.s4 1966171168
    %v603 = vunpack.c.0.s8 %v602
    %v604 = vlaneseq
    %v605 = vshrl.u32 %v604, 7
    %v606 = vsub.s32 %v603, %v605
    %v607 = vrot.slane %v599, %v606
    %v608 = vcombine.high %v607, %v607
    %v610 = vunpack.c.l.s4 1966171168
    %v611 = vunpack.c.0.s8 %v610
    %v612 = vlaneseq
    %v613 = vshrl.u32 %v612, 7
    %v614 = vsub.s32 %v611, %v613
    %v615 = vrot.slane %v607, %v614
    %v617 = vunpack.c.l.s4 1966171168
    %v618 = vunpack.c.0.s8 %v617
    %v619 = vlaneseq
    %v620 = vshrl.u32 %v619, 7
    %v621 = vsub.s32 %v618, %v620
    %v622 = vrot.slane %v608, %v621
    %625 = vst.msk [vmem:[#allocation5 + $0x1] sm:$0x1] %vm263, %v615
    %626 = vst.msk [vmem:[#allocation5 + $0x9] sm:$0x1] %vm263, %v622
    %627 = vst.msk [vmem:[#allocation2] sm:$0x3] %vm158, %v599
    %628 = vst.msk [vmem:[#allocation2] sm:$0x3] %vm160, %v366
    %v629 = vld [vmem:[#allocation2] sm:$0x3]
    %v631 = vsel %vm163, %v629, 0
    %633 = vmatprep.subr.mxu0 0.0
    %634 = vmatpush1.msra.mxu0 %v46
    %635 = vmatprep.subr.mxu0 0.0
    %636 = vmatpush1.msra.mxu0 %v47
    %637 = vmatprep.subr.mxu0 0.0
    %638 = vmatpush1.msra.mxu0 %v48
    %639 = vmatprep.subr.mxu0 0.0
    %640 = vmatpush1.msra.mxu0 %v49
    %641 = vmatprep.subr.mxu0 0.0
    %642 = vmatpush1.msra.mxu0 %v50
    %643 = vmatprep.subr.mxu0 0.0
    %644 = vmatpush1.msra.mxu0 %v51
    %645 = vmatprep.subr.mxu0 0.0
    %646 = vmatpush1.msra.mxu0 %v52
    %647 = vmatprep.subr.mxu0 0.0
    %648 = vmatpush1.msra.mxu0 %v53
    %649 = vmatprep.subr.mxu0 0.0
    %650 = vmatpush1.msra.mxu0 0.0
    %651 = vmatprep.subr.mxu0 0.0
    %652 = vmatpush1.msra.mxu0 0.0
    %653 = vmatprep.subr.mxu0 0.0
    %654 = vmatpush1.msra.mxu0 0.0
    %655 = vmatprep.subr.mxu0 0.0
    %656 = vmatpush1.msra.mxu0 0.0
    %657 = vmatprep.subr.mxu0 0.0
    %658 = vmatpush1.msra.mxu0 0.0
    %659 = vmatprep.subr.mxu0 0.0
    %660 = vmatpush1.msra.mxu0 0.0
    %661 = vmatprep.subr.mxu0 0.0
    %662 = vmatpush1.msra.mxu0 0.0
    %663 = vmatprep.subr.mxu0 0.0
    %664 = vmatpush1.msra.mxu0 0.0
    %665 = vmatprep.subr.mxu0 0.0
    %666 = vmatpush1.msra.mxu0 0.0
    %667 = vmatprep.subr.mxu0 0.0
    %668 = vmatpush1.msra.mxu0 0.0
    %669 = vmatprep.subr.mxu0 0.0
    %670 = vmatpush1.msra.mxu0 0.0
    %671 = vmatprep.subr.mxu0 0.0
    %672 = vmatpush1.msra.mxu0 0.0
    %673 = vmatprep.subr.mxu0 0.0
    %674 = vmatpush1.msra.mxu0 0.0
    %675 = vmatprep.subr.mxu0 0.0
    %676 = vmatpush1.msra.mxu0 0.0
    %677 = vmatprep.subr.mxu0 0.0
    %678 = vmatpush1.msra.mxu0 0.0
    %679 = vmatprep.subr.mxu0 0.0
    %680 = vmatpush1.msra.mxu0 0.0
    %681 = vmatprep.subr.mxu0 0.0
    %682 = vmatpush1.msra.mxu0 0.0
    %683 = vmatprep.subr.mxu0 0.0
    %684 = vmatpush1.msra.mxu0 0.0
    %685 = vmatprep.subr.mxu0 0.0
    %686 = vmatpush1.msra.mxu0 0.0
    %687 = vmatprep.subr.mxu0 0.0
    %688 = vmatpush1.msra.mxu0 0.0
    %689 = vmatprep.subr.mxu0 0.0
    %690 = vmatpush1.msra.mxu0 0.0
    %691 = vmatprep.subr.mxu0 0.0
    %692 = vmatpush1.msra.mxu0 0.0
    %693 = vmatprep.subr.mxu0 0.0
    %694 = vmatpush1.msra.mxu0 0.0
    %695 = vmatprep.subr.mxu0 0.0
    %696 = vmatpush1.msra.mxu0 0.0
    %697 = vmatprep.mubr.f32.mxu0 0.0
    %698 = vmatmul.mubr.f32.gmra.mrb[0].mxu0 %v631
    %v699 = vpop.f32.mrb[0].mxu0
    %v700 = vadd.f32 %v66, %v699
    %v701 = vpop.f32.mrb[0].mxu0
    %702 = vdwg.mxu0
    %v703 = vxor.u32 %v700, 2147483648
    %v704 = vmul.f32 %v703, 1.442695
    %v705 = vpow.pop %v704
    %v706 = vadd.f32 %v705, 1.0
    %v707 = vrcp.pop %v706
    %v708 = vmul.f32 1.0, %v707
    %710 = vrot.lane.b32.xlu0 %v700, 32
    %v711 = vpop.permute.xlu0 %710
    %v713 = vmul.f32 %v708, %v711
    %715 = vrot.lane.b32.xlu0 %v713, 64
    %v716 = vpop.permute.xlu0 %715
    %v718 = vadd.f32 %v700, %v716
    %v719 = vtanh.pop %v718
    %v720 = vsub.f32 1.0, %v708
    %722 = vrot.lane.b32.xlu0 %v719, 96
    %v723 = vpop.permute.xlu0 %722
    %v725 = vmul.f32 %v720, %v723
    %v726 = vmul.f32 %v708, %v366
    %v727 = vadd.f32 %v725, %v726
    %v730 = vunpack.c.l.s4 1966171168
    %v731 = vunpack.c.0.s8 %v730
    %v732 = vlaneseq
    %v733 = vshrl.u32 %v732, 7
    %v734 = vsub.s32 %v731, %v733
    %v735 = vrot.slane %v727, %v734
    %v736 = vcombine.high %v735, %v735
    %v738 = vunpack.c.l.s4 1966171168
    %v739 = vunpack.c.0.s8 %v738
    %v740 = vlaneseq
    %v741 = vshrl.u32 %v740, 7
    %v742 = vsub.s32 %v739, %v741
    %v743 = vrot.slane %v735, %v742
    %v745 = vunpack.c.l.s4 1966171168
    %v746 = vunpack.c.0.s8 %v745
    %v747 = vlaneseq
    %v748 = vshrl.u32 %v747, 7
    %v749 = vsub.s32 %v746, %v748
    %v750 = vrot.slane %v736, %v749
    %v751 = vlaneseq
    %v752 = vshrl.u32 %v751, 7
    %v753 = vsub.s32 0, %v752
    %v754 = vrot.slane %v743, %v753
    %v755 = vlaneseq
    %v756 = vshrl.u32 %v755, 7
    %v757 = vsub.s32 0, %v756
    %v758 = vrot.slane %v750, %v757
    %759 = vrot.lane.b32.xlu0 %v754, 96
    %v760 = vpop.permute.xlu0 %759
    %761 = vrot.lane.b32.xlu0 %v758, 96
    %v762 = vpop.permute.xlu0 %761
    %765 = vst.msk [vmem:[#allocation7 + $0x1] sm:$0x1] %vm263, %v760
    %766 = vst.msk [vmem:[#allocation7 + $0x9] sm:$0x1] %vm263, %v762
    %v767 = vld [vmem:[%s1 + $0x1] sm:$0x1]
    %v768 = vld [vmem:[%s1 + $0x9] sm:$0x1]
    %v769 = vld [vmem:[%s2 + $0x1] sm:$0x1]
    %v770 = vld [vmem:[%s2 + $0x9] sm:$0x1]
    %772 = vset.pattern.permute.xlu0 0
    %773 = vperm.xlu0 %772, %v769
    %v774 = vpop.permute.xlu0 %773
    %777 = vset.pattern.permute.xlu0 0
    %778 = vperm.xlu0 %777, %v770
    %v779 = vpop.permute.xlu0 %778
    %v781 = vrot.slane %v599, 1
    %v784 = vmul.f32 %v774, %v599
    %v785 = vmul.f32 %v779, %v781
    %v786 = vsub.f32 %v767, %v784
    %v787 = vsub.f32 %v768, %v785
    %v788 = vmax.f32 %v786, 0.0
    %v789 = vmax.f32 %v787, 0.0
    %v790 = vmin.f32 %v788, 1.0
    %v791 = vmin.f32 %v789, 1.0
    %792 = vst.msk [vmem:[#allocation3 + $0x1] sm:$0x1] %vm263, %v790
    %793 = vst.msk [vmem:[#allocation3 + $0x9] sm:$0x1] %vm263, %v791
    %v794 = vld [vmem:[%s0 + $0x2] sm:$0x1]
    %v795 = vld [vmem:[%s0 + $0xa] sm:$0x1]
    %v796 = vsel %vm70, %v518, 0
    %798 = vmatprep.subr.mxu0 0.0
    %799 = vmatpush1.msra.mxu0 %v34
    %800 = vmatprep.subr.mxu0 0.0
    %801 = vmatpush1.msra.mxu0 %v35
    %802 = vmatprep.subr.mxu0 0.0
    %803 = vmatpush1.msra.mxu0 %v36
    %804 = vmatprep.subr.mxu0 0.0
    %805 = vmatpush1.msra.mxu0 %v37
    %806 = vmatprep.subr.mxu0 0.0
    %807 = vmatpush1.msra.mxu0 0.0
    %808 = vmatprep.subr.mxu0 0.0
    %809 = vmatpush1.msra.mxu0 0.0
    %810 = vmatprep.subr.mxu0 0.0
    %811 = vmatpush1.msra.mxu0 0.0
    %812 = vmatprep.subr.mxu0 0.0
    %813 = vmatpush1.msra.mxu0 0.0
    %814 = vmatprep.subr.mxu0 0.0
    %815 = vmatpush1.msra.mxu0 0.0
    %816 = vmatprep.subr.mxu0 0.0
    %817 = vmatpush1.msra.mxu0 0.0
    %818 = vmatprep.subr.mxu0 0.0
    %819 = vmatpush1.msra.mxu0 0.0
    %820 = vmatprep.subr.mxu0 0.0
    %821 = vmatpush1.msra.mxu0 0.0
    %822 = vmatprep.subr.mxu0 0.0
    %823 = vmatpush1.msra.mxu0 0.0
    %824 = vmatprep.subr.mxu0 0.0
    %825 = vmatpush1.msra.mxu0 0.0
    %826 = vmatprep.subr.mxu0 0.0
    %827 = vmatpush1.msra.mxu0 0.0
    %828 = vmatprep.subr.mxu0 0.0
    %829 = vmatpush1.msra.mxu0 0.0
    %830 = vmatprep.subr.mxu0 0.0
    %831 = vmatpush1.msra.mxu0 0.0
    %832 = vmatprep.subr.mxu0 0.0
    %833 = vmatpush1.msra.mxu0 0.0
    %834 = vmatprep.subr.mxu0 0.0
    %835 = vmatpush1.msra.mxu0 0.0
    %836 = vmatprep.subr.mxu0 0.0
    %837 = vmatpush1.msra.mxu0 0.0
    %838 = vmatprep.subr.mxu0 0.0
    %839 = vmatpush1.msra.mxu0 0.0
    %840 = vmatprep.subr.mxu0 0.0
    %841 = vmatpush1.msra.mxu0 0.0
    %842 = vmatprep.subr.mxu0 0.0
    %843 = vmatpush1.msra.mxu0 0.0
    %844 = vmatprep.subr.mxu0 0.0
    %845 = vmatpush1.msra.mxu0 0.0
    %846 = vmatprep.subr.mxu0 0.0
    %847 = vmatpush1.msra.mxu0 0.0
    %848 = vmatprep.subr.mxu0 0.0
    %849 = vmatpush1.msra.mxu0 0.0
    %850 = vmatprep.subr.mxu0 0.0
    %851 = vmatpush1.msra.mxu0 0.0
    %852 = vmatprep.subr.mxu0 0.0
    %853 = vmatpush1.msra.mxu0 0.0
    %854 = vmatprep.subr.mxu0 0.0
    %855 = vmatpush1.msra.mxu0 0.0
    %856 = vmatprep.subr.mxu0 0.0
    %857 = vmatpush1.msra.mxu0 0.0
    %858 = vmatprep.subr.mxu0 0.0
    %859 = vmatpush1.msra.mxu0 0.0
    %860 = vmatprep.subr.mxu0 0.0
    %861 = vmatpush1.msra.mxu0 0.0
    %862 = vmatprep.mubr.f32.mxu0 0.0
    %863 = vmatmul.mubr.f32.gmra.mrb[0].mxu0 %v796
    %v864 = vpop.f32.mrb[0].mxu0
    %v865 = vadd.f32 0.0, %v864
    %v866 = vpop.f32.mrb[0].mxu0
    %867 = vdwg.mxu0
    %v869 = vrot.slane %v865, 1
    %v872 = vadd.f32 %v794, %v865
    %v873 = vadd.f32 %v795, %v869
    %v874 = vtanh.pop %v872
    %v875 = vtanh.pop %v873
    %v878 = vrot.slane %v875, 7
    %v879 = vsel %vm155, %v878, %v874
    %881 = vst.msk [vmem:[#allocation2] sm:$0x3] %vm158, %v879
    %882 = vrot.lane.b32.xlu0 %v599, 32
    %v883 = vpop.permute.xlu0 %882
    %885 = vst.msk [vmem:[#allocation2] sm:$0x3] %vm160, %v883
    %v886 = vld [vmem:[#allocation2] sm:$0x3]
    %v888 = vsel %vm163, %v886, 0
    %890 = vmatprep.subr.mxu0 0.0
    %891 = vmatpush1.msra.mxu0 %v38
    %892 = vmatprep.subr.mxu0 0.0
    %893 = vmatpush1.msra.mxu0 %v39
    %894 = vmatprep.subr.mxu0 0.0
    %895 = vmatpush1.msra.mxu0 %v40
    %896 = vmatprep.subr.mxu0 0.0
    %897 = vmatpush1.msra.mxu0 %v41
    %898 = vmatprep.subr.mxu0 0.0
    %899 = vmatpush1.msra.mxu0 %v42
    %900 = vmatprep.subr.mxu0 0.0
    %901 = vmatpush1.msra.mxu0 %v43
    %902 = vmatprep.subr.mxu0 0.0
    %903 = vmatpush1.msra.mxu0 %v44
    %904 = vmatprep.subr.mxu0 0.0
    %905 = vmatpush1.msra.mxu0 %v45
    %906 = vmatprep.subr.mxu0 0.0
    %907 = vmatpush1.msra.mxu0 0.0
    %908 = vmatprep.subr.mxu0 0.0
    %909 = vmatpush1.msra.mxu0 0.0
    %910 = vmatprep.subr.mxu0 0.0
    %911 = vmatpush1.msra.mxu0 0.0
    %912 = vmatprep.subr.mxu0 0.0
    %913 = vmatpush1.msra.mxu0 0.0
    %914 = vmatprep.subr.mxu0 0.0
    %915 = vmatpush1.msra.mxu0 0.0
    %916 = vmatprep.subr.mxu0 0.0
    %917 = vmatpush1.msra.mxu0 0.0
    %918 = vmatprep.subr.mxu0 0.0
    %919 = vmatpush1.msra.mxu0 0.0
    %920 = vmatprep.subr.mxu0 0.0
    %921 = vmatpush1.msra.mxu0 0.0
    %922 = vmatprep.subr.mxu0 0.0
    %923 = vmatpush1.msra.mxu0 0.0
    %924 = vmatprep.subr.mxu0 0.0
    %925 = vmatpush1.msra.mxu0 0.0
    %926 = vmatprep.subr.mxu0 0.0
    %927 = vmatpush1.msra.mxu0 0.0
    %928 = vmatprep.subr.mxu0 0.0
    %929 = vmatpush1.msra.mxu0 0.0
    %930 = vmatprep.subr.mxu0 0.0
    %931 = vmatpush1.msra.mxu0 0.0
    %932 = vmatprep.subr.mxu0 0.0
    %933 = vmatpush1.msra.mxu0 0.0
    %934 = vmatprep.subr.mxu0 0.0
    %935 = vmatpush1.msra.mxu0 0.0
    %936 = vmatprep.subr.mxu0 0.0
    %937 = vmatpush1.msra.mxu0 0.0
    %938 = vmatprep.subr.mxu0 0.0
    %939 = vmatpush1.msra.mxu0 0.0
    %940 = vmatprep.subr.mxu0 0.0
    %941 = vmatpush1.msra.mxu0 0.0
    %942 = vmatprep.subr.mxu0 0.0
    %943 = vmatpush1.msra.mxu0 0.0
    %944 = vmatprep.subr.mxu0 0.0
    %945 = vmatpush1.msra.mxu0 0.0
    %946 = vmatprep.subr.mxu0 0.0
    %947 = vmatpush1.msra.mxu0 0.0
    %948 = vmatprep.subr.mxu0 0.0
    %949 = vmatpush1.msra.mxu0 0.0
    %950 = vmatprep.subr.mxu0 0.0
    %951 = vmatpush1.msra.mxu0 0.0
    %952 = vmatprep.subr.mxu0 0.0
    %953 = vmatpush1.msra.mxu0 0.0
    %954 = vmatprep.mubr.f32.mxu0 0.0
    %955 = vmatmul.mubr.f32.gmra.mrb[0].mxu0 %v888
    %v956 = vpop.f32.mrb[0].mxu0
    %v957 = vadd.f32 %v59, %v956
    %v958 = vpop.f32.mrb[0].mxu0
    %959 = vdwg.mxu0
    %v960 = vtanh.pop %v957
    %v963 = vunpack.c.l.s4 1966171168
    %v964 = vunpack.c.0.s8 %v963
    %v965 = vlaneseq
    %v966 = vshrl.u32 %v965, 7
    %v967 = vsub.s32 %v964, %v966
    %v968 = vrot.slane %v960, %v967
    %v969 = vcombine.high %v968, %v968
    %v971 = vunpack.c.l.s4 1966171168
    %v972 = vunpack.c.0.s8 %v971
    %v973 = vlaneseq
    %v974 = vshrl.u32 %v973, 7
    %v975 = vsub.s32 %v972, %v974
    %v976 = vrot.slane %v968, %v975
    %v978 = vunpack.c.l.s4 1966171168
    %v979 = vunpack.c.0.s8 %v978
    %v980 = vlaneseq
    %v981 = vshrl.u32 %v980, 7
    %v982 = vsub.s32 %v979, %v981
    %v983 = vrot.slane %v969, %v982
    %986 = vst.msk [vmem:[#allocation5 + $0x2] sm:$0x1] %vm263, %v976
    %987 = vst.msk [vmem:[#allocation5 + $0xa] sm:$0x1] %vm263, %v983
    %988 = vst.msk [vmem:[#allocation2] sm:$0x3] %vm158, %v960
    %989 = vst.msk [vmem:[#allocation2] sm:$0x3] %vm160, %v727
    %v990 = vld [vmem:[#allocation2] sm:$0x3]
    %v992 = vsel %vm163, %v990, 0
    %994 = vmatprep.subr.mxu0 0.0
    %995 = vmatpush1.msra.mxu0 %v46
    %996 = vmatprep.subr.mxu0 0.0
    %997 = vmatpush1.msra.mxu0 %v47
    %998 = vmatprep.subr.mxu0 0.0
    %999 = vmatpush1.msra.mxu0 %v48
    %1000 = vmatprep.subr.mxu0 0.0
    %1001 = vmatpush1.msra.mxu0 %v49
    %1002 = vmatprep.subr.mxu0 0.0
    %1003 = vmatpush1.msra.mxu0 %v50
    %1004 = vmatprep.subr.mxu0 0.0
    %1005 = vmatpush1.msra.mxu0 %v51
    %1006 = vmatprep.subr.mxu0 0.0
    %1007 = vmatpush1.msra.mxu0 %v52
    %1008 = vmatprep.subr.mxu0 0.0
    %1009 = vmatpush1.msra.mxu0 %v53
    %1010 = vmatprep.subr.mxu0 0.0
    %1011 = vmatpush1.msra.mxu0 0.0
    %1012 = vmatprep.subr.mxu0 0.0
    %1013 = vmatpush1.msra.mxu0 0.0
    %1014 = vmatprep.subr.mxu0 0.0
    %1015 = vmatpush1.msra.mxu0 0.0
    %1016 = vmatprep.subr.mxu0 0.0
    %1017 = vmatpush1.msra.mxu0 0.0
    %1018 = vmatprep.subr.mxu0 0.0
    %1019 = vmatpush1.msra.mxu0 0.0
    %1020 = vmatprep.subr.mxu0 0.0
    %1021 = vmatpush1.msra.mxu0 0.0
    %1022 = vmatprep.subr.mxu0 0.0
    %1023 = vmatpush1.msra.mxu0 0.0
    %1024 = vmatprep.subr.mxu0 0.0
    %1025 = vmatpush1.msra.mxu0 0.0
    %1026 = vmatprep.subr.mxu0 0.0
    %1027 = vmatpush1.msra.mxu0 0.0
    %1028 = vmatprep.subr.mxu0 0.0
    %1029 = vmatpush1.msra.mxu0 0.0
    %1030 = vmatprep.subr.mxu0 0.0
    %1031 = vmatpush1.msra.mxu0 0.0
    %1032 = vmatprep.subr.mxu0 0.0
    %1033 = vmatpush1.msra.mxu0 0.0
    %1034 = vmatprep.subr.mxu0 0.0
    %1035 = vmatpush1.msra.mxu0 0.0
    %1036 = vmatprep.subr.mxu0 0.0
    %1037 = vmatpush1.msra.mxu0 0.0
    %1038 = vmatprep.subr.mxu0 0.0
    %1039 = vmatpush1.msra.mxu0 0.0
    %1040 = vmatprep.subr.mxu0 0.0
    %1041 = vmatpush1.msra.mxu0 0.0
    %1042 = vmatprep.subr.mxu0 0.0
    %1043 = vmatpush1.msra.mxu0 0.0
    %1044 = vmatprep.subr.mxu0 0.0
    %1045 = vmatpush1.msra.mxu0 0.0
    %1046 = vmatprep.subr.mxu0 0.0
    %1047 = vmatpush1.msra.mxu0 0.0
    %1048 = vmatprep.subr.mxu0 0.0
    %1049 = vmatpush1.msra.mxu0 0.0
    %1050 = vmatprep.subr.mxu0 0.0
    %1051 = vmatpush1.msra.mxu0 0.0
    %1052 = vmatprep.subr.mxu0 0.0
    %1053 = vmatpush1.msra.mxu0 0.0
    %1054 = vmatprep.subr.mxu0 0.0
    %1055 = vmatpush1.msra.mxu0 0.0
    %1056 = vmatprep.subr.mxu0 0.0
    %1057 = vmatpush1.msra.mxu0 0.0
    %1058 = vmatprep.mubr.f32.mxu0 0.0
    %1059 = vmatmul.mubr.f32.gmra.mrb[0].mxu0 %v992
    %v1060 = vpop.f32.mrb[0].mxu0
    %v1061 = vadd.f32 %v66, %v1060
    %v1062 = vpop.f32.mrb[0].mxu0
    %1063 = vdwg.mxu0
    %v1064 = vxor.u32 %v1061, 2147483648
    %v1065 = vmul.f32 %v1064, 1.442695
    %v1066 = vpow.pop %v1065
    %v1067 = vadd.f32 %v1066, 1.0
    %v1068 = vrcp.pop %v1067
    %v1069 = vmul.f32 1.0, %v1068
    %1071 = vrot.lane.b32.xlu0 %v1061, 32
    %v1072 = vpop.permute.xlu0 %1071
    %v1074 = vmul.f32 %v1069, %v1072
    %1076 = vrot.lane.b32.xlu0 %v1074, 64
    %v1077 = vpop.permute.xlu0 %1076
    %v1079 = vadd.f32 %v1061, %v1077
    %v1080 = vtanh.pop %v1079
    %v1081 = vsub.f32 1.0, %v1069
    %1083 = vrot.lane.b32.xlu0 %v1080, 96
    %v1084 = vpop.permute.xlu0 %1083
    %v1086 = vmul.f32 %v1081, %v1084
    %v1087 = vmul.f32 %v1069, %v727
    %v1088 = vadd.f32 %v1086, %v1087
    %v1091 = vunpack.c.l.s4 1966171168
    %v1092 = vunpack.c.0.s8 %v1091
    %v1093 = vlaneseq
    %v1094 = vshrl.u32 %v1093, 7
    %v1095 = vsub.s32 %v1092, %v1094
    %v1096 = vrot.slane %v1088, %v1095
    %v1097 = vcombine.high %v1096, %v1096
    %v1099 = vunpack.c.l.s4 1966171168
    %v1100 = vunpack.c.0.s8 %v1099
    %v1101 = vlaneseq
    %v1102 = vshrl.u32 %v1101, 7
    %v1103 = vsub.s32 %v1100, %v1102
    %v1104 = vrot.slane %v1096, %v1103
    %v1106 = vunpack.c.l.s4 1966171168
    %v1107 = vunpack.c.0.s8 %v1106
    %v1108 = vlaneseq
    %v1109 = vshrl.u32 %v1108, 7
    %v1110 = vsub.s32 %v1107, %v1109
    %v1111 = vrot.slane %v1097, %v1110
    %v1112 = vlaneseq
    %v1113 = vshrl.u32 %v1112, 7
    %v1114 = vsub.s32 0, %v1113
    %v1115 = vrot.slane %v1104, %v1114
    %v1116 = vlaneseq
    %v1117 = vshrl.u32 %v1116, 7
    %v1118 = vsub.s32 0, %v1117
    %v1119 = vrot.slane %v1111, %v1118
    %1120 = vrot.lane.b32.xlu0 %v1115, 96
    %v1121 = vpop.permute.xlu0 %1120
    %1122 = vrot.lane.b32.xlu0 %v1119, 96
    %v1123 = vpop.permute.xlu0 %1122
    %1126 = vst.msk [vmem:[#allocation7 + $0x2] sm:$0x1] %vm263, %v1121
    %1127 = vst.msk [vmem:[#allocation7 + $0xa] sm:$0x1] %vm263, %v1123
    %v1128 = vld [vmem:[%s1 + $0x2] sm:$0x1]
    %v1129 = vld [vmem:[%s1 + $0xa] sm:$0x1]
    %v1130 = vld [vmem:[%s2 + $0x2] sm:$0x1]
    %v1131 = vld [vmem:[%s2 + $0xa] sm:$0x1]
    %1133 = vset.pattern.permute.xlu0 0
    %1134 = vperm.xlu0 %1133, %v1130
    %v1135 = vpop.permute.xlu0 %1134
    %1138 = vset.pattern.permute.xlu0 0
    %1139 = vperm.xlu0 %1138, %v1131
    %v1140 = vpop.permute.xlu0 %1139
    %v1142 = vrot.slane %v960, 1
    %v1145 = vmul.f32 %v1135, %v960
    %v1146 = vmul.f32 %v1140, %v1142
    %v1147 = vsub.f32 %v1128, %v1145
    %v1148 = vsub.f32 %v1129, %v1146
    %v1149 = vmax.f32 %v1147, 0.0
    %v1150 = vmax.f32 %v1148, 0.0
    %v1151 = vmin.f32 %v1149, 1.0
    %v1152 = vmin.f32 %v1150, 1.0
    %1153 = vst.msk [vmem:[#allocation3 + $0x2] sm:$0x1] %vm263, %v1151
    %1154 = vst.msk [vmem:[#allocation3 + $0xa] sm:$0x1] %vm263, %v1152
    %v1155 = vld [vmem:[%s0 + $0x3] sm:$0x1]
    %v1156 = vld [vmem:[%s0 + $0xb] sm:$0x1]
    %v1157 = vsel %vm70, %v879, 0
    %1159 = vmatprep.subr.mxu0 0.0
    %1160 = vmatpush1.msra.mxu0 %v34
    %1161 = vmatprep.subr.mxu0 0.0
    %1162 = vmatpush1.msra.mxu0 %v35
    %1163 = vmatprep.subr.mxu0 0.0
    %1164 = vmatpush1.msra.mxu0 %v36
    %1165 = vmatprep.subr.mxu0 0.0
    %1166 = vmatpush1.msra.mxu0 %v37
    %1167 = vmatprep.subr.mxu0 0.0
    %1168 = vmatpush1.msra.mxu0 0.0
    %1169 = vmatprep.subr.mxu0 0.0
    %1170 = vmatpush1.msra.mxu0 0.0
    %1171 = vmatprep.subr.mxu0 0.0
    %1172 = vmatpush1.msra.mxu0 0.0
    %1173 = vmatprep.subr.mxu0 0.0
    %1174 = vmatpush1.msra.mxu0 0.0
    %1175 = vmatprep.subr.mxu0 0.0
    %1176 = vmatpush1.msra.mxu0 0.0
    %1177 = vmatprep.subr.mxu0 0.0
    %1178 = vmatpush1.msra.mxu0 0.0
    %1179 = vmatprep.subr.mxu0 0.0
    %1180 = vmatpush1.msra.mxu0 0.0
    %1181 = vmatprep.subr.mxu0 0.0
    %1182 = vmatpush1.msra.mxu0 0.0
    %1183 = vmatprep.subr.mxu0 0.0
    %1184 = vmatpush1.msra.mxu0 0.0
    %1185 = vmatprep.subr.mxu0 0.0
    %1186 = vmatpush1.msra.mxu0 0.0
    %1187 = vmatprep.subr.mxu0 0.0
    %1188 = vmatpush1.msra.mxu0 0.0
    %1189 = vmatprep.subr.mxu0 0.0
    %1190 = vmatpush1.msra.mxu0 0.0
    %1191 = vmatprep.subr.mxu0 0.0
    %1192 = vmatpush1.msra.mxu0 0.0
    %1193 = vmatprep.subr.mxu0 0.0
    %1194 = vmatpush1.msra.mxu0 0.0
    %1195 = vmatprep.subr.mxu0 0.0
    %1196 = vmatpush1.msra.mxu0 0.0
    %1197 = vmatprep.subr.mxu0 0.0
    %1198 = vmatpush1.msra.mxu0 0.0
    %1199 = vmatprep.subr.mxu0 0.0
    %1200 = vmatpush1.msra.mxu0 0.0
    %1201 = vmatprep.subr.mxu0 0.0
    %1202 = vmatpush1.msra.mxu0 0.0
    %1203 = vmatprep.subr.mxu0 0.0
    %1204 = vmatpush1.msra.mxu0 0.0
    %1205 = vmatprep.subr.mxu0 0.0
    %1206 = vmatpush1.msra.mxu0 0.0
    %1207 = vmatprep.subr.mxu0 0.0
    %1208 = vmatpush1.msra.mxu0 0.0
    %1209 = vmatprep.subr.mxu0 0.0
    %1210 = vmatpush1.msra.mxu0 0.0
    %1211 = vmatprep.subr.mxu0 0.0
    %1212 = vmatpush1.msra.mxu0 0.0
    %1213 = vmatprep.subr.mxu0 0.0
    %1214 = vmatpush1.msra.mxu0 0.0
    %1215 = vmatprep.subr.mxu0 0.0
    %1216 = vmatpush1.msra.mxu0 0.0
    %1217 = vmatprep.subr.mxu0 0.0
    %1218 = vmatpush1.msra.mxu0 0.0
    %1219 = vmatprep.subr.mxu0 0.0
    %1220 = vmatpush1.msra.mxu0 0.0
    %1221 = vmatprep.subr.mxu0 0.0
    %1222 = vmatpush1.msra.mxu0 0.0
    %1223 = vmatprep.mubr.f32.mxu0 0.0
    %1224 = vmatmul.mubr.f32.gmra.mrb[0].mxu0 %v1157
    %v1225 = vpop.f32.mrb[0].mxu0
    %v1226 = vadd.f32 0.0, %v1225
    %v1227 = vpop.f32.mrb[0].mxu0
    %1228 = vdwg.mxu0
    %v1230 = vrot.slane %v1226, 1
    %v1233 = vadd.f32 %v1155, %v1226
    %v1234 = vadd.f32 %v1156, %v1230
    %v1235 = vtanh.pop %v1233
    %v1236 = vtanh.pop %v1234
    %v1239 = vrot.slane %v1236, 7
    %v1240 = vsel %vm155, %v1239, %v1235
    %1242 = vst.msk [vmem:[#allocation2] sm:$0x3] %vm158, %v1240
    %1243 = vrot.lane.b32.xlu0 %v960, 32
    %v1244 = vpop.permute.xlu0 %1243
    %1246 = vst.msk [vmem:[#allocation2] sm:$0x3] %vm160, %v1244
    %v1247 = vld [vmem:[#allocation2] sm:$0x3]
    %v1249 = vsel %vm163, %v1247, 0
    %1251 = vmatprep.subr.mxu0 0.0
    %1252 = vmatpush1.msra.mxu0 %v38
    %1253 = vmatprep.subr.mxu0 0.0
    %1254 = vmatpush1.msra.mxu0 %v39
    %1255 = vmatprep.subr.mxu0 0.0
    %1256 = vmatpush1.msra.mxu0 %v40
    %1257 = vmatprep.subr.mxu0 0.0
    %1258 = vmatpush1.msra.mxu0 %v41
    %1259 = vmatprep.subr.mxu0 0.0
    %1260 = vmatpush1.msra.mxu0 %v42
    %1261 = vmatprep.subr.mxu0 0.0
    %1262 = vmatpush1.msra.mxu0 %v43
    %1263 = vmatprep.subr.mxu0 0.0
    %1264 = vmatpush1.msra.mxu0 %v44
    %1265 = vmatprep.subr.mxu0 0.0
    %1266 = vmatpush1.msra.mxu0 %v45
    %1267 = vmatprep.subr.mxu0 0.0
    %1268 = vmatpush1.msra.mxu0 0.0
    %1269 = vmatprep.subr.mxu0 0.0
    %1270 = vmatpush1.msra.mxu0 0.0
    %1271 = vmatprep.subr.mxu0 0.0
    %1272 = vmatpush1.msra.mxu0 0.0
    %1273 = vmatprep.subr.mxu0 0.0
    %1274 = vmatpush1.msra.mxu0 0.0
    %1275 = vmatprep.subr.mxu0 0.0
    %1276 = vmatpush1.msra.mxu0 0.0
    %1277 = vmatprep.subr.mxu0 0.0
    %1278 = vmatpush1.msra.mxu0 0.0
    %1279 = vmatprep.subr.mxu0 0.0
    %1280 = vmatpush1.msra.mxu0 0.0
    %1281 = vmatprep.subr.mxu0 0.0
    %1282 = vmatpush1.msra.mxu0 0.0
    %1283 = vmatprep.subr.mxu0 0.0
    %1284 = vmatpush1.msra.mxu0 0.0
    %1285 = vmatprep.subr.mxu0 0.0
    %1286 = vmatpush1.msra.mxu0 0.0
    %1287 = vmatprep.subr.mxu0 0.0
    %1288 = vmatpush1.msra.mxu0 0.0
    %1289 = vmatprep.subr.mxu0 0.0
    %1290 = vmatpush1.msra.mxu0 0.0
    %1291 = vmatprep.subr.mxu0 0.0
    %1292 = vmatpush1.msra.mxu0 0.0
    %1293 = vmatprep.subr.mxu0 0.0
    %1294 = vmatpush1.msra.mxu0 0.0
    %1295 = vmatprep.subr.mxu0 0.0
    %1296 = vmatpush1.msra.mxu0 0.0
    %1297 = vmatprep.subr.mxu0 0.0
    %1298 = vmatpush1.msra.mxu0 0.0
    %1299 = vmatprep.subr.mxu0 0.0
    %1300 = vmatpush1.msra.mxu0 0.0
    %1301 = vmatprep.subr.mxu0 0.0
    %1302 = vmatpush1.msra.mxu0 0.0
    %1303 = vmatprep.subr.mxu0 0.0
    %1304 = vmatpush1.msra.mxu0 0.0
    %1305 = vmatprep.subr.mxu0 0.0
    %1306 = vmatpush1.msra.mxu0 0.0
    %1307 = vmatprep.subr.mxu0 0.0
    %1308 = vmatpush1.msra.mxu0 0.0
    %1309 = vmatprep.subr.mxu0 0.0
    %1310 = vmatpush1.msra.mxu0 0.0
    %1311 = vmatprep.subr.mxu0 0.0
    %1312 = vmatpush1.msra.mxu0 0.0
    %1313 = vmatprep.subr.mxu0 0.0
    %1314 = vmatpush1.msra.mxu0 0.0
    %1315 = vmatprep.mubr.f32.mxu0 0.0
    %1316 = vmatmul.mubr.f32.gmra.mrb[0].mxu0 %v1249
    %v1317 = vpop.f32.mrb[0].mxu0
    %v1318 = vadd.f32 %v59, %v1317
    %v1319 = vpop.f32.mrb[0].mxu0
    %1320 = vdwg.mxu0
    %v1321 = vtanh.pop %v1318
    %v1324 = vunpack.c.l.s4 1966171168
    %v1325 = vunpack.c.0.s8 %v1324
    %v1326 = vlaneseq
    %v1327 = vshrl.u32 %v1326, 7
    %v1328 = vsub.s32 %v1325, %v1327
    %v1329 = vrot.slane %v1321, %v1328
    %v1330 = vcombine.high %v1329, %v1329
    %v1332 = vunpack.c.l.s4 1966171168
    %v1333 = vunpack.c.0.s8 %v1332
    %v1334 = vlaneseq
    %v1335 = vshrl.u32 %v1334, 7
    %v1336 = vsub.s32 %v1333, %v1335
    %v1337 = vrot.slane %v1329, %v1336
    %v1339 = vunpack.c.l.s4 1966171168
    %v1340 = vunpack.c.0.s8 %v1339
    %v1341 = vlaneseq
    %v1342 = vshrl.u32 %v1341, 7
    %v1343 = vsub.s32 %v1340, %v1342
    %v1344 = vrot.slane %v1330, %v1343
    %1347 = vst.msk [vmem:[#allocation5 + $0x3] sm:$0x1] %vm263, %v1337
    %1348 = vst.msk [vmem:[#allocation5 + $0xb] sm:$0x1] %vm263, %v1344
    %1349 = vst.msk [vmem:[#allocation2] sm:$0x3] %vm158, %v1321
    %1350 = vst.msk [vmem:[#allocation2] sm:$0x3] %vm160, %v1088
    %v1351 = vld [vmem:[#allocation2] sm:$0x3]
    %v1353 = vsel %vm163, %v1351, 0
    %1355 = vmatprep.subr.mxu0 0.0
    %1356 = vmatpush1.msra.mxu0 %v46
    %1357 = vmatprep.subr.mxu0 0.0
    %1358 = vmatpush1.msra.mxu0 %v47
    %1359 = vmatprep.subr.mxu0 0.0
    %1360 = vmatpush1.msra.mxu0 %v48
    %1361 = vmatprep.subr.mxu0 0.0
    %1362 = vmatpush1.msra.mxu0 %v49
    %1363 = vmatprep.subr.mxu0 0.0
    %1364 = vmatpush1.msra.mxu0 %v50
    %1365 = vmatprep.subr.mxu0 0.0
    %1366 = vmatpush1.msra.mxu0 %v51
    %1367 = vmatprep.subr.mxu0 0.0
    %1368 = vmatpush1.msra.mxu0 %v52
    %1369 = vmatprep.subr.mxu0 0.0
    %1370 = vmatpush1.msra.mxu0 %v53
    %1371 = vmatprep.subr.mxu0 0.0
    %1372 = vmatpush1.msra.mxu0 0.0
    %1373 = vmatprep.subr.mxu0 0.0
    %1374 = vmatpush1.msra.mxu0 0.0
    %1375 = vmatprep.subr.mxu0 0.0
    %1376 = vmatpush1.msra.mxu0 0.0
    %1377 = vmatprep.subr.mxu0 0.0
    %1378 = vmatpush1.msra.mxu0 0.0
    %1379 = vmatprep.subr.mxu0 0.0
    %1380 = vmatpush1.msra.mxu0 0.0
    %1381 = vmatprep.subr.mxu0 0.0
    %1382 = vmatpush1.msra.mxu0 0.0
    %1383 = vmatprep.subr.mxu0 0.0
    %1384 = vmatpush1.msra.mxu0 0.0
    %1385 = vmatprep.subr.mxu0 0.0
    %1386 = vmatpush1.msra.mxu0 0.0
    %1387 = vmatprep.subr.mxu0 0.0
    %1388 = vmatpush1.msra.mxu0 0.0
    %1389 = vmatprep.subr.mxu0 0.0
    %1390 = vmatpush1.msra.mxu0 0.0
    %1391 = vmatprep.subr.mxu0 0.0
    %1392 = vmatpush1.msra.mxu0 0.0
    %1393 = vmatprep.subr.mxu0 0.0
    %1394 = vmatpush1.msra.mxu0 0.0
    %1395 = vmatprep.subr.mxu0 0.0
    %1396 = vmatpush1.msra.mxu0 0.0
    %1397 = vmatprep.subr.mxu0 0.0
    %1398 = vmatpush1.msra.mxu0 0.0
    %1399 = vmatprep.subr.mxu0 0.0
    %1400 = vmatpush1.msra.mxu0 0.0
    %1401 = vmatprep.subr.mxu0 0.0
    %1402 = vmatpush1.msra.mxu0 0.0
    %1403 = vmatprep.subr.mxu0 0.0
    %1404 = vmatpush1.msra.mxu0 0.0
    %1405 = vmatprep.subr.mxu0 0.0
    %1406 = vmatpush1.msra.mxu0 0.0
    %1407 = vmatprep.subr.mxu0 0.0
    %1408 = vmatpush1.msra.mxu0 0.0
    %1409 = vmatprep.subr.mxu0 0.0
    %1410 = vmatpush1.msra.mxu0 0.0
    %1411 = vmatprep.subr.mxu0 0.0
    %1412 = vmatpush1.msra.mxu0 0.0
    %1413 = vmatprep.subr.mxu0 0.0
    %1414 = vmatpush1.msra.mxu0 0.0
    %1415 = vmatprep.subr.mxu0 0.0
    %1416 = vmatpush1.msra.mxu0 0.0
    %1417 = vmatprep.subr.mxu0 0.0
    %1418 = vmatpush1.msra.mxu0 0.0
    %1419 = vmatprep.mubr.f32.mxu0 0.0
    %1420 = vmatmul.mubr.f32.gmra.mrb[0].mxu0 %v1353
    %v1421 = vpop.f32.mrb[0].mxu0
    %v1422 = vadd.f32 %v66, %v1421
    %v1423 = vpop.f32.mrb[0].mxu0
    %1424 = vdwg.mxu0
    %v1425 = vxor.u32 %v1422, 2147483648
    %v1426 = vmul.f32 %v1425, 1.442695
    %v1427 = vpow.pop %v1426
    %v1428 = vadd.f32 %v1427, 1.0
    %v1429 = vrcp.pop %v1428
    %v1430 = vmul.f32 1.0, %v1429
    %1432 = vrot.lane.b32.xlu0 %v1422, 32
    %v1433 = vpop.permute.xlu0 %1432
    %v1435 = vmul.f32 %v1430, %v1433
    %1437 = vrot.lane.b32.xlu0 %v1435, 64
    %v1438 = vpop.permute.xlu0 %1437
    %v1440 = vadd.f32 %v1422, %v1438
    %v1441 = vtanh.pop %v1440
    %v1442 = vsub.f32 1.0, %v1430
    %1444 = vrot.lane.b32.xlu0 %v1441, 96
    %v1445 = vpop.permute.xlu0 %1444
    %v1447 = vmul.f32 %v1442, %v1445
    %v1448 = vmul.f32 %v1430, %v1088
    %v1449 = vadd.f32 %v1447, %v1448
    %v1452 = vunpack.c.l.s4 1966171168
    %v1453 = vunpack.c.0.s8 %v1452
    %v1454 = vlaneseq
    %v1455 = vshrl.u32 %v1454, 7
    %v1456 = vsub.s32 %v1453, %v1455
    %v1457 = vrot.slane %v1449, %v1456
    %v1458 = vcombine.high %v1457, %v1457
    %v1460 = vunpack.c.l.s4 1966171168
    %v1461 = vunpack.c.0.s8 %v1460
    %v1462 = vlaneseq
    %v1463 = vshrl.u32 %v1462, 7
    %v1464 = vsub.s32 %v1461, %v1463
    %v1465 = vrot.slane %v1457, %v1464
    %v1467 = vunpack.c.l.s4 1966171168
    %v1468 = vunpack.c.0.s8 %v1467
    %v1469 = vlaneseq
    %v1470 = vshrl.u32 %v1469, 7
    %v1471 = vsub.s32 %v1468, %v1470
    %v1472 = vrot.slane %v1458, %v1471
    %v1473 = vlaneseq
    %v1474 = vshrl.u32 %v1473, 7
    %v1475 = vsub.s32 0, %v1474
    %v1476 = vrot.slane %v1465, %v1475
    %v1477 = vlaneseq
    %v1478 = vshrl.u32 %v1477, 7
    %v1479 = vsub.s32 0, %v1478
    %v1480 = vrot.slane %v1472, %v1479
    %1481 = vrot.lane.b32.xlu0 %v1476, 96
    %v1482 = vpop.permute.xlu0 %1481
    %1483 = vrot.lane.b32.xlu0 %v1480, 96
    %v1484 = vpop.permute.xlu0 %1483
    %1487 = vst.msk [vmem:[#allocation7 + $0x3] sm:$0x1] %vm263, %v1482
    %1488 = vst.msk [vmem:[#allocation7 + $0xb] sm:$0x1] %vm263, %v1484
    %v1489 = vld [vmem:[%s1 + $0x3] sm:$0x1]
    %v1490 = vld [vmem:[%s1 + $0xb] sm:$0x1]
    %v1491 = vld [vmem:[%s2 + $0x3] sm:$0x1]
    %v1492 = vld [vmem:[%s2 + $0xb] sm:$0x1]
    %1494 = vset.pattern.permute.xlu0 0
    %1495 = vperm.xlu0 %1494, %v1491
    %v1496 = vpop.permute.xlu0 %1495
    %1499 = vset.pattern.permute.xlu0 0
    %1500 = vperm.xlu0 %1499, %v1492
    %v1501 = vpop.permute.xlu0 %1500
    %v1503 = vrot.slane %v1321, 1
    %v1506 = vmul.f32 %v1496, %v1321
    %v1507 = vmul.f32 %v1501, %v1503
    %v1508 = vsub.f32 %v1489, %v1506
    %v1509 = vsub.f32 %v1490, %v1507
    %v1510 = vmax.f32 %v1508, 0.0
    %v1511 = vmax.f32 %v1509, 0.0
    %v1512 = vmin.f32 %v1510, 1.0
    %v1513 = vmin.f32 %v1511, 1.0
    %1514 = vst.msk [vmem:[#allocation3 + $0x3] sm:$0x1] %vm263, %v1512
    %1515 = vst.msk [vmem:[#allocation3 + $0xb] sm:$0x1] %vm263, %v1513
    %v1516 = vld [vmem:[%s0 + $0x4] sm:$0x1]
    %v1517 = vld [vmem:[%s0 + $0xc] sm:$0x1]
    %v1518 = vsel %vm70, %v1240, 0
    %1520 = vmatprep.subr.mxu0 0.0
    %1521 = vmatpush1.msra.mxu0 %v34
    %1522 = vmatprep.subr.mxu0 0.0
    %1523 = vmatpush1.msra.mxu0 %v35
    %1524 = vmatprep.subr.mxu0 0.0
    %1525 = vmatpush1.msra.mxu0 %v36
    %1526 = vmatprep.subr.mxu0 0.0
    %1527 = vmatpush1.msra.mxu0 %v37
    %1528 = vmatprep.subr.mxu0 0.0
    %1529 = vmatpush1.msra.mxu0 0.0
    %1530 = vmatprep.subr.mxu0 0.0
    %1531 = vmatpush1.msra.mxu0 0.0
    %1532 = vmatprep.subr.mxu0 0.0
    %1533 = vmatpush1.msra.mxu0 0.0
    %1534 = vmatprep.subr.mxu0 0.0
    %1535 = vmatpush1.msra.mxu0 0.0
    %1536 = vmatprep.subr.mxu0 0.0
    %1537 = vmatpush1.msra.mxu0 0.0
    %1538 = vmatprep.subr.mxu0 0.0
    %1539 = vmatpush1.msra.mxu0 0.0
    %1540 = vmatprep.subr.mxu0 0.0
    %1541 = vmatpush1.msra.mxu0 0.0
    %1542 = vmatprep.subr.mxu0 0.0
    %1543 = vmatpush1.msra.mxu0 0.0
    %1544 = vmatprep.subr.mxu0 0.0
    %1545 = vmatpush1.msra.mxu0 0.0
    %1546 = vmatprep.subr.mxu0 0.0
    %1547 = vmatpush1.msra.mxu0 0.0
    %1548 = vmatprep.subr.mxu0 0.0
    %1549 = vmatpush1.msra.mxu0 0.0
    %1550 = vmatprep.subr.mxu0 0.0
    %1551 = vmatpush1.msra.mxu0 0.0
    %1552 = vmatprep.subr.mxu0 0.0
    %1553 = vmatpush1.msra.mxu0 0.0
    %1554 = vmatprep.subr.mxu0 0.0
    %1555 = vmatpush1.msra.mxu0 0.0
    %1556 = vmatprep.subr.mxu0 0.0
    %1557 = vmatpush1.msra.mxu0 0.0
    %1558 = vmatprep.subr.mxu0 0.0
    %1559 = vmatpush1.msra.mxu0 0.0
    %1560 = vmatprep.subr.mxu0 0.0
    %1561 = vmatpush1.msra.mxu0 0.0
    %1562 = vmatprep.subr.mxu0 0.0
    %1563 = vmatpush1.msra.mxu0 0.0
    %1564 = vmatprep.subr.mxu0 0.0
    %1565 = vmatpush1.msra.mxu0 0.0
    %1566 = vmatprep.subr.mxu0 0.0
    %1567 = vmatpush1.msra.mxu0 0.0
    %1568 = vmatprep.subr.mxu0 0.0
    %1569 = vmatpush1.msra.mxu0 0.0
    %1570 = vmatprep.subr.mxu0 0.0
    %1571 = vmatpush1.msra.mxu0 0.0
    %1572 = vmatprep.subr.mxu0 0.0
    %1573 = vmatpush1.msra.mxu0 0.0
    %1574 = vmatprep.subr.mxu0 0.0
    %1575 = vmatpush1.msra.mxu0 0.0
    %1576 = vmatprep.subr.mxu0 0.0
    %1577 = vmatpush1.msra.mxu0 0.0
    %1578 = vmatprep.subr.mxu0 0.0
    %1579 = vmatpush1.msra.mxu0 0.0
    %1580 = vmatprep.subr.mxu0 0.0
    %1581 = vmatpush1.msra.mxu0 0.0
    %1582 = vmatprep.subr.mxu0 0.0
    %1583 = vmatpush1.msra.mxu0 0.0
    %1584 = vmatprep.mubr.f32.mxu0 0.0
    %1585 = vmatmul.mubr.f32.gmra.mrb[0].mxu0 %v1518
    %v1586 = vpop.f32.mrb[0].mxu0
    %v1587 = vadd.f32 0.0, %v1586
    %v1588 = vpop.f32.mrb[0].mxu0
    %1589 = vdwg.mxu0
    %v1591 = vrot.slane %v1587, 1
    %v1594 = vadd.f32 %v1516, %v1587
    %v1595 = vadd.f32 %v1517, %v1591
    %v1596 = vtanh.pop %v1594
    %v1597 = vtanh.pop %v1595
    %v1600 = vrot.slane %v1597, 7
    %v1601 = vsel %vm155, %v1600, %v1596
    %1603 = vst.msk [vmem:[#allocation2] sm:$0x3] %vm158, %v1601
    %1604 = vrot.lane.b32.xlu0 %v1321, 32
    %v1605 = vpop.permute.xlu0 %1604
    %1607 = vst.msk [vmem:[#allocation2] sm:$0x3] %vm160, %v1605
    %v1608 = vld [vmem:[#allocation2] sm:$0x3]
    %v1610 = vsel %vm163, %v1608, 0
    %1612 = vmatprep.subr.mxu0 0.0
    %1613 = vmatpush1.msra.mxu0 %v38
    %1614 = vmatprep.subr.mxu0 0.0
    %1615 = vmatpush1.msra.mxu0 %v39
    %1616 = vmatprep.subr.mxu0 0.0
    %1617 = vmatpush1.msra.mxu0 %v40
    %1618 = vmatprep.subr.mxu0 0.0
    %1619 = vmatpush1.msra.mxu0 %v41
    %1620 = vmatprep.subr.mxu0 0.0
    %1621 = vmatpush1.msra.mxu0 %v42
    %1622 = vmatprep.subr.mxu0 0.0
    %1623 = vmatpush1.msra.mxu0 %v43
    %1624 = vmatprep.subr.mxu0 0.0
    %1625 = vmatpush1.msra.mxu0 %v44
    %1626 = vmatprep.subr.mxu0 0.0
    %1627 = vmatpush1.msra.mxu0 %v45
    %1628 = vmatprep.subr.mxu0 0.0
    %1629 = vmatpush1.msra.mxu0 0.0
    %1630 = vmatprep.subr.mxu0 0.0
    %1631 = vmatpush1.msra.mxu0 0.0
    %1632 = vmatprep.subr.mxu0 0.0
    %1633 = vmatpush1.msra.mxu0 0.0
    %1634 = vmatprep.subr.mxu0 0.0
    %1635 = vmatpush1.msra.mxu0 0.0
    %1636 = vmatprep.subr.mxu0 0.0
    %1637 = vmatpush1.msra.mxu0 0.0
    %1638 = vmatprep.subr.mxu0 0.0
    %1639 = vmatpush1.msra.mxu0 0.0
    %1640 = vmatprep.subr.mxu0 0.0
    %1641 = vmatpush1.msra.mxu0 0.0
    %1642 = vmatprep.subr.mxu0 0.0
    %1643 = vmatpush1.msra.mxu0 0.0
    %1644 = vmatprep.subr.mxu0 0.0
    %1645 = vmatpush1.msra.mxu0 0.0
    %1646 = vmatprep.subr.mxu0 0.0
    %1647 = vmatpush1.msra.mxu0 0.0
    %1648 = vmatprep.subr.mxu0 0.0
    %1649 = vmatpush1.msra.mxu0 0.0
    %1650 = vmatprep.subr.mxu0 0.0
    %1651 = vmatpush1.msra.mxu0 0.0
    %1652 = vmatprep.subr.mxu0 0.0
    %1653 = vmatpush1.msra.mxu0 0.0
    %1654 = vmatprep.subr.mxu0 0.0
    %1655 = vmatpush1.msra.mxu0 0.0
    %1656 = vmatprep.subr.mxu0 0.0
    %1657 = vmatpush1.msra.mxu0 0.0
    %1658 = vmatprep.subr.mxu0 0.0
    %1659 = vmatpush1.msra.mxu0 0.0
    %1660 = vmatprep.subr.mxu0 0.0
    %1661 = vmatpush1.msra.mxu0 0.0
    %1662 = vmatprep.subr.mxu0 0.0
    %1663 = vmatpush1.msra.mxu0 0.0
    %1664 = vmatprep.subr.mxu0 0.0
    %1665 = vmatpush1.msra.mxu0 0.0
    %1666 = vmatprep.subr.mxu0 0.0
    %1667 = vmatpush1.msra.mxu0 0.0
    %1668 = vmatprep.subr.mxu0 0.0
    %1669 = vmatpush1.msra.mxu0 0.0
    %1670 = vmatprep.subr.mxu0 0.0
    %1671 = vmatpush1.msra.mxu0 0.0
    %1672 = vmatprep.subr.mxu0 0.0
    %1673 = vmatpush1.msra.mxu0 0.0
    %1674 = vmatprep.subr.mxu0 0.0
    %1675 = vmatpush1.msra.mxu0 0.0
    %1676 = vmatprep.mubr.f32.mxu0 0.0
    %1677 = vmatmul.mubr.f32.gmra.mrb[0].mxu0 %v1610
    %v1678 = vpop.f32.mrb[0].mxu0
    %v1679 = vadd.f32 %v59, %v1678
    %v1680 = vpop.f32.mrb[0].mxu0
    %1681 = vdwg.mxu0
    %v1682 = vtanh.pop %v1679
    %v1685 = vunpack.c.l.s4 1966171168
    %v1686 = vunpack.c.0.s8 %v1685
    %v1687 = vlaneseq
    %v1688 = vshrl.u32 %v1687, 7
    %v1689 = vsub.s32 %v1686, %v1688
    %v1690 = vrot.slane %v1682, %v1689
    %v1691 = vcombine.high %v1690, %v1690
    %v1693 = vunpack.c.l.s4 1966171168
    %v1694 = vunpack.c.0.s8 %v1693
    %v1695 = vlaneseq
    %v1696 = vshrl.u32 %v1695, 7
    %v1697 = vsub.s32 %v1694, %v1696
    %v1698 = vrot.slane %v1690, %v1697
    %v1700 = vunpack.c.l.s4 1966171168
    %v1701 = vunpack.c.0.s8 %v1700
    %v1702 = vlaneseq
    %v1703 = vshrl.u32 %v1702, 7
    %v1704 = vsub.s32 %v1701, %v1703
    %v1705 = vrot.slane %v1691, %v1704
    %1708 = vst.msk [vmem:[#allocation5 + $0x4] sm:$0x1] %vm263, %v1698
    %1709 = vst.msk [vmem:[#allocation5 + $0xc] sm:$0x1] %vm263, %v1705
    %1710 = vst.msk [vmem:[#allocation2] sm:$0x3] %vm158, %v1682
    %1711 = vst.msk [vmem:[#allocation2] sm:$0x3] %vm160, %v1449
    %v1712 = vld [vmem:[#allocation2] sm:$0x3]
    %v1714 = vsel %vm163, %v1712, 0
    %1716 = vmatprep.subr.mxu0 0.0
    %1717 = vmatpush1.msra.mxu0 %v46
    %1718 = vmatprep.subr.mxu0 0.0
    %1719 = vmatpush1.msra.mxu0 %v47
    %1720 = vmatprep.subr.mxu0 0.0
    %1721 = vmatpush1.msra.mxu0 %v48
    %1722 = vmatprep.subr.mxu0 0.0
    %1723 = vmatpush1.msra.mxu0 %v49
    %1724 = vmatprep.subr.mxu0 0.0
    %1725 = vmatpush1.msra.mxu0 %v50
    %1726 = vmatprep.subr.mxu0 0.0
    %1727 = vmatpush1.msra.mxu0 %v51
    %1728 = vmatprep.subr.mxu0 0.0
    %1729 = vmatpush1.msra.mxu0 %v52
    %1730 = vmatprep.subr.mxu0 0.0
    %1731 = vmatpush1.msra.mxu0 %v53
    %1732 = vmatprep.subr.mxu0 0.0
    %1733 = vmatpush1.msra.mxu0 0.0
    %1734 = vmatprep.subr.mxu0 0.0
    %1735 = vmatpush1.msra.mxu0 0.0
    %1736 = vmatprep.subr.mxu0 0.0
    %1737 = vmatpush1.msra.mxu0 0.0
    %1738 = vmatprep.subr.mxu0 0.0
    %1739 = vmatpush1.msra.mxu0 0.0
    %1740 = vmatprep.subr.mxu0 0.0
    %1741 = vmatpush1.msra.mxu0 0.0
    %1742 = vmatprep.subr.mxu0 0.0
    %1743 = vmatpush1.msra.mxu0 0.0
    %1744 = vmatprep.subr.mxu0 0.0
    %1745 = vmatpush1.msra.mxu0 0.0
    %1746 = vmatprep.subr.mxu0 0.0
    %1747 = vmatpush1.msra.mxu0 0.0
    %1748 = vmatprep.subr.mxu0 0.0
    %1749 = vmatpush1.msra.mxu0 0.0
    %1750 = vmatprep.subr.mxu0 0.0
    %1751 = vmatpush1.msra.mxu0 0.0
    %1752 = vmatprep.subr.mxu0 0.0
    %1753 = vmatpush1.msra.mxu0 0.0
    %1754 = vmatprep.subr.mxu0 0.0
    %1755 = vmatpush1.msra.mxu0 0.0
    %1756 = vmatprep.subr.mxu0 0.0
    %1757 = vmatpush1.msra.mxu0 0.0
    %1758 = vmatprep.subr.mxu0 0.0
    %1759 = vmatpush1.msra.mxu0 0.0
    %1760 = vmatprep.subr.mxu0 0.0
    %1761 = vmatpush1.msra.mxu0 0.0
    %1762 = vmatprep.subr.mxu0 0.0
    %1763 = vmatpush1.msra.mxu0 0.0
    %1764 = vmatprep.subr.mxu0 0.0
    %1765 = vmatpush1.msra.mxu0 0.0
    %1766 = vmatprep.subr.mxu0 0.0
    %1767 = vmatpush1.msra.mxu0 0.0
    %1768 = vmatprep.subr.mxu0 0.0
    %1769 = vmatpush1.msra.mxu0 0.0
    %1770 = vmatprep.subr.mxu0 0.0
    %1771 = vmatpush1.msra.mxu0 0.0
    %1772 = vmatprep.subr.mxu0 0.0
    %1773 = vmatpush1.msra.mxu0 0.0
    %1774 = vmatprep.subr.mxu0 0.0
    %1775 = vmatpush1.msra.mxu0 0.0
    %1776 = vmatprep.subr.mxu0 0.0
    %1777 = vmatpush1.msra.mxu0 0.0
    %1778 = vmatprep.subr.mxu0 0.0
    %1779 = vmatpush1.msra.mxu0 0.0
    %1780 = vmatprep.mubr.f32.mxu0 0.0
    %1781 = vmatmul.mubr.f32.gmra.mrb[0].mxu0 %v1714
    %v1782 = vpop.f32.mrb[0].mxu0
    %v1783 = vadd.f32 %v66, %v1782
    %v1784 = vpop.f32.mrb[0].mxu0
    %1785 = vdwg.mxu0
    %v1786 = vxor.u32 %v1783, 2147483648
    %v1787 = vmul.f32 %v1786, 1.442695
    %v1788 = vpow.pop %v1787
    %v1789 = vadd.f32 %v1788, 1.0
    %v1790 = vrcp.pop %v1789
    %v1791 = vmul.f32 1.0, %v1790
    %1793 = vrot.lane.b32.xlu0 %v1783, 32
    %v1794 = vpop.permute.xlu0 %1793
    %v1796 = vmul.f32 %v1791, %v1794
    %1798 = vrot.lane.b32.xlu0 %v1796, 64
    %v1799 = vpop.permute.xlu0 %1798
    %v1801 = vadd.f32 %v1783, %v1799
    %v1802 = vtanh.pop %v1801
    %v1803 = vsub.f32 1.0, %v1791
    %1805 = vrot.lane.b32.xlu0 %v1802, 96
    %v1806 = vpop.permute.xlu0 %1805
    %v1808 = vmul.f32 %v1803, %v1806
    %v1809 = vmul.f32 %v1791, %v1449
    %v1810 = vadd.f32 %v1808, %v1809
    %v1813 = vunpack.c.l.s4 1966171168
    %v1814 = vunpack.c.0.s8 %v1813
    %v1815 = vlaneseq
    %v1816 = vshrl.u32 %v1815, 7
    %v1817 = vsub.s32 %v1814, %v1816
    %v1818 = vrot.slane %v1810, %v1817
    %v1819 = vcombine.high %v1818, %v1818
    %v1821 = vunpack.c.l.s4 1966171168
    %v1822 = vunpack.c.0.s8 %v1821
    %v1823 = vlaneseq
    %v1824 = vshrl.u32 %v1823, 7
    %v1825 = vsub.s32 %v1822, %v1824
    %v1826 = vrot.slane %v1818, %v1825
    %v1828 = vunpack.c.l.s4 1966171168
    %v1829 = vunpack.c.0.s8 %v1828
    %v1830 = vlaneseq
    %v1831 = vshrl.u32 %v1830, 7
    %v1832 = vsub.s32 %v1829, %v1831
    %v1833 = vrot.slane %v1819, %v1832
    %v1834 = vlaneseq
    %v1835 = vshrl.u32 %v1834, 7
    %v1836 = vsub.s32 0, %v1835
    %v1837 = vrot.slane %v1826, %v1836
    %v1838 = vlaneseq
    %v1839 = vshrl.u32 %v1838, 7
    %v1840 = vsub.s32 0, %v1839
    %v1841 = vrot.slane %v1833, %v1840
    %1842 = vrot.lane.b32.xlu0 %v1837, 96
    %v1843 = vpop.permute.xlu0 %1842
    %1844 = vrot.lane.b32.xlu0 %v1841, 96
    %v1845 = vpop.permute.xlu0 %1844
    %1848 = vst.msk [vmem:[#allocation7 + $0x4] sm:$0x1] %vm263, %v1843
    %1849 = vst.msk [vmem:[#allocation7 + $0xc] sm:$0x1] %vm263, %v1845
    %v1850 = vld [vmem:[%s1 + $0x4] sm:$0x1]
    %v1851 = vld [vmem:[%s1 + $0xc] sm:$0x1]
    %v1852 = vld [vmem:[%s2 + $0x4] sm:$0x1]
    %v1853 = vld [vmem:[%s2 + $0xc] sm:$0x1]
    %1855 = vset.pattern.permute.xlu0 0
    %1856 = vperm.xlu0 %1855, %v1852
    %v1857 = vpop.permute.xlu0 %1856
    %1860 = vset.pattern.permute.xlu0 0
    %1861 = vperm.xlu0 %1860, %v1853
    %v1862 = vpop.permute.xlu0 %1861
    %v1864 = vrot.slane %v1682, 1
    %v1867 = vmul.f32 %v1857, %v1682
    %v1868 = vmul.f32 %v1862, %v1864
    %v1869 = vsub.f32 %v1850, %v1867
    %v1870 = vsub.f32 %v1851, %v1868
    %v1871 = vmax.f32 %v1869, 0.0
    %v1872 = vmax.f32 %v1870, 0.0
    %v1873 = vmin.f32 %v1871, 1.0
    %v1874 = vmin.f32 %v1872, 1.0
    %1875 = vst.msk [vmem:[#allocation3 + $0x4] sm:$0x1] %vm263, %v1873
    %1876 = vst.msk [vmem:[#allocation3 + $0xc] sm:$0x1] %vm263, %v1874
    %v1877 = vld [vmem:[%s0 + $0x5] sm:$0x1]
    %v1878 = vld [vmem:[%s0 + $0xd] sm:$0x1]
    %v1879 = vsel %vm70, %v1601, 0
    %1881 = vmatprep.subr.mxu0 0.0
    %1882 = vmatpush1.msra.mxu0 %v34
    %1883 = vmatprep.subr.mxu0 0.0
    %1884 = vmatpush1.msra.mxu0 %v35
    %1885 = vmatprep.subr.mxu0 0.0
    %1886 = vmatpush1.msra.mxu0 %v36
    %1887 = vmatprep.subr.mxu0 0.0
    %1888 = vmatpush1.msra.mxu0 %v37
    %1889 = vmatprep.subr.mxu0 0.0
    %1890 = vmatpush1.msra.mxu0 0.0
    %1891 = vmatprep.subr.mxu0 0.0
    %1892 = vmatpush1.msra.mxu0 0.0
    %1893 = vmatprep.subr.mxu0 0.0
    %1894 = vmatpush1.msra.mxu0 0.0
    %1895 = vmatprep.subr.mxu0 0.0
    %1896 = vmatpush1.msra.mxu0 0.0
    %1897 = vmatprep.subr.mxu0 0.0
    %1898 = vmatpush1.msra.mxu0 0.0
    %1899 = vmatprep.subr.mxu0 0.0
    %1900 = vmatpush1.msra.mxu0 0.0
    %1901 = vmatprep.subr.mxu0 0.0
    %1902 = vmatpush1.msra.mxu0 0.0
    %1903 = vmatprep.subr.mxu0 0.0
    %1904 = vmatpush1.msra.mxu0 0.0
    %1905 = vmatprep.subr.mxu0 0.0
    %1906 = vmatpush1.msra.mxu0 0.0
    %1907 = vmatprep.subr.mxu0 0.0
    %1908 = vmatpush1.msra.mxu0 0.0
    %1909 = vmatprep.subr.mxu0 0.0
    %1910 = vmatpush1.msra.mxu0 0.0
    %1911 = vmatprep.subr.mxu0 0.0
    %1912 = vmatpush1.msra.mxu0 0.0
    %1913 = vmatprep.subr.mxu0 0.0
    %1914 = vmatpush1.msra.mxu0 0.0
    %1915 = vmatprep.subr.mxu0 0.0
    %1916 = vmatpush1.msra.mxu0 0.0
    %1917 = vmatprep.subr.mxu0 0.0
    %1918 = vmatpush1.msra.mxu0 0.0
    %1919 = vmatprep.subr.mxu0 0.0
    %1920 = vmatpush1.msra.mxu0 0.0
    %1921 = vmatprep.subr.mxu0 0.0
    %1922 = vmatpush1.msra.mxu0 0.0
    %1923 = vmatprep.subr.mxu0 0.0
    %1924 = vmatpush1.msra.mxu0 0.0
    %1925 = vmatprep.subr.mxu0 0.0
    %1926 = vmatpush1.msra.mxu0 0.0
    %1927 = vmatprep.subr.mxu0 0.0
    %1928 = vmatpush1.msra.mxu0 0.0
    %1929 = vmatprep.subr.mxu0 0.0
    %1930 = vmatpush1.msra.mxu0 0.0
    %1931 = vmatprep.subr.mxu0 0.0
    %1932 = vmatpush1.msra.mxu0 0.0
    %1933 = vmatprep.subr.mxu0 0.0
    %1934 = vmatpush1.msra.mxu0 0.0
    %1935 = vmatprep.subr.mxu0 0.0
    %1936 = vmatpush1.msra.mxu0 0.0
    %1937 = vmatprep.subr.mxu0 0.0
    %1938 = vmatpush1.msra.mxu0 0.0
    %1939 = vmatprep.subr.mxu0 0.0
    %1940 = vmatpush1.msra.mxu0 0.0
    %1941 = vmatprep.subr.mxu0 0.0
    %1942 = vmatpush1.msra.mxu0 0.0
    %1943 = vmatprep.subr.mxu0 0.0
    %1944 = vmatpush1.msra.mxu0 0.0
    %1945 = vmatprep.mubr.f32.mxu0 0.0
    %1946 = vmatmul.mubr.f32.gmra.mrb[0].mxu0 %v1879
    %v1947 = vpop.f32.mrb[0].mxu0
    %v1948 = vadd.f32 0.0, %v1947
    %v1949 = vpop.f32.mrb[0].mxu0
    %1950 = vdwg.mxu0
    %v1952 = vrot.slane %v1948, 1
    %v1955 = vadd.f32 %v1877, %v1948
    %v1956 = vadd.f32 %v1878, %v1952
    %v1957 = vtanh.pop %v1955
    %v1958 = vtanh.pop %v1956
    %v1961 = vrot.slane %v1958, 7
    %v1962 = vsel %vm155, %v1961, %v1957
    %1964 = vst.msk [vmem:[#allocation2] sm:$0x3] %vm158, %v1962
    %1965 = vrot.lane.b32.xlu0 %v1682, 32
    %v1966 = vpop.permute.xlu0 %1965
    %1968 = vst.msk [vmem:[#allocation2] sm:$0x3] %vm160, %v1966
    %v1969 = vld [vmem:[#allocation2] sm:$0x3]
    %v1971 = vsel %vm163, %v1969, 0
    %1973 = vmatprep.subr.mxu0 0.0
    %1974 = vmatpush1.msra.mxu0 %v38
    %1975 = vmatprep.subr.mxu0 0.0
    %1976 = vmatpush1.msra.mxu0 %v39
    %1977 = vmatprep.subr.mxu0 0.0
    %1978 = vmatpush1.msra.mxu0 %v40
    %1979 = vmatprep.subr.mxu0 0.0
    %1980 = vmatpush1.msra.mxu0 %v41
    %1981 = vmatprep.subr.mxu0 0.0
    %1982 = vmatpush1.msra.mxu0 %v42
    %1983 = vmatprep.subr.mxu0 0.0
    %1984 = vmatpush1.msra.mxu0 %v43
    %1985 = vmatprep.subr.mxu0 0.0
    %1986 = vmatpush1.msra.mxu0 %v44
    %1987 = vmatprep.subr.mxu0 0.0
    %1988 = vmatpush1.msra.mxu0 %v45
    %1989 = vmatprep.subr.mxu0 0.0
    %1990 = vmatpush1.msra.mxu0 0.0
    %1991 = vmatprep.subr.mxu0 0.0
    %1992 = vmatpush1.msra.mxu0 0.0
    %1993 = vmatprep.subr.mxu0 0.0
    %1994 = vmatpush1.msra.mxu0 0.0
    %1995 = vmatprep.subr.mxu0 0.0
    %1996 = vmatpush1.msra.mxu0 0.0
    %1997 = vmatprep.subr.mxu0 0.0
    %1998 = vmatpush1.msra.mxu0 0.0
    %1999 = vmatprep.subr.mxu0 0.0
    %2000 = vmatpush1.msra.mxu0 0.0
    %2001 = vmatprep.subr.mxu0 0.0
    %2002 = vmatpush1.msra.mxu0 0.0
    %2003 = vmatprep.subr.mxu0 0.0
    %2004 = vmatpush1.msra.mxu0 0.0
    %2005 = vmatprep.subr.mxu0 0.0
    %2006 = vmatpush1.msra.mxu0 0.0
    %2007 = vmatprep.subr.mxu0 0.0
    %2008 = vmatpush1.msra.mxu0 0.0
    %2009 = vmatprep.subr.mxu0 0.0
    %2010 = vmatpush1.msra.mxu0 0.0
    %2011 = vmatprep.subr.mxu0 0.0
    %2012 = vmatpush1.msra.mxu0 0.0
    %2013 = vmatprep.subr.mxu0 0.0
    %2014 = vmatpush1.msra.mxu0 0.0
    %2015 = vmatprep.subr.mxu0 0.0
    %2016 = vmatpush1.msra.mxu0 0.0
    %2017 = vmatprep.subr.mxu0 0.0
    %2018 = vmatpush1.msra.mxu0 0.0
    %2019 = vmatprep.subr.mxu0 0.0
    %2020 = vmatpush1.msra.mxu0 0.0
    %2021 = vmatprep.subr.mxu0 0.0
    %2022 = vmatpush1.msra.mxu0 0.0
    %2023 = vmatprep.subr.mxu0 0.0
    %2024 = vmatpush1.msra.mxu0 0.0
    %2025 = vmatprep.subr.mxu0 0.0
    %2026 = vmatpush1.msra.mxu0 0.0
    %2027 = vmatprep.subr.mxu0 0.0
    %2028 = vmatpush1.msra.mxu0 0.0
    %2029 = vmatprep.subr.mxu0 0.0
    %2030 = vmatpush1.msra.mxu0 0.0
    %2031 = vmatprep.subr.mxu0 0.0
    %2032 = vmatpush1.msra.mxu0 0.0
    %2033 = vmatprep.subr.mxu0 0.0
    %2034 = vmatpush1.msra.mxu0 0.0
    %2035 = vmatprep.subr.mxu0 0.0
    %2036 = vmatpush1.msra.mxu0 0.0
    %2037 = vmatprep.mubr.f32.mxu0 0.0
    %2038 = vmatmul.mubr.f32.gmra.mrb[0].mxu0 %v1971
    %v2039 = vpop.f32.mrb[0].mxu0
    %v2040 = vadd.f32 %v59, %v2039
    %v2041 = vpop.f32.mrb[0].mxu0
    %2042 = vdwg.mxu0
    %v2043 = vtanh.pop %v2040
    %v2046 = vunpack.c.l.s4 1966171168
    %v2047 = vunpack.c.0.s8 %v2046
    %v2048 = vlaneseq
    %v2049 = vshrl.u32 %v2048, 7
    %v2050 = vsub.s32 %v2047, %v2049
    %v2051 = vrot.slane %v2043, %v2050
    %v2052 = vcombine.high %v2051, %v2051
    %v2054 = vunpack.c.l.s4 1966171168
    %v2055 = vunpack.c.0.s8 %v2054
    %v2056 = vlaneseq
    %v2057 = vshrl.u32 %v2056, 7
    %v2058 = vsub.s32 %v2055, %v2057
    %v2059 = vrot.slane %v2051, %v2058
    %v2061 = vunpack.c.l.s4 1966171168
    %v2062 = vunpack.c.0.s8 %v2061
    %v2063 = vlaneseq
    %v2064 = vshrl.u32 %v2063, 7
    %v2065 = vsub.s32 %v2062, %v2064
    %v2066 = vrot.slane %v2052, %v2065
    %2069 = vst.msk [vmem:[#allocation5 + $0x5] sm:$0x1] %vm263, %v2059
    %2070 = vst.msk [vmem:[#allocation5 + $0xd] sm:$0x1] %vm263, %v2066
    %2071 = vst.msk [vmem:[#allocation2] sm:$0x3] %vm158, %v2043
    %2072 = vst.msk [vmem:[#allocation2] sm:$0x3] %vm160, %v1810
    %v2073 = vld [vmem:[#allocation2] sm:$0x3]
    %v2075 = vsel %vm163, %v2073, 0
    %2077 = vmatprep.subr.mxu0 0.0
    %2078 = vmatpush1.msra.mxu0 %v46
    %2079 = vmatprep.subr.mxu0 0.0
    %2080 = vmatpush1.msra.mxu0 %v47
    %2081 = vmatprep.subr.mxu0 0.0
    %2082 = vmatpush1.msra.mxu0 %v48
    %2083 = vmatprep.subr.mxu0 0.0
    %2084 = vmatpush1.msra.mxu0 %v49
    %2085 = vmatprep.subr.mxu0 0.0
    %2086 = vmatpush1.msra.mxu0 %v50
    %2087 = vmatprep.subr.mxu0 0.0
    %2088 = vmatpush1.msra.mxu0 %v51
    %2089 = vmatprep.subr.mxu0 0.0
    %2090 = vmatpush1.msra.mxu0 %v52
    %2091 = vmatprep.subr.mxu0 0.0
    %2092 = vmatpush1.msra.mxu0 %v53
    %2093 = vmatprep.subr.mxu0 0.0
    %2094 = vmatpush1.msra.mxu0 0.0
    %2095 = vmatprep.subr.mxu0 0.0
    %2096 = vmatpush1.msra.mxu0 0.0
    %2097 = vmatprep.subr.mxu0 0.0
    %2098 = vmatpush1.msra.mxu0 0.0
    %2099 = vmatprep.subr.mxu0 0.0
    %2100 = vmatpush1.msra.mxu0 0.0
    %2101 = vmatprep.subr.mxu0 0.0
    %2102 = vmatpush1.msra.mxu0 0.0
    %2103 = vmatprep.subr.mxu0 0.0
    %2104 = vmatpush1.msra.mxu0 0.0
    %2105 = vmatprep.subr.mxu0 0.0
    %2106 = vmatpush1.msra.mxu0 0.0
    %2107 = vmatprep.subr.mxu0 0.0
    %2108 = vmatpush1.msra.mxu0 0.0
    %2109 = vmatprep.subr.mxu0 0.0
    %2110 = vmatpush1.msra.mxu0 0.0
    %2111 = vmatprep.subr.mxu0 0.0
    %2112 = vmatpush1.msra.mxu0 0.0
    %2113 = vmatprep.subr.mxu0 0.0
    %2114 = vmatpush1.msra.mxu0 0.0
    %2115 = vmatprep.subr.mxu0 0.0
    %2116 = vmatpush1.msra.mxu0 0.0
    %2117 = vmatprep.subr.mxu0 0.0
    %2118 = vmatpush1.msra.mxu0 0.0
    %2119 = vmatprep.subr.mxu0 0.0
    %2120 = vmatpush1.msra.mxu0 0.0
    %2121 = vmatprep.subr.mxu0 0.0
    %2122 = vmatpush1.msra.mxu0 0.0
    %2123 = vmatprep.subr.mxu0 0.0
    %2124 = vmatpush1.msra.mxu0 0.0
    %2125 = vmatprep.subr.mxu0 0.0
    %2126 = vmatpush1.msra.mxu0 0.0
    %2127 = vmatprep.subr.mxu0 0.0
    %2128 = vmatpush1.msra.mxu0 0.0
    %2129 = vmatprep.subr.mxu0 0.0
    %2130 = vmatpush1.msra.mxu0 0.0
    %2131 = vmatprep.subr.mxu0 0.0
    %2132 = vmatpush1.msra.mxu0 0.0
    %2133 = vmatprep.subr.mxu0 0.0
    %2134 = vmatpush1.msra.mxu0 0.0
    %2135 = vmatprep.subr.mxu0 0.0
    %2136 = vmatpush1.msra.mxu0 0.0
    %2137 = vmatprep.subr.mxu0 0.0
    %2138 = vmatpush1.msra.mxu0 0.0
    %2139 = vmatprep.subr.mxu0 0.0
    %2140 = vmatpush1.msra.mxu0 0.0
    %2141 = vmatprep.mubr.f32.mxu0 0.0
    %2142 = vmatmul.mubr.f32.gmra.mrb[0].mxu0 %v2075
    %v2143 = vpop.f32.mrb[0].mxu0
    %v2144 = vadd.f32 %v66, %v2143
    %v2145 = vpop.f32.mrb[0].mxu0
    %2146 = vdwg.mxu0
    %v2147 = vxor.u32 %v2144, 2147483648
    %v2148 = vmul.f32 %v2147, 1.442695
    %v2149 = vpow.pop %v2148
    %v2150 = vadd.f32 %v2149, 1.0
    %v2151 = vrcp.pop %v2150
    %v2152 = vmul.f32 1.0, %v2151
    %2154 = vrot.lane.b32.xlu0 %v2144, 32
    %v2155 = vpop.permute.xlu0 %2154
    %v2157 = vmul.f32 %v2152, %v2155
    %2159 = vrot.lane.b32.xlu0 %v2157, 64
    %v2160 = vpop.permute.xlu0 %2159
    %v2162 = vadd.f32 %v2144, %v2160
    %v2163 = vtanh.pop %v2162
    %v2164 = vsub.f32 1.0, %v2152
    %2166 = vrot.lane.b32.xlu0 %v2163, 96
    %v2167 = vpop.permute.xlu0 %2166
    %v2169 = vmul.f32 %v2164, %v2167
    %v2170 = vmul.f32 %v2152, %v1810
    %v2171 = vadd.f32 %v2169, %v2170
    %v2174 = vunpack.c.l.s4 1966171168
    %v2175 = vunpack.c.0.s8 %v2174
    %v2176 = vlaneseq
    %v2177 = vshrl.u32 %v2176, 7
    %v2178 = vsub.s32 %v2175, %v2177
    %v2179 = vrot.slane %v2171, %v2178
    %v2180 = vcombine.high %v2179, %v2179
    %v2182 = vunpack.c.l.s4 1966171168
    %v2183 = vunpack.c.0.s8 %v2182
    %v2184 = vlaneseq
    %v2185 = vshrl.u32 %v2184, 7
    %v2186 = vsub.s32 %v2183, %v2185
    %v2187 = vrot.slane %v2179, %v2186
    %v2189 = vunpack.c.l.s4 1966171168
    %v2190 = vunpack.c.0.s8 %v2189
    %v2191 = vlaneseq
    %v2192 = vshrl.u32 %v2191, 7
    %v2193 = vsub.s32 %v2190, %v2192
    %v2194 = vrot.slane %v2180, %v2193
    %v2195 = vlaneseq
    %v2196 = vshrl.u32 %v2195, 7
    %v2197 = vsub.s32 0, %v2196
    %v2198 = vrot.slane %v2187, %v2197
    %v2199 = vlaneseq
    %v2200 = vshrl.u32 %v2199, 7
    %v2201 = vsub.s32 0, %v2200
    %v2202 = vrot.slane %v2194, %v2201
    %2203 = vrot.lane.b32.xlu0 %v2198, 96
    %v2204 = vpop.permute.xlu0 %2203
    %2205 = vrot.lane.b32.xlu0 %v2202, 96
    %v2206 = vpop.permute.xlu0 %2205
    %2209 = vst.msk [vmem:[#allocation7 + $0x5] sm:$0x1] %vm263, %v2204
    %2210 = vst.msk [vmem:[#allocation7 + $0xd] sm:$0x1] %vm263, %v2206
    %v2211 = vld [vmem:[%s1 + $0x5] sm:$0x1]
    %v2212 = vld [vmem:[%s1 + $0xd] sm:$0x1]
    %v2213 = vld [vmem:[%s2 + $0x5] sm:$0x1]
    %v2214 = vld [vmem:[%s2 + $0xd] sm:$0x1]
    %2216 = vset.pattern.permute.xlu0 0
    %2217 = vperm.xlu0 %2216, %v2213
    %v2218 = vpop.permute.xlu0 %2217
    %2221 = vset.pattern.permute.xlu0 0
    %2222 = vperm.xlu0 %2221, %v2214
    %v2223 = vpop.permute.xlu0 %2222
    %v2225 = vrot.slane %v2043, 1
    %v2228 = vmul.f32 %v2218, %v2043
    %v2229 = vmul.f32 %v2223, %v2225
    %v2230 = vsub.f32 %v2211, %v2228
    %v2231 = vsub.f32 %v2212, %v2229
    %v2232 = vmax.f32 %v2230, 0.0
    %v2233 = vmax.f32 %v2231, 0.0
    %v2234 = vmin.f32 %v2232, 1.0
    %v2235 = vmin.f32 %v2233, 1.0
    %2236 = vst.msk [vmem:[#allocation3 + $0x5] sm:$0x1] %vm263, %v2234
    %2237 = vst.msk [vmem:[#allocation3 + $0xd] sm:$0x1] %vm263, %v2235
    %v2238 = vld [vmem:[%s0 + $0x6] sm:$0x1]
    %v2239 = vld [vmem:[%s0 + $0xe] sm:$0x1]
    %v2240 = vsel %vm70, %v1962, 0
    %2242 = vmatprep.subr.mxu0 0.0
    %2243 = vmatpush1.msra.mxu0 %v34
    %2244 = vmatprep.subr.mxu0 0.0
    %2245 = vmatpush1.msra.mxu0 %v35
    %2246 = vmatprep.subr.mxu0 0.0
    %2247 = vmatpush1.msra.mxu0 %v36
    %2248 = vmatprep.subr.mxu0 0.0
    %2249 = vmatpush1.msra.mxu0 %v37
    %2250 = vmatprep.subr.mxu0 0.0
    %2251 = vmatpush1.msra.mxu0 0.0
    %2252 = vmatprep.subr.mxu0 0.0
    %2253 = vmatpush1.msra.mxu0 0.0
    %2254 = vmatprep.subr.mxu0 0.0
    %2255 = vmatpush1.msra.mxu0 0.0
    %2256 = vmatprep.subr.mxu0 0.0
    %2257 = vmatpush1.msra.mxu0 0.0
    %2258 = vmatprep.subr.mxu0 0.0
    %2259 = vmatpush1.msra.mxu0 0.0
    %2260 = vmatprep.subr.mxu0 0.0
    %2261 = vmatpush1.msra.mxu0 0.0
    %2262 = vmatprep.subr.mxu0 0.0
    %2263 = vmatpush1.msra.mxu0 0.0
    %2264 = vmatprep.subr.mxu0 0.0
    %2265 = vmatpush1.msra.mxu0 0.0
    %2266 = vmatprep.subr.mxu0 0.0
    %2267 = vmatpush1.msra.mxu0 0.0
    %2268 = vmatprep.subr.mxu0 0.0
    %2269 = vmatpush1.msra.mxu0 0.0
    %2270 = vmatprep.subr.mxu0 0.0
    %2271 = vmatpush1.msra.mxu0 0.0
    %2272 = vmatprep.subr.mxu0 0.0
    %2273 = vmatpush1.msra.mxu0 0.0
    %2274 = vmatprep.subr.mxu0 0.0
    %2275 = vmatpush1.msra.mxu0 0.0
    %2276 = vmatprep.subr.mxu0 0.0
    %2277 = vmatpush1.msra.mxu0 0.0
    %2278 = vmatprep.subr.mxu0 0.0
    %2279 = vmatpush1.msra.mxu0 0.0
    %2280 = vmatprep.subr.mxu0 0.0
    %2281 = vmatpush1.msra.mxu0 0.0
    %2282 = vmatprep.subr.mxu0 0.0
    %2283 = vmatpush1.msra.mxu0 0.0
    %2284 = vmatprep.subr.mxu0 0.0
    %2285 = vmatpush1.msra.mxu0 0.0
    %2286 = vmatprep.subr.mxu0 0.0
    %2287 = vmatpush1.msra.mxu0 0.0
    %2288 = vmatprep.subr.mxu0 0.0
    %2289 = vmatpush1.msra.mxu0 0.0
    %2290 = vmatprep.subr.mxu0 0.0
    %2291 = vmatpush1.msra.mxu0 0.0
    %2292 = vmatprep.subr.mxu0 0.0
    %2293 = vmatpush1.msra.mxu0 0.0
    %2294 = vmatprep.subr.mxu0 0.0
    %2295 = vmatpush1.msra.mxu0 0.0
    %2296 = vmatprep.subr.mxu0 0.0
    %2297 = vmatpush1.msra.mxu0 0.0
    %2298 = vmatprep.subr.mxu0 0.0
    %2299 = vmatpush1.msra.mxu0 0.0
    %2300 = vmatprep.subr.mxu0 0.0
    %2301 = vmatpush1.msra.mxu0 0.0
    %2302 = vmatprep.subr.mxu0 0.0
    %2303 = vmatpush1.msra.mxu0 0.0
    %2304 = vmatprep.subr.mxu0 0.0
    %2305 = vmatpush1.msra.mxu0 0.0
    %2306 = vmatprep.mubr.f32.mxu0 0.0
    %2307 = vmatmul.mubr.f32.gmra.mrb[0].mxu0 %v2240
    %v2308 = vpop.f32.mrb[0].mxu0
    %v2309 = vadd.f32 0.0, %v2308
    %v2310 = vpop.f32.mrb[0].mxu0
    %2311 = vdwg.mxu0
    %v2313 = vrot.slane %v2309, 1
    %v2316 = vadd.f32 %v2238, %v2309
    %v2317 = vadd.f32 %v2239, %v2313
    %v2318 = vtanh.pop %v2316
    %v2319 = vtanh.pop %v2317
    %v2322 = vrot.slane %v2319, 7
    %v2323 = vsel %vm155, %v2322, %v2318
    %2325 = vst.msk [vmem:[#allocation2] sm:$0x3] %vm158, %v2323
    %2326 = vrot.lane.b32.xlu0 %v2043, 32
    %v2327 = vpop.permute.xlu0 %2326
    %2329 = vst.msk [vmem:[#allocation2] sm:$0x3] %vm160, %v2327
    %v2330 = vld [vmem:[#allocation2] sm:$0x3]
    %v2332 = vsel %vm163, %v2330, 0
    %2334 = vmatprep.subr.mxu0 0.0
    %2335 = vmatpush1.msra.mxu0 %v38
    %2336 = vmatprep.subr.mxu0 0.0
    %2337 = vmatpush1.msra.mxu0 %v39
    %2338 = vmatprep.subr.mxu0 0.0
    %2339 = vmatpush1.msra.mxu0 %v40
    %2340 = vmatprep.subr.mxu0 0.0
    %2341 = vmatpush1.msra.mxu0 %v41
    %2342 = vmatprep.subr.mxu0 0.0
    %2343 = vmatpush1.msra.mxu0 %v42
    %2344 = vmatprep.subr.mxu0 0.0
    %2345 = vmatpush1.msra.mxu0 %v43
    %2346 = vmatprep.subr.mxu0 0.0
    %2347 = vmatpush1.msra.mxu0 %v44
    %2348 = vmatprep.subr.mxu0 0.0
    %2349 = vmatpush1.msra.mxu0 %v45
    %2350 = vmatprep.subr.mxu0 0.0
    %2351 = vmatpush1.msra.mxu0 0.0
    %2352 = vmatprep.subr.mxu0 0.0
    %2353 = vmatpush1.msra.mxu0 0.0
    %2354 = vmatprep.subr.mxu0 0.0
    %2355 = vmatpush1.msra.mxu0 0.0
    %2356 = vmatprep.subr.mxu0 0.0
    %2357 = vmatpush1.msra.mxu0 0.0
    %2358 = vmatprep.subr.mxu0 0.0
    %2359 = vmatpush1.msra.mxu0 0.0
    %2360 = vmatprep.subr.mxu0 0.0
    %2361 = vmatpush1.msra.mxu0 0.0
    %2362 = vmatprep.subr.mxu0 0.0
    %2363 = vmatpush1.msra.mxu0 0.0
    %2364 = vmatprep.subr.mxu0 0.0
    %2365 = vmatpush1.msra.mxu0 0.0
    %2366 = vmatprep.subr.mxu0 0.0
    %2367 = vmatpush1.msra.mxu0 0.0
    %2368 = vmatprep.subr.mxu0 0.0
    %2369 = vmatpush1.msra.mxu0 0.0
    %2370 = vmatprep.subr.mxu0 0.0
    %2371 = vmatpush1.msra.mxu0 0.0
    %2372 = vmatprep.subr.mxu0 0.0
    %2373 = vmatpush1.msra.mxu0 0.0
    %2374 = vmatprep.subr.mxu0 0.0
    %2375 = vmatpush1.msra.mxu0 0.0
    %2376 = vmatprep.subr.mxu0 0.0
    %2377 = vmatpush1.msra.mxu0 0.0
    %2378 = vmatprep.subr.mxu0 0.0
    %2379 = vmatpush1.msra.mxu0 0.0
    %2380 = vmatprep.subr.mxu0 0.0
    %2381 = vmatpush1.msra.mxu0 0.0
    %2382 = vmatprep.subr.mxu0 0.0
    %2383 = vmatpush1.msra.mxu0 0.0
    %2384 = vmatprep.subr.mxu0 0.0
    %2385 = vmatpush1.msra.mxu0 0.0
    %2386 = vmatprep.subr.mxu0 0.0
    %2387 = vmatpush1.msra.mxu0 0.0
    %2388 = vmatprep.subr.mxu0 0.0
    %2389 = vmatpush1.msra.mxu0 0.0
    %2390 = vmatprep.subr.mxu0 0.0
    %2391 = vmatpush1.msra.mxu0 0.0
    %2392 = vmatprep.subr.mxu0 0.0
    %2393 = vmatpush1.msra.mxu0 0.0
    %2394 = vmatprep.subr.mxu0 0.0
    %2395 = vmatpush1.msra.mxu0 0.0
    %2396 = vmatprep.subr.mxu0 0.0
    %2397 = vmatpush1.msra.mxu0 0.0
    %2398 = vmatprep.mubr.f32.mxu0 0.0
    %2399 = vmatmul.mubr.f32.gmra.mrb[0].mxu0 %v2332
    %v2400 = vpop.f32.mrb[0].mxu0
    %v2401 = vadd.f32 %v59, %v2400
    %v2402 = vpop.f32.mrb[0].mxu0
    %2403 = vdwg.mxu0
    %v2404 = vtanh.pop %v2401
    %v2407 = vunpack.c.l.s4 1966171168
    %v2408 = vunpack.c.0.s8 %v2407
    %v2409 = vlaneseq
    %v2410 = vshrl.u32 %v2409, 7
    %v2411 = vsub.s32 %v2408, %v2410
    %v2412 = vrot.slane %v2404, %v2411
    %v2413 = vcombine.high %v2412, %v2412
    %v2415 = vunpack.c.l.s4 1966171168
    %v2416 = vunpack.c.0.s8 %v2415
    %v2417 = vlaneseq
    %v2418 = vshrl.u32 %v2417, 7
    %v2419 = vsub.s32 %v2416, %v2418
    %v2420 = vrot.slane %v2412, %v2419
    %v2422 = vunpack.c.l.s4 1966171168
    %v2423 = vunpack.c.0.s8 %v2422
    %v2424 = vlaneseq
    %v2425 = vshrl.u32 %v2424, 7
    %v2426 = vsub.s32 %v2423, %v2425
    %v2427 = vrot.slane %v2413, %v2426
    %2430 = vst.msk [vmem:[#allocation5 + $0x6] sm:$0x1] %vm263, %v2420
    %2431 = vst.msk [vmem:[#allocation5 + $0xe] sm:$0x1] %vm263, %v2427
    %2432 = vst.msk [vmem:[#allocation2] sm:$0x3] %vm158, %v2404
    %2433 = vst.msk [vmem:[#allocation2] sm:$0x3] %vm160, %v2171
    %v2434 = vld [vmem:[#allocation2] sm:$0x3]
    %v2436 = vsel %vm163, %v2434, 0
    %2438 = vmatprep.subr.mxu0 0.0
    %2439 = vmatpush1.msra.mxu0 %v46
    %2440 = vmatprep.subr.mxu0 0.0
    %2441 = vmatpush1.msra.mxu0 %v47
    %2442 = vmatprep.subr.mxu0 0.0
    %2443 = vmatpush1.msra.mxu0 %v48
    %2444 = vmatprep.subr.mxu0 0.0
    %2445 = vmatpush1.msra.mxu0 %v49
    %2446 = vmatprep.subr.mxu0 0.0
    %2447 = vmatpush1.msra.mxu0 %v50
    %2448 = vmatprep.subr.mxu0 0.0
    %2449 = vmatpush1.msra.mxu0 %v51
    %2450 = vmatprep.subr.mxu0 0.0
    %2451 = vmatpush1.msra.mxu0 %v52
    %2452 = vmatprep.subr.mxu0 0.0
    %2453 = vmatpush1.msra.mxu0 %v53
    %2454 = vmatprep.subr.mxu0 0.0
    %2455 = vmatpush1.msra.mxu0 0.0
    %2456 = vmatprep.subr.mxu0 0.0
    %2457 = vmatpush1.msra.mxu0 0.0
    %2458 = vmatprep.subr.mxu0 0.0
    %2459 = vmatpush1.msra.mxu0 0.0
    %2460 = vmatprep.subr.mxu0 0.0
    %2461 = vmatpush1.msra.mxu0 0.0
    %2462 = vmatprep.subr.mxu0 0.0
    %2463 = vmatpush1.msra.mxu0 0.0
    %2464 = vmatprep.subr.mxu0 0.0
    %2465 = vmatpush1.msra.mxu0 0.0
    %2466 = vmatprep.subr.mxu0 0.0
    %2467 = vmatpush1.msra.mxu0 0.0
    %2468 = vmatprep.subr.mxu0 0.0
    %2469 = vmatpush1.msra.mxu0 0.0
    %2470 = vmatprep.subr.mxu0 0.0
    %2471 = vmatpush1.msra.mxu0 0.0
    %2472 = vmatprep.subr.mxu0 0.0
    %2473 = vmatpush1.msra.mxu0 0.0
    %2474 = vmatprep.subr.mxu0 0.0
    %2475 = vmatpush1.msra.mxu0 0.0
    %2476 = vmatprep.subr.mxu0 0.0
    %2477 = vmatpush1.msra.mxu0 0.0
    %2478 = vmatprep.subr.mxu0 0.0
    %2479 = vmatpush1.msra.mxu0 0.0
    %2480 = vmatprep.subr.mxu0 0.0
    %2481 = vmatpush1.msra.mxu0 0.0
    %2482 = vmatprep.subr.mxu0 0.0
    %2483 = vmatpush1.msra.mxu0 0.0
    %2484 = vmatprep.subr.mxu0 0.0
    %2485 = vmatpush1.msra.mxu0 0.0
    %2486 = vmatprep.subr.mxu0 0.0
    %2487 = vmatpush1.msra.mxu0 0.0
    %2488 = vmatprep.subr.mxu0 0.0
    %2489 = vmatpush1.msra.mxu0 0.0
    %2490 = vmatprep.subr.mxu0 0.0
    %2491 = vmatpush1.msra.mxu0 0.0
    %2492 = vmatprep.subr.mxu0 0.0
    %2493 = vmatpush1.msra.mxu0 0.0
    %2494 = vmatprep.subr.mxu0 0.0
    %2495 = vmatpush1.msra.mxu0 0.0
    %2496 = vmatprep.subr.mxu0 0.0
    %2497 = vmatpush1.msra.mxu0 0.0
    %2498 = vmatprep.subr.mxu0 0.0
    %2499 = vmatpush1.msra.mxu0 0.0
    %2500 = vmatprep.subr.mxu0 0.0
    %2501 = vmatpush1.msra.mxu0 0.0
    %2502 = vmatprep.mubr.f32.mxu0 0.0
    %2503 = vmatmul.mubr.f32.gmra.mrb[0].mxu0 %v2436
    %v2504 = vpop.f32.mrb[0].mxu0
    %v2505 = vadd.f32 %v66, %v2504
    %v2506 = vpop.f32.mrb[0].mxu0
    %2507 = vdwg.mxu0
    %v2508 = vxor.u32 %v2505, 2147483648
    %v2509 = vmul.f32 %v2508, 1.442695
    %v2510 = vpow.pop %v2509
    %v2511 = vadd.f32 %v2510, 1.0
    %v2512 = vrcp.pop %v2511
    %v2513 = vmul.f32 1.0, %v2512
    %2515 = vrot.lane.b32.xlu0 %v2505, 32
    %v2516 = vpop.permute.xlu0 %2515
    %v2518 = vmul.f32 %v2513, %v2516
    %2520 = vrot.lane.b32.xlu0 %v2518, 64
    %v2521 = vpop.permute.xlu0 %2520
    %v2523 = vadd.f32 %v2505, %v2521
    %v2524 = vtanh.pop %v2523
    %v2525 = vsub.f32 1.0, %v2513
    %2527 = vrot.lane.b32.xlu0 %v2524, 96
    %v2528 = vpop.permute.xlu0 %2527
    %v2530 = vmul.f32 %v2525, %v2528
    %v2531 = vmul.f32 %v2513, %v2171
    %v2532 = vadd.f32 %v2530, %v2531
    %v2535 = vunpack.c.l.s4 1966171168
    %v2536 = vunpack.c.0.s8 %v2535
    %v2537 = vlaneseq
    %v2538 = vshrl.u32 %v2537, 7
    %v2539 = vsub.s32 %v2536, %v2538
    %v2540 = vrot.slane %v2532, %v2539
    %v2541 = vcombine.high %v2540, %v2540
    %v2543 = vunpack.c.l.s4 1966171168
    %v2544 = vunpack.c.0.s8 %v2543
    %v2545 = vlaneseq
    %v2546 = vshrl.u32 %v2545, 7
    %v2547 = vsub.s32 %v2544, %v2546
    %v2548 = vrot.slane %v2540, %v2547
    %v2550 = vunpack.c.l.s4 1966171168
    %v2551 = vunpack.c.0.s8 %v2550
    %v2552 = vlaneseq
    %v2553 = vshrl.u32 %v2552, 7
    %v2554 = vsub.s32 %v2551, %v2553
    %v2555 = vrot.slane %v2541, %v2554
    %v2556 = vlaneseq
    %v2557 = vshrl.u32 %v2556, 7
    %v2558 = vsub.s32 0, %v2557
    %v2559 = vrot.slane %v2548, %v2558
    %v2560 = vlaneseq
    %v2561 = vshrl.u32 %v2560, 7
    %v2562 = vsub.s32 0, %v2561
    %v2563 = vrot.slane %v2555, %v2562
    %2564 = vrot.lane.b32.xlu0 %v2559, 96
    %v2565 = vpop.permute.xlu0 %2564
    %2566 = vrot.lane.b32.xlu0 %v2563, 96
    %v2567 = vpop.permute.xlu0 %2566
    %2570 = vst.msk [vmem:[#allocation7 + $0x6] sm:$0x1] %vm263, %v2565
    %2571 = vst.msk [vmem:[#allocation7 + $0xe] sm:$0x1] %vm263, %v2567
    %v2572 = vld [vmem:[%s1 + $0x6] sm:$0x1]
    %v2573 = vld [vmem:[%s1 + $0xe] sm:$0x1]
    %v2574 = vld [vmem:[%s2 + $0x6] sm:$0x1]
    %v2575 = vld [vmem:[%s2 + $0xe] sm:$0x1]
    %2577 = vset.pattern.permute.xlu0 0
    %2578 = vperm.xlu0 %2577, %v2574
    %v2579 = vpop.permute.xlu0 %2578
    %2582 = vset.pattern.permute.xlu0 0
    %2583 = vperm.xlu0 %2582, %v2575
    %v2584 = vpop.permute.xlu0 %2583
    %v2586 = vrot.slane %v2404, 1
    %v2589 = vmul.f32 %v2579, %v2404
    %v2590 = vmul.f32 %v2584, %v2586
    %v2591 = vsub.f32 %v2572, %v2589
    %v2592 = vsub.f32 %v2573, %v2590
    %v2593 = vmax.f32 %v2591, 0.0
    %v2594 = vmax.f32 %v2592, 0.0
    %v2595 = vmin.f32 %v2593, 1.0
    %v2596 = vmin.f32 %v2594, 1.0
    %2597 = vst.msk [vmem:[#allocation3 + $0x6] sm:$0x1] %vm263, %v2595
    %2598 = vst.msk [vmem:[#allocation3 + $0xe] sm:$0x1] %vm263, %v2596
    %v2599 = vld [vmem:[%s0 + $0x7] sm:$0x1]
    %v2600 = vld [vmem:[%s0 + $0xf] sm:$0x1]
    %v2601 = vsel %vm70, %v2323, 0
    %2603 = vmatprep.subr.mxu0 0.0
    %2604 = vmatpush1.msra.mxu0 %v34
    %2605 = vmatprep.subr.mxu0 0.0
    %2606 = vmatpush1.msra.mxu0 %v35
    %2607 = vmatprep.subr.mxu0 0.0
    %2608 = vmatpush1.msra.mxu0 %v36
    %2609 = vmatprep.subr.mxu0 0.0
    %2610 = vmatpush1.msra.mxu0 %v37
    %2611 = vmatprep.subr.mxu0 0.0
    %2612 = vmatpush1.msra.mxu0 0.0
    %2613 = vmatprep.subr.mxu0 0.0
    %2614 = vmatpush1.msra.mxu0 0.0
    %2615 = vmatprep.subr.mxu0 0.0
    %2616 = vmatpush1.msra.mxu0 0.0
    %2617 = vmatprep.subr.mxu0 0.0
    %2618 = vmatpush1.msra.mxu0 0.0
    %2619 = vmatprep.subr.mxu0 0.0
    %2620 = vmatpush1.msra.mxu0 0.0
    %2621 = vmatprep.subr.mxu0 0.0
    %2622 = vmatpush1.msra.mxu0 0.0
    %2623 = vmatprep.subr.mxu0 0.0
    %2624 = vmatpush1.msra.mxu0 0.0
    %2625 = vmatprep.subr.mxu0 0.0
    %2626 = vmatpush1.msra.mxu0 0.0
    %2627 = vmatprep.subr.mxu0 0.0
    %2628 = vmatpush1.msra.mxu0 0.0
    %2629 = vmatprep.subr.mxu0 0.0
    %2630 = vmatpush1.msra.mxu0 0.0
    %2631 = vmatprep.subr.mxu0 0.0
    %2632 = vmatpush1.msra.mxu0 0.0
    %2633 = vmatprep.subr.mxu0 0.0
    %2634 = vmatpush1.msra.mxu0 0.0
    %2635 = vmatprep.subr.mxu0 0.0
    %2636 = vmatpush1.msra.mxu0 0.0
    %2637 = vmatprep.subr.mxu0 0.0
    %2638 = vmatpush1.msra.mxu0 0.0
    %2639 = vmatprep.subr.mxu0 0.0
    %2640 = vmatpush1.msra.mxu0 0.0
    %2641 = vmatprep.subr.mxu0 0.0
    %2642 = vmatpush1.msra.mxu0 0.0
    %2643 = vmatprep.subr.mxu0 0.0
    %2644 = vmatpush1.msra.mxu0 0.0
    %2645 = vmatprep.subr.mxu0 0.0
    %2646 = vmatpush1.msra.mxu0 0.0
    %2647 = vmatprep.subr.mxu0 0.0
    %2648 = vmatpush1.msra.mxu0 0.0
    %2649 = vmatprep.subr.mxu0 0.0
    %2650 = vmatpush1.msra.mxu0 0.0
    %2651 = vmatprep.subr.mxu0 0.0
    %2652 = vmatpush1.msra.mxu0 0.0
    %2653 = vmatprep.subr.mxu0 0.0
    %2654 = vmatpush1.msra.mxu0 0.0
    %2655 = vmatprep.subr.mxu0 0.0
    %2656 = vmatpush1.msra.mxu0 0.0
    %2657 = vmatprep.subr.mxu0 0.0
    %2658 = vmatpush1.msra.mxu0 0.0
    %2659 = vmatprep.subr.mxu0 0.0
    %2660 = vmatpush1.msra.mxu0 0.0
    %2661 = vmatprep.subr.mxu0 0.0
    %2662 = vmatpush1.msra.mxu0 0.0
    %2663 = vmatprep.subr.mxu0 0.0
    %2664 = vmatpush1.msra.mxu0 0.0
    %2665 = vmatprep.subr.mxu0 0.0
    %2666 = vmatpush1.msra.mxu0 0.0
    %2667 = vmatprep.mubr.f32.mxu0 0.0
    %2668 = vmatmul.mubr.f32.gmra.mrb[0].mxu0 %v2601
    %v2669 = vpop.f32.mrb[0].mxu0
    %v2670 = vadd.f32 0.0, %v2669
    %v2671 = vpop.f32.mrb[0].mxu0
    %2672 = vdwg.mxu0
    %v2674 = vrot.slane %v2670, 1
    %v2677 = vadd.f32 %v2599, %v2670
    %v2678 = vadd.f32 %v2600, %v2674
    %v2679 = vtanh.pop %v2677
    %v2680 = vtanh.pop %v2678
    %v2683 = vrot.slane %v2680, 7
    %v2684 = vsel %vm155, %v2683, %v2679
    %2686 = vst.msk [vmem:[#allocation2] sm:$0x3] %vm158, %v2684
    %2687 = vrot.lane.b32.xlu0 %v2404, 32
    %v2688 = vpop.permute.xlu0 %2687
    %2690 = vst.msk [vmem:[#allocation2] sm:$0x3] %vm160, %v2688
    %v2691 = vld [vmem:[#allocation2] sm:$0x3]
    %v2693 = vsel %vm163, %v2691, 0
    %2695 = vmatprep.subr.mxu0 0.0
    %2696 = vmatpush1.msra.mxu0 %v38
    %2697 = vmatprep.subr.mxu0 0.0
    %2698 = vmatpush1.msra.mxu0 %v39
    %2699 = vmatprep.subr.mxu0 0.0
    %2700 = vmatpush1.msra.mxu0 %v40
    %2701 = vmatprep.subr.mxu0 0.0
    %2702 = vmatpush1.msra.mxu0 %v41
    %2703 = vmatprep.subr.mxu0 0.0
    %2704 = vmatpush1.msra.mxu0 %v42
    %2705 = vmatprep.subr.mxu0 0.0
    %2706 = vmatpush1.msra.mxu0 %v43
    %2707 = vmatprep.subr.mxu0 0.0
    %2708 = vmatpush1.msra.mxu0 %v44
    %2709 = vmatprep.subr.mxu0 0.0
    %2710 = vmatpush1.msra.mxu0 %v45
    %2711 = vmatprep.subr.mxu0 0.0
    %2712 = vmatpush1.msra.mxu0 0.0
    %2713 = vmatprep.subr.mxu0 0.0
    %2714 = vmatpush1.msra.mxu0 0.0
    %2715 = vmatprep.subr.mxu0 0.0
    %2716 = vmatpush1.msra.mxu0 0.0
    %2717 = vmatprep.subr.mxu0 0.0
    %2718 = vmatpush1.msra.mxu0 0.0
    %2719 = vmatprep.subr.mxu0 0.0
    %2720 = vmatpush1.msra.mxu0 0.0
    %2721 = vmatprep.subr.mxu0 0.0
    %2722 = vmatpush1.msra.mxu0 0.0
    %2723 = vmatprep.subr.mxu0 0.0
    %2724 = vmatpush1.msra.mxu0 0.0
    %2725 = vmatprep.subr.mxu0 0.0
    %2726 = vmatpush1.msra.mxu0 0.0
    %2727 = vmatprep.subr.mxu0 0.0
    %2728 = vmatpush1.msra.mxu0 0.0
    %2729 = vmatprep.subr.mxu0 0.0
    %2730 = vmatpush1.msra.mxu0 0.0
    %2731 = vmatprep.subr.mxu0 0.0
    %2732 = vmatpush1.msra.mxu0 0.0
    %2733 = vmatprep.subr.mxu0 0.0
    %2734 = vmatpush1.msra.mxu0 0.0
    %2735 = vmatprep.subr.mxu0 0.0
    %2736 = vmatpush1.msra.mxu0 0.0
    %2737 = vmatprep.subr.mxu0 0.0
    %2738 = vmatpush1.msra.mxu0 0.0
    %2739 = vmatprep.subr.mxu0 0.0
    %2740 = vmatpush1.msra.mxu0 0.0
    %2741 = vmatprep.subr.mxu0 0.0
    %2742 = vmatpush1.msra.mxu0 0.0
    %2743 = vmatprep.subr.mxu0 0.0
    %2744 = vmatpush1.msra.mxu0 0.0
    %2745 = vmatprep.subr.mxu0 0.0
    %2746 = vmatpush1.msra.mxu0 0.0
    %2747 = vmatprep.subr.mxu0 0.0
    %2748 = vmatpush1.msra.mxu0 0.0
    %2749 = vmatprep.subr.mxu0 0.0
    %2750 = vmatpush1.msra.mxu0 0.0
    %2751 = vmatprep.subr.mxu0 0.0
    %2752 = vmatpush1.msra.mxu0 0.0
    %2753 = vmatprep.subr.mxu0 0.0
    %2754 = vmatpush1.msra.mxu0 0.0
    %2755 = vmatprep.subr.mxu0 0.0
    %2756 = vmatpush1.msra.mxu0 0.0
    %2757 = vmatprep.subr.mxu0 0.0
    %2758 = vmatpush1.msra.mxu0 0.0
    %2759 = vmatprep.mubr.f32.mxu0 0.0
    %2760 = vmatmul.mubr.f32.gmra.mrb[0].mxu0 %v2693
    %v2761 = vpop.f32.mrb[0].mxu0
    %v2762 = vadd.f32 %v59, %v2761
    %v2763 = vpop.f32.mrb[0].mxu0
    %2764 = vdwg.mxu0
    %v2765 = vtanh.pop %v2762
    %v2768 = vunpack.c.l.s4 1966171168
    %v2769 = vunpack.c.0.s8 %v2768
    %v2770 = vlaneseq
    %v2771 = vshrl.u32 %v2770, 7
    %v2772 = vsub.s32 %v2769, %v2771
    %v2773 = vrot.slane %v2765, %v2772
    %v2774 = vcombine.high %v2773, %v2773
    %v2776 = vunpack.c.l.s4 1966171168
    %v2777 = vunpack.c.0.s8 %v2776
    %v2778 = vlaneseq
    %v2779 = vshrl.u32 %v2778, 7
    %v2780 = vsub.s32 %v2777, %v2779
    %v2781 = vrot.slane %v2773, %v2780
    %v2783 = vunpack.c.l.s4 1966171168
    %v2784 = vunpack.c.0.s8 %v2783
    %v2785 = vlaneseq
    %v2786 = vshrl.u32 %v2785, 7
    %v2787 = vsub.s32 %v2784, %v2786
    %v2788 = vrot.slane %v2774, %v2787
    %2791 = vst.msk [vmem:[#allocation5 + $0x7] sm:$0x1] %vm263, %v2781
    %2792 = vst.msk [vmem:[#allocation5 + $0xf] sm:$0x1] %vm263, %v2788
    %2793 = vst.msk [vmem:[#allocation2] sm:$0x3] %vm158, %v2765
    %2794 = vst.msk [vmem:[#allocation2] sm:$0x3] %vm160, %v2532
    %v2795 = vld [vmem:[#allocation2] sm:$0x3]
    %v2797 = vsel %vm163, %v2795, 0
    %2799 = vmatprep.subr.mxu0 0.0
    %2800 = vmatpush1.msra.mxu0 %v46
    %2801 = vmatprep.subr.mxu0 0.0
    %2802 = vmatpush1.msra.mxu0 %v47
    %2803 = vmatprep.subr.mxu0 0.0
    %2804 = vmatpush1.msra.mxu0 %v48
    %2805 = vmatprep.subr.mxu0 0.0
    %2806 = vmatpush1.msra.mxu0 %v49
    %2807 = vmatprep.subr.mxu0 0.0
    %2808 = vmatpush1.msra.mxu0 %v50
    %2809 = vmatprep.subr.mxu0 0.0
    %2810 = vmatpush1.msra.mxu0 %v51
    %2811 = vmatprep.subr.mxu0 0.0
    %2812 = vmatpush1.msra.mxu0 %v52
    %2813 = vmatprep.subr.mxu0 0.0
    %2814 = vmatpush1.msra.mxu0 %v53
    %2815 = vmatprep.subr.mxu0 0.0
    %2816 = vmatpush1.msra.mxu0 0.0
    %2817 = vmatprep.subr.mxu0 0.0
    %2818 = vmatpush1.msra.mxu0 0.0
    %2819 = vmatprep.subr.mxu0 0.0
    %2820 = vmatpush1.msra.mxu0 0.0
    %2821 = vmatprep.subr.mxu0 0.0
    %2822 = vmatpush1.msra.mxu0 0.0
    %2823 = vmatprep.subr.mxu0 0.0
    %2824 = vmatpush1.msra.mxu0 0.0
    %2825 = vmatprep.subr.mxu0 0.0
    %2826 = vmatpush1.msra.mxu0 0.0
    %2827 = vmatprep.subr.mxu0 0.0
    %2828 = vmatpush1.msra.mxu0 0.0
    %2829 = vmatprep.subr.mxu0 0.0
    %2830 = vmatpush1.msra.mxu0 0.0
    %2831 = vmatprep.subr.mxu0 0.0
    %2832 = vmatpush1.msra.mxu0 0.0
    %2833 = vmatprep.subr.mxu0 0.0
    %2834 = vmatpush1.msra.mxu0 0.0
    %2835 = vmatprep.subr.mxu0 0.0
    %2836 = vmatpush1.msra.mxu0 0.0
    %2837 = vmatprep.subr.mxu0 0.0
    %2838 = vmatpush1.msra.mxu0 0.0
    %2839 = vmatprep.subr.mxu0 0.0
    %2840 = vmatpush1.msra.mxu0 0.0
    %2841 = vmatprep.subr.mxu0 0.0
    %2842 = vmatpush1.msra.mxu0 0.0
    %2843 = vmatprep.subr.mxu0 0.0
    %2844 = vmatpush1.msra.mxu0 0.0
    %2845 = vmatprep.subr.mxu0 0.0
    %2846 = vmatpush1.msra.mxu0 0.0
    %2847 = vmatprep.subr.mxu0 0.0
    %2848 = vmatpush1.msra.mxu0 0.0
    %2849 = vmatprep.subr.mxu0 0.0
    %2850 = vmatpush1.msra.mxu0 0.0
    %2851 = vmatprep.subr.mxu0 0.0
    %2852 = vmatpush1.msra.mxu0 0.0
    %2853 = vmatprep.subr.mxu0 0.0
    %2854 = vmatpush1.msra.mxu0 0.0
    %2855 = vmatprep.subr.mxu0 0.0
    %2856 = vmatpush1.msra.mxu0 0.0
    %2857 = vmatprep.subr.mxu0 0.0
    %2858 = vmatpush1.msra.mxu0 0.0
    %2859 = vmatprep.subr.mxu0 0.0
    %2860 = vmatpush1.msra.mxu0 0.0
    %2861 = vmatprep.subr.mxu0 0.0
    %2862 = vmatpush1.msra.mxu0 0.0
    %2863 = vmatprep.mubr.f32.mxu0 0.0
    %2864 = vmatmul.mubr.f32.gmra.mrb[0].mxu0 %v2797
    %v2865 = vpop.f32.mrb[0].mxu0
    %v2866 = vadd.f32 %v66, %v2865
    %v2867 = vpop.f32.mrb[0].mxu0
    %2868 = vdwg.mxu0
    %v2869 = vxor.u32 %v2866, 2147483648
    %v2870 = vmul.f32 %v2869, 1.442695
    %v2871 = vpow.pop %v2870
    %v2872 = vadd.f32 %v2871, 1.0
    %v2873 = vrcp.pop %v2872
    %v2874 = vmul.f32 1.0, %v2873
    %2876 = vrot.lane.b32.xlu0 %v2866, 32
    %v2877 = vpop.permute.xlu0 %2876
    %v2879 = vmul.f32 %v2874, %v2877
    %2881 = vrot.lane.b32.xlu0 %v2879, 64
    %v2882 = vpop.permute.xlu0 %2881
    %v2884 = vadd.f32 %v2866, %v2882
    %v2885 = vtanh.pop %v2884
    %v2886 = vsub.f32 1.0, %v2874
    %2888 = vrot.lane.b32.xlu0 %v2885, 96
    %v2889 = vpop.permute.xlu0 %2888
    %v2891 = vmul.f32 %v2886, %v2889
    %v2892 = vmul.f32 %v2874, %v2532
    %v2893 = vadd.f32 %v2891, %v2892
    %v2896 = vunpack.c.l.s4 1966171168
    %v2897 = vunpack.c.0.s8 %v2896
    %v2898 = vlaneseq
    %v2899 = vshrl.u32 %v2898, 7
    %v2900 = vsub.s32 %v2897, %v2899
    %v2901 = vrot.slane %v2893, %v2900
    %v2902 = vcombine.high %v2901, %v2901
    %v2904 = vunpack.c.l.s4 1966171168
    %v2905 = vunpack.c.0.s8 %v2904
    %v2906 = vlaneseq
    %v2907 = vshrl.u32 %v2906, 7
    %v2908 = vsub.s32 %v2905, %v2907
    %v2909 = vrot.slane %v2901, %v2908
    %v2911 = vunpack.c.l.s4 1966171168
    %v2912 = vunpack.c.0.s8 %v2911
    %v2913 = vlaneseq
    %v2914 = vshrl.u32 %v2913, 7
    %v2915 = vsub.s32 %v2912, %v2914
    %v2916 = vrot.slane %v2902, %v2915
    %v2917 = vlaneseq
    %v2918 = vshrl.u32 %v2917, 7
    %v2919 = vsub.s32 0, %v2918
    %v2920 = vrot.slane %v2909, %v2919
    %v2921 = vlaneseq
    %v2922 = vshrl.u32 %v2921, 7
    %v2923 = vsub.s32 0, %v2922
    %v2924 = vrot.slane %v2916, %v2923
    %2925 = vrot.lane.b32.xlu0 %v2920, 96
    %v2926 = vpop.permute.xlu0 %2925
    %2927 = vrot.lane.b32.xlu0 %v2924, 96
    %v2928 = vpop.permute.xlu0 %2927
    %2931 = vst.msk [vmem:[#allocation7 + $0x7] sm:$0x1] %vm263, %v2926
    %2932 = vst.msk [vmem:[#allocation7 + $0xf] sm:$0x1] %vm263, %v2928
    %v2933 = vld [vmem:[%s1 + $0x7] sm:$0x1]
    %v2934 = vld [vmem:[%s1 + $0xf] sm:$0x1]
    %v2935 = vld [vmem:[%s2 + $0x7] sm:$0x1]
    %v2936 = vld [vmem:[%s2 + $0xf] sm:$0x1]
    %2938 = vset.pattern.permute.xlu0 0
    %2939 = vperm.xlu0 %2938, %v2935
    %v2940 = vpop.permute.xlu0 %2939
    %2943 = vset.pattern.permute.xlu0 0
    %2944 = vperm.xlu0 %2943, %v2936
    %v2945 = vpop.permute.xlu0 %2944
    %v2947 = vrot.slane %v2765, 1
    %v2950 = vmul.f32 %v2940, %v2765
    %v2951 = vmul.f32 %v2945, %v2947
    %v2952 = vsub.f32 %v2933, %v2950
    %v2953 = vsub.f32 %v2934, %v2951
    %v2954 = vmax.f32 %v2952, 0.0
    %v2955 = vmax.f32 %v2953, 0.0
    %v2956 = vmin.f32 %v2954, 1.0
    %v2957 = vmin.f32 %v2955, 1.0
    %2958 = vst.msk [vmem:[#allocation3 + $0x7] sm:$0x1] %vm263, %v2956
    %2959 = vst.msk [vmem:[#allocation3 + $0xf] sm:$0x1] %vm263, %v2957
    // Predicated region
    $region34: #{df_backbone_forward.1} parent=1 // pred_check
      _
    $region35: #{df_backbone_forward.1} parent=1 // pred_check_branch
      %2961 = sbr.rel (0) target = $region37
    $region36: #{df_backbone_forward.1} parent=1 // pred_region
      %s2963 = ssub.s32 256, 256
      %2964 = vsyncadd [#allocation4], %s2963
      %s2965 = sshll.u32 [#allocation3], 4
      %s2966 = int_to_ptr.vmem [resolvable:$true] %s2965
      %2971 = dma.vmem_to_hbm [thread:$0]  %s2966, 256, %s8, [#allocation4], 128, 128, 8
    $region37: #{df_backbone_forward.1} parent=1 // pred_fallthru
      _
    // Predicated region
    $region38: #{df_backbone_forward.1} parent=1 // pred_check
      _
    $region39: #{df_backbone_forward.1} parent=1 // pred_check_branch
      %2973 = sbr.rel (0) target = $region41
    $region40: #{df_backbone_forward.1} parent=1 // pred_region
      %s2975 = ssub.s32 256, 256
      %2976 = vsyncadd [#allocation6], %s2975
      %s2977 = sshll.u32 [#allocation5], 4
      %s2978 = int_to_ptr.vmem [resolvable:$true] %s2977
      %2983 = dma.vmem_to_hbm [thread:$0]  %s2978, 256, %s9, [#allocation6], 128, 128, 8
    $region41: #{df_backbone_forward.1} parent=1 // pred_fallthru
      _
    // Predicated region
    $region42: #{df_backbone_forward.1} parent=1 // pred_check
      _
    $region43: #{df_backbone_forward.1} parent=1 // pred_check_branch
      %2985 = sbr.rel (0) target = $region45
    $region44: #{df_backbone_forward.1} parent=1 // pred_region
      %s2987 = ssub.s32 256, 256
      %2988 = vsyncadd [#allocation6], %s2987
      %s2989 = sshll.u32 [#allocation7], 4
      %s2990 = int_to_ptr.vmem [resolvable:$true] %s2989
      %2995 = dma.vmem_to_hbm [thread:$0]  %s2990, 256, %s10, [#allocation6], 128, 128, 8
    $region45: #{df_backbone_forward.1} parent=1 // pred_fallthru
      _
    // Predicated region
    $region46: #{df_backbone_forward.1} parent=1 // pred_check
      _
    $region47: #{df_backbone_forward.1} parent=1 // pred_check_branch
      %2997 = sbr.rel (0) target = $region49
    $region48: #{df_backbone_forward.1} parent=1 // pred_region
      %2998 = dma.done [#allocation4], 256
    $region49: #{df_backbone_forward.1} parent=1 // pred_fallthru
      _
    // Predicated region
    $region50: #{df_backbone_forward.1} parent=1 // pred_check
      _
    $region51: #{df_backbone_forward.1} parent=1 // pred_check_branch
      %3000 = sbr.rel (0) target = $region53
    $region52: #{df_backbone_forward.1} parent=1 // pred_region
      %3001 = dma.done [#allocation6], 256
    $region53: #{df_backbone_forward.1} parent=1 // pred_fallthru
      _
    // Predicated region
    $region54: #{df_backbone_forward.1} parent=1 // pred_check
      _
    $region55: #{df_backbone_forward.1} parent=1 // pred_check_branch
      %3003 = sbr.rel (0) target = $region57
    $region56: #{df_backbone_forward.1} parent=1 // pred_region
      %3004 = dma.done [#allocation6], 256
    $region57: #{df_backbone_forward.1} parent=1 // pred_fallthru
      _
    %3005 = vsyncpa [#allocation4], 1
    %3006 = vsyncpa [#allocation6], 1

</llo_original>
